<compile_context>
chip_gen: v7x
topology: tpu7x:2x2x1
jax: 0.10.0
libtpu: 0.0.40
codegen_flags: <defaults>
</compile_context>

<pallas_src>
import jax
import jax.numpy as jnp
from jax.experimental import pallas as pl
from jax.experimental.pallas import tpu as pltpu

# Original layer sizes from the PyTorch module.
DIMS = [784, 512, 256, 128, 96, 62]
# Lane-padded sizes used by the kernel (tail layers 96/62 zero-padded to 128).
PAD_DIMS = [784, 512, 256, 128, 128, 128]
OUT_DIM = DIMS[-1]  # 62, sliced back out in the wrapper


def _round_up(x, m):
    return ((x + m - 1) // m) * m


def _mlp_kernel(x_ref,
                w1_ref, b1_ref,
                w2_ref, b2_ref,
                w3_ref, b3_ref,
                w4_ref, b4_ref,
                w5_ref, b5_ref,
                o_ref):
    """Fused 5-layer MLP forward for one batch tile.

    x arrives as f32 and is cast to bf16 on the VPU; matmul inputs are bf16
    (bf16 MXU path), accumulation / bias / ReLU are f32, output is bf16.
    """
    def layer(h_bf16, w_ref, b_ref, relu):
        acc = jnp.dot(h_bf16, w_ref[...], preferred_element_type=jnp.float32)
        acc = acc + b_ref[...]
        if relu:
            acc = jnp.maximum(acc, 0.0)
        return acc

    h = x_ref[...].astype(jnp.bfloat16)                         # (TB, 784)
    h = layer(h, w1_ref, b1_ref, True).astype(jnp.bfloat16)     # (TB, 512)
    h = layer(h, w2_ref, b2_ref, True).astype(jnp.bfloat16)     # (TB, 256)
    h = layer(h, w3_ref, b3_ref, True).astype(jnp.bfloat16)     # (TB, 128)
    h = layer(h, w4_ref, b4_ref, True).astype(jnp.bfloat16)     # (TB, 128) pad of 96
    o_ref[...] = layer(h, w5_ref, b5_ref, False).astype(o_ref.dtype)  # pad of 62
    # TODO(synk): if a v5e/v6e bundle dump shows the single vst slot binding at
    # large tiles, split the batch into 256-row sub-tiles with
    # lax.fori_loop(..., unroll=True) to shorten the f32 accumulator live range.


def pack_params(params):
    """Pad tail layers to 128 lanes, cast weights to bf16; biases stay f32.

    Call ONCE at init and reuse — keeps the ~10 pad/convert XLA ops out of the
    per-call forward path.
    """
    packed = []
    for (w, b), din_p, dout_p in zip(params, PAD_DIMS[:-1], PAD_DIMS[1:]):
        din, dout = w.shape
        w = jnp.pad(w.astype(jnp.float32), ((0, din_p - din), (0, dout_p - dout)))
        b = jnp.pad(b.astype(jnp.float32).reshape(1, -1),
                    ((0, 0), (0, dout_p - dout)))
        packed.append((w.astype(jnp.bfloat16), b))
    return packed


def _choose_tile(B, batch_tile):
    """Batch tile: multiple of 128, capped by the (rounded) batch, and chosen so
    the grid has >= 2 steps whenever the batch allows it (megacore / v7x TCs)."""
    b128 = _round_up(B, 128)
    tile = min(_round_up(batch_tile, 128), b128)
    if b128 >= 2 * 128:
        tile = min(tile, _round_up((b128 + 1) // 2, 128))
    return max(128, tile)


def dnn_forward(x, packed_params, *, batch_tile=1024):
    """Run the fused MLP.

    `x` may be [B, 784] or [B, 1, 28, 28] (NCHW), any float dtype (kept native;
    cast to bf16 happens inside the kernel).  `packed_params` comes from
    `pack_params(...)` (call once at init).  Returns bf16 logits [B, 62].
    """
    x = x.reshape(-1, DIMS[0])             # mimics x.view(-1, 784), no dtype cast
    B = x.shape[0]

    tile = _choose_tile(B, batch_tile)
    Bp = _round_up(B, tile)
    if Bp != B:
        x = jnp.pad(x, ((0, Bp - B), (0, 0)))

    def full_spec(arr):
        # Grid-invariant block (constant index_map): fetched once per core.
        return pl.BlockSpec(arr.shape, lambda i: (0, 0))

    in_specs = [pl.BlockSpec((tile, DIMS[0]), lambda i: (i, 0))]
    flat_params = []
    for w, b in packed_params:
        in_specs.append(full_spec(w))
        in_specs.append(full_spec(b))
        flat_params.extend([w, b])

    out_specs = pl.BlockSpec((tile, PAD_DIMS[-1]), lambda i: (i, 0))

    flops = 2 * Bp * sum(a * b for a, b in zip(PAD_DIMS[:-1], PAD_DIMS[1:]))
    bytes_accessed = (
        Bp * DIMS[0] * x.dtype.itemsize                            # x stream
        + Bp * PAD_DIMS[-1] * 2                                    # output (bf16)
        + sum(w.size * 2 + b.size * 4 for w, b in packed_params))  # weights+biases

    out = pl.pallas_call(
        _mlp_kernel,
        out_shape=jax.ShapeDtypeStruct((Bp, PAD_DIMS[-1]), jnp.bfloat16),
        grid_spec=pltpu.PrefetchScalarGridSpec(
            num_scalar_prefetch=0,
            grid=(Bp // tile,),
            in_specs=in_specs,
            out_specs=out_specs,
        ),
        compiler_params=pltpu.CompilerParams(
            dimension_semantics=("parallel",),
            vmem_limit_bytes=48 * 1024 * 1024,
        ),
        cost_estimate=pl.CostEstimate(
            flops=flops, transcendentals=0, bytes_accessed=bytes_accessed),
    )(x, *flat_params)

    # Drop batch padding and the lane padding of the 62-wide final layer.
    return out[:B, :OUT_DIM]


def init_params(key):
    """Deterministic init matching torch.nn.Linear's U(-1/sqrt(fan_in), +...)."""
    params = []
    for fan_in, fan_out in zip(DIMS[:-1], DIMS[1:]):
        kw, kb, key = jax.random.split(key, 3)
        bound = 1.0 / jnp.sqrt(jnp.float32(fan_in))
        # stored as [in, out] so the kernel does x @ W
        w = jax.random.uniform(kw, (fan_in, fan_out), jnp.float32, -bound, bound)
        b = jax.random.uniform(kb, (1, fan_out), jnp.float32, -bound, bound)
        params.append((w, b))
    return params


def dnn_reference(x, params):
    """Pure-JAX reference with matching bf16-matmul / f32-accum numerics."""
    h = x.reshape(-1, DIMS[0]).astype(jnp.float32)
    for i, (w, b) in enumerate(params):
        h = jnp.dot(h.astype(jnp.bfloat16), w.astype(jnp.bfloat16),
                    preferred_element_type=jnp.float32) + b
        if i < len(params) - 1:
            h = jnp.maximum(h, 0.0)
    return h


if __name__ == "__main__":
    key = jax.random.PRNGKey(0)
    kx, kp = jax.random.split(key)

    # Small MNIST-like batch: NCHW [8, 1, 28, 28] -> flattened to [8, 784].
    x = jax.random.normal(kx, (8, 1, 28, 28), dtype=jnp.float32)
    params = init_params(kp)

    packed = pack_params(params)                 # pack ONCE, reuse every call
    fwd = jax.jit(dnn_forward)

    out = fwd(x, packed)
    out = jax.block_until_ready(out)

    ref = dnn_reference(x, params)
    assert out.shape == (8, OUT_DIM), out.shape
    assert out.dtype == jnp.bfloat16, out.dtype
    assert jnp.allclose(out.astype(jnp.float32), ref, atol=2e-2, rtol=2e-2), (
        float(jnp.max(jnp.abs(out.astype(jnp.float32) - ref))))

    print("KERNEL_OK")
</pallas_src>

<mosaic_0001>
module attributes {stable_mosaic.version = 11 : i64} {
  func.func @_mlp_kernel(%arg0: i32, %arg1: memref<128x784xf32, #tpu.memory_space<vmem>>, %arg2: memref<784x512xbf16, #tpu.memory_space<vmem>>, %arg3: memref<1x512xf32, #tpu.memory_space<vmem>>, %arg4: memref<512x256xbf16, #tpu.memory_space<vmem>>, %arg5: memref<1x256xf32, #tpu.memory_space<vmem>>, %arg6: memref<256x128xbf16, #tpu.memory_space<vmem>>, %arg7: memref<1x128xf32, #tpu.memory_space<vmem>>, %arg8: memref<128x128xbf16, #tpu.memory_space<vmem>>, %arg9: memref<1x128xf32, #tpu.memory_space<vmem>>, %arg10: memref<128x128xbf16, #tpu.memory_space<vmem>>, %arg11: memref<1x128xf32, #tpu.memory_space<vmem>>, %arg12: memref<128x128xbf16, #tpu.memory_space<vmem>>) attributes {dimension_semantics = [#tpu.dimension_semantics<parallel>], iteration_bounds = array<i64: 1>, scalar_prefetch = 0 : i64, scratch_operands = 0 : i64, tpu.core_type = #tpu.core_type<tc>, window_params = [{transform_indices = @transform_0, window_bounds = array<i64: 128, 784>}, {pipeline_mode = #tpu.pipeline_mode<synchronous>, transform_indices = @transform_1, window_bounds = array<i64: 784, 512>}, {pipeline_mode = #tpu.pipeline_mode<synchronous>, transform_indices = @transform_2, window_bounds = array<i64: 1, 512>}, {pipeline_mode = #tpu.pipeline_mode<synchronous>, transform_indices = @transform_3, window_bounds = array<i64: 512, 256>}, {pipeline_mode = #tpu.pipeline_mode<synchronous>, transform_indices = @transform_4, window_bounds = array<i64: 1, 256>}, {pipeline_mode = #tpu.pipeline_mode<synchronous>, transform_indices = @transform_5, window_bounds = array<i64: 256, 128>}, {pipeline_mode = #tpu.pipeline_mode<synchronous>, transform_indices = @transform_6, window_bounds = array<i64: 1, 128>}, {pipeline_mode = #tpu.pipeline_mode<synchronous>, transform_indices = @transform_7, window_bounds = array<i64: 128, 128>}, {pipeline_mode = #tpu.pipeline_mode<synchronous>, transform_indices = @transform_8, window_bounds = array<i64: 1, 128>}, {pipeline_mode = #tpu.pipeline_mode<synchronous>, transform_indices = @transform_9, window_bounds = array<i64: 128, 128>}, {pipeline_mode = #tpu.pipeline_mode<synchronous>, transform_indices = @transform_10, window_bounds = array<i64: 1, 128>}, {transform_indices = @transform_11, window_bounds = array<i64: 128, 128>}]} {
    %c0 = arith.constant 0 : index
    %c0_0 = arith.constant 0 : index
    %0 = vector.load %arg1[%c0, %c0_0] : memref<128x784xf32, #tpu.memory_space<vmem>>, vector<128x784xf32>
    %1 = arith.truncf %0 : vector<128x784xf32> to vector<128x784xbf16>
    %c0_1 = arith.constant 0 : index
    %c0_2 = arith.constant 0 : index
    %2 = vector.load %arg2[%c0_1, %c0_2] : memref<784x512xbf16, #tpu.memory_space<vmem>>, vector<784x512xbf16>
    %cst = arith.constant dense<0.000000e+00> : vector<128x512xf32>
    %3 = tpu.matmul %1, %2, %cst {dimension_numbers = #tpu.dot_dimension_numbers<[1], [0], [0], [1], [0, 0, 1, 1], [], []>} : vector<128x784xbf16>, vector<784x512xbf16>, vector<128x512xf32> -> vector<128x512xf32>
    %c0_3 = arith.constant 0 : index
    %c0_4 = arith.constant 0 : index
    %4 = vector.load %arg3[%c0_3, %c0_4] : memref<1x512xf32, #tpu.memory_space<vmem>>, vector<1x512xf32>
    %5 = vector.broadcast %4 : vector<1x512xf32> to vector<128x512xf32>
    %6 = arith.addf %3, %5 : vector<128x512xf32>
    %cst_5 = arith.constant 0.000000e+00 : f32
    %7 = vector.broadcast %cst_5 : f32 to vector<128x512xf32>
    %8 = arith.maximumf %6, %7 : vector<128x512xf32>
    %9 = arith.truncf %8 : vector<128x512xf32> to vector<128x512xbf16>
    %c0_6 = arith.constant 0 : index
    %c0_7 = arith.constant 0 : index
    %10 = vector.load %arg4[%c0_6, %c0_7] : memref<512x256xbf16, #tpu.memory_space<vmem>>, vector<512x256xbf16>
    %cst_8 = arith.constant dense<0.000000e+00> : vector<128x256xf32>
    %11 = tpu.matmul %9, %10, %cst_8 {dimension_numbers = #tpu.dot_dimension_numbers<[1], [0], [0], [1], [0, 0, 1, 1], [], []>} : vector<128x512xbf16>, vector<512x256xbf16>, vector<128x256xf32> -> vector<128x256xf32>
    %c0_9 = arith.constant 0 : index
    %c0_10 = arith.constant 0 : index
    %12 = vector.load %arg5[%c0_9, %c0_10] : memref<1x256xf32, #tpu.memory_space<vmem>>, vector<1x256xf32>
    %13 = vector.broadcast %12 : vector<1x256xf32> to vector<128x256xf32>
    %14 = arith.addf %11, %13 : vector<128x256xf32>
    %cst_11 = arith.constant 0.000000e+00 : f32
    %15 = vector.broadcast %cst_11 : f32 to vector<128x256xf32>
    %16 = arith.maximumf %14, %15 : vector<128x256xf32>
    %17 = arith.truncf %16 : vector<128x256xf32> to vector<128x256xbf16>
    %c0_12 = arith.constant 0 : index
    %c0_13 = arith.constant 0 : index
    %18 = vector.load %arg6[%c0_12, %c0_13] : memref<256x128xbf16, #tpu.memory_space<vmem>>, vector<256x128xbf16>
    %cst_14 = arith.constant dense<0.000000e+00> : vector<128x128xf32>
    %19 = tpu.matmul %17, %18, %cst_14 {dimension_numbers = #tpu.dot_dimension_numbers<[1], [0], [0], [1], [0, 0, 1, 1], [], []>} : vector<128x256xbf16>, vector<256x128xbf16>, vector<128x128xf32> -> vector<128x128xf32>
    %c0_15 = arith.constant 0 : index
    %c0_16 = arith.constant 0 : index
    %20 = vector.load %arg7[%c0_15, %c0_16] : memref<1x128xf32, #tpu.memory_space<vmem>>, vector<1x128xf32>
    %21 = vector.broadcast %20 : vector<1x128xf32> to vector<128x128xf32>
    %22 = arith.addf %19, %21 : vector<128x128xf32>
    %cst_17 = arith.constant 0.000000e+00 : f32
    %23 = vector.broadcast %cst_17 : f32 to vector<128x128xf32>
    %24 = arith.maximumf %22, %23 : vector<128x128xf32>
    %25 = arith.truncf %24 : vector<128x128xf32> to vector<128x128xbf16>
    %c0_18 = arith.constant 0 : index
    %c0_19 = arith.constant 0 : index
    %26 = vector.load %arg8[%c0_18, %c0_19] : memref<128x128xbf16, #tpu.memory_space<vmem>>, vector<128x128xbf16>
    %cst_20 = arith.constant dense<0.000000e+00> : vector<128x128xf32>
    %27 = tpu.matmul %25, %26, %cst_20 {dimension_numbers = #tpu.dot_dimension_numbers<[1], [0], [0], [1], [0, 0, 1, 1], [], []>} : vector<128x128xbf16>, vector<128x128xbf16>, vector<128x128xf32> -> vector<128x128xf32>
    %c0_21 = arith.constant 0 : index
    %c0_22 = arith.constant 0 : index
    %28 = vector.load %arg9[%c0_21, %c0_22] : memref<1x128xf32, #tpu.memory_space<vmem>>, vector<1x128xf32>
    %29 = vector.broadcast %28 : vector<1x128xf32> to vector<128x128xf32>
    %30 = arith.addf %27, %29 : vector<128x128xf32>
    %cst_23 = arith.constant 0.000000e+00 : f32
    %31 = vector.broadcast %cst_23 : f32 to vector<128x128xf32>
    %32 = arith.maximumf %30, %31 : vector<128x128xf32>
    %33 = arith.truncf %32 : vector<128x128xf32> to vector<128x128xbf16>
    %c0_24 = arith.constant 0 : index
    %c0_25 = arith.constant 0 : index
    %34 = vector.load %arg10[%c0_24, %c0_25] : memref<128x128xbf16, #tpu.memory_space<vmem>>, vector<128x128xbf16>
    %cst_26 = arith.constant dense<0.000000e+00> : vector<128x128xf32>
    %35 = tpu.matmul %33, %34, %cst_26 {dimension_numbers = #tpu.dot_dimension_numbers<[1], [0], [0], [1], [0, 0, 1, 1], [], []>} : vector<128x128xbf16>, vector<128x128xbf16>, vector<128x128xf32> -> vector<128x128xf32>
    %c0_27 = arith.constant 0 : index
    %c0_28 = arith.constant 0 : index
    %36 = vector.load %arg11[%c0_27, %c0_28] : memref<1x128xf32, #tpu.memory_space<vmem>>, vector<1x128xf32>
    %37 = vector.broadcast %36 : vector<1x128xf32> to vector<128x128xf32>
    %38 = arith.addf %35, %37 : vector<128x128xf32>
    %39 = arith.truncf %38 : vector<128x128xf32> to vector<128x128xbf16>
    %c0_29 = arith.constant 0 : index
    %c0_30 = arith.constant 0 : index
    %40 = vector.load %arg12[%c0_29, %c0_30] : memref<128x128xbf16, #tpu.memory_space<vmem>>, vector<128x128xbf16>
    tpu.vector_store %arg12[%c0_29, %c0_30], %39 {strides = array<i32>} : memref<128x128xbf16, #tpu.memory_space<vmem>>, vector<128x128xbf16>,
    return
  }
  func.func @transform_0(%arg0: i32) -> (i32, i32) {
    %c0_i32 = arith.constant 0 : i32
    %c0_i32_0 = arith.constant 0 : i32
    return %arg0, %c0_i32 : i32, i32
  }
  func.func @transform_1(%arg0: i32) -> (i32, i32) {
    %c0_i32 = arith.constant 0 : i32
    %c0_i32_0 = arith.constant 0 : i32
    %c0_i32_1 = arith.constant 0 : i32
    return %c0_i32, %c0_i32_0 : i32, i32
  }
  func.func @transform_2(%arg0: i32) -> (i32, i32) {
    %c0_i32 = arith.constant 0 : i32
    %c0_i32_0 = arith.constant 0 : i32
    %c0_i32_1 = arith.constant 0 : i32
    return %c0_i32, %c0_i32_0 : i32, i32
  }
  func.func @transform_3(%arg0: i32) -> (i32, i32) {
    %c0_i32 = arith.constant 0 : i32
    %c0_i32_0 = arith.constant 0 : i32
    %c0_i32_1 = arith.constant 0 : i32
    return %c0_i32, %c0_i32_0 : i32, i32
  }
  func.func @transform_4(%arg0: i32) -> (i32, i32) {
    %c0_i32 = arith.constant 0 : i32
    %c0_i32_0 = arith.constant 0 : i32
    %c0_i32_1 = arith.constant 0 : i32
    return %c0_i32, %c0_i32_0 : i32, i32
  }
  func.func @transform_5(%arg0: i32) -> (i32, i32) {
    %c0_i32 = arith.constant 0 : i32
    %c0_i32_0 = arith.constant 0 : i32
    %c0_i32_1 = arith.constant 0 : i32
    return %c0_i32, %c0_i32_0 : i32, i32
  }
  func.func @transform_6(%arg0: i32) -> (i32, i32) {
    %c0_i32 = arith.constant 0 : i32
    %c0_i32_0 = arith.constant 0 : i32
    %c0_i32_1 = arith.constant 0 : i32
    return %c0_i32, %c0_i32_0 : i32, i32
  }
  func.func @transform_7(%arg0: i32) -> (i32, i32) {
    %c0_i32 = arith.constant 0 : i32
    %c0_i32_0 = arith.constant 0 : i32
    %c0_i32_1 = arith.constant 0 : i32
    return %c0_i32, %c0_i32_0 : i32, i32
  }
  func.func @transform_8(%arg0: i32) -> (i32, i32) {
    %c0_i32 = arith.constant 0 : i32
    %c0_i32_0 = arith.constant 0 : i32
    %c0_i32_1 = arith.constant 0 : i32
    return %c0_i32, %c0_i32_0 : i32, i32
  }
  func.func @transform_9(%arg0: i32) -> (i32, i32) {
    %c0_i32 = arith.constant 0 : i32
    %c0_i32_0 = arith.constant 0 : i32
    %c0_i32_1 = arith.constant 0 : i32
    return %c0_i32, %c0_i32_0 : i32, i32
  }
  func.func @transform_10(%arg0: i32) -> (i32, i32) {
    %c0_i32 = arith.constant 0 : i32
    %c0_i32_0 = arith.constant 0 : i32
    %c0_i32_1 = arith.constant 0 : i32
    return %c0_i32, %c0_i32_0 : i32, i32
  }
  func.func @transform_11(%arg0: i32) -> (i32, i32) {
    %c0_i32 = arith.constant 0 : i32
    %c0_i32_0 = arith.constant 0 : i32
    return %arg0, %c0_i32 : i32, i32
  }
}

</mosaic_0001>

<llo_original>
// kernel: dnn_forward.1
$region0: #{dnn_forward.1}
  #allocation0 [shape = 'u32[]', space=smem, size = 0x4, offset = 0x4, fixed_abs, tag = 'smem constant byte address 0x4 - core index']
  #allocation1 [shape = 'u32[144,128]{1,0:T(1,128)}', space=vmem, size = 0x12000, scoped, tag = 'internal scratch']
  %s0 = inlined_call_operand.vmem [shape: f32[128,784], index: 0, kind: input, shape index: {}]
  %s1 = inlined_call_operand.vmem [shape: bf16[784,512], index: 1, kind: input, shape index: {}]
  %s2 = inlined_call_operand.vmem [shape: f32[1,512], index: 2, kind: input, shape index: {}]
  %s3 = inlined_call_operand.hbm [shape: bf16[512,256], index: 3, kind: input, shape index: {}]
  %s4 = inlined_call_operand.hbm [shape: f32[1,256], index: 4, kind: input, shape index: {}]
  %s5 = inlined_call_operand.vmem [shape: bf16[256,128], index: 5, kind: input, shape index: {}]
  %s6 = inlined_call_operand.hbm [shape: f32[1,128], index: 6, kind: input, shape index: {}]
  %s7 = inlined_call_operand.vmem [shape: bf16[128,128], index: 7, kind: input, shape index: {}]
  %s8 = inlined_call_operand.hbm [shape: f32[1,128], index: 8, kind: input, shape index: {}]
  %s9 = inlined_call_operand.hbm [shape: bf16[128,128], index: 9, kind: input, shape index: {}]
  %s10 = inlined_call_operand.vmem [shape: f32[1,128], index: 10, kind: input, shape index: {}]
  %s11 = inlined_call_operand.vmem [shape: bf16[128,128], index: 11, kind: output, shape index: {}]
  %s12 = sld [smem:[#allocation0]]
  $region74: #{dnn_forward.1} parent=0
    _
  %s14 = ssub.s32 1, %s12
  %s15 = scalar_select 0, %s14, %s12
  $region1: #{dnn_forward.1} parent=0
    #allocation2 [shape = 'u8[262144]{0}', space=vmem, size = 0x40000, scoped, tag = 'input window, operand 3, single buffered']
    #allocation3 [shape = 's32[1]{0}', space=sflag, size = 0x4, scoped, tag = 'scoped memory for dnn_forward.1']
    #allocation4 [shape = 'u8[1024]{0}', space=vmem, size = 0x400, scoped, tag = 'input window, operand 4, single buffered']
    #allocation5 [shape = 's32[1]{0}', space=sflag, size = 0x4, scoped, tag = 'scoped memory for dnn_forward.1']
    #allocation6 [shape = 'u8[512]{0}', space=vmem, size = 0x400, scoped, tag = 'input window, operand 6, single buffered']
    #allocation7 [shape = 'u8[512]{0}', space=vmem, size = 0x400, scoped, tag = 'input window, operand 8, single buffered']
    #allocation8 [shape = 's32[1]{0}', space=sflag, size = 0x4, scoped, tag = 'scoped memory for dnn_forward.1']
    #allocation9 [shape = 'u8[32768]{0}', space=vmem, size = 0x8000, scoped, tag = 'input window, operand 9, single buffered']
    %16 = vsyncpa [#allocation3], 0
    %17 = vsyncpa [#allocation5], 0
    %18 = vsyncpa [#allocation8], 0
    // Predicated region
    $region2: #{dnn_forward.1} parent=1 // pred_check
      _
    $region3: #{dnn_forward.1} parent=1 // pred_check_branch
      %20 = sbr.rel (0) target = $region5
    $region4: #{dnn_forward.1} parent=1 // pred_region
      _
    $region5: #{dnn_forward.1} parent=1 // pred_fallthru
      _
    // Predicated region
    $region6: #{dnn_forward.1} parent=1 // pred_check
      _
    $region7: #{dnn_forward.1} parent=1 // pred_check_branch
      %22 = sbr.rel (0) target = $region9
    $region8: #{dnn_forward.1} parent=1 // pred_region
      _
    $region9: #{dnn_forward.1} parent=1 // pred_fallthru
      _
    // Predicated region
    $region10: #{dnn_forward.1} parent=1 // pred_check
      _
    $region11: #{dnn_forward.1} parent=1 // pred_check_branch
      %24 = sbr.rel (0) target = $region13
    $region12: #{dnn_forward.1} parent=1 // pred_region
      _
    $region13: #{dnn_forward.1} parent=1 // pred_fallthru
      _
    // Predicated region
    $region14: #{dnn_forward.1} parent=1 // pred_check
      _
    $region15: #{dnn_forward.1} parent=1 // pred_check_branch
      %26 = sbr.rel (0) target = $region17
    $region16: #{dnn_forward.1} parent=1 // pred_region
      %s28 = ssub.s32 8192, 8192
      %29 = vsyncadd [#allocation3], %s28
      %s30 = sshll.u32 [#allocation2], 4
      %s31 = int_to_ptr.vmem [resolvable:$true] %s30
      %36 = dma.hbm_to_vmem [thread:$0]  %s3, 8192, %s31, [#allocation3], 128, 128, 8
    $region17: #{dnn_forward.1} parent=1 // pred_fallthru
      _
    // Predicated region
    $region18: #{dnn_forward.1} parent=1 // pred_check
      _
    $region19: #{dnn_forward.1} parent=1 // pred_check_branch
      %38 = sbr.rel (0) target = $region21
    $region20: #{dnn_forward.1} parent=1 // pred_region
      %s40 = ssub.s32 32, 32
      %41 = vsyncadd [#allocation5], %s40
      %s43 = sshll.u32 [#allocation4], 4
      %s44 = int_to_ptr.vmem [resolvable:$true] %s43
      %46 = dma.hbm_to_vmem [thread:$0]  %s4, 32, %s44, [#allocation5]
    $region21: #{dnn_forward.1} parent=1 // pred_fallthru
      _
    // Predicated region
    $region22: #{dnn_forward.1} parent=1 // pred_check
      _
    $region23: #{dnn_forward.1} parent=1 // pred_check_branch
      %48 = sbr.rel (0) target = $region25
    $region24: #{dnn_forward.1} parent=1 // pred_region
      _
    $region25: #{dnn_forward.1} parent=1 // pred_fallthru
      _
    // Predicated region
    $region26: #{dnn_forward.1} parent=1 // pred_check
      _
    $region27: #{dnn_forward.1} parent=1 // pred_check_branch
      %50 = sbr.rel (0) target = $region29
    $region28: #{dnn_forward.1} parent=1 // pred_region
      %s52 = ssub.s32 16, 16
      %53 = vsyncadd [#allocation5], %s52
      %s55 = sshll.u32 [#allocation6], 4
      %s56 = int_to_ptr.vmem [resolvable:$true] %s55
      %58 = dma.hbm_to_vmem [thread:$0]  %s6, 16, %s56, [#allocation5]
    $region29: #{dnn_forward.1} parent=1 // pred_fallthru
      _
    // Predicated region
    $region30: #{dnn_forward.1} parent=1 // pred_check
      _
    $region31: #{dnn_forward.1} parent=1 // pred_check_branch
      %60 = sbr.rel (0) target = $region33
    $region32: #{dnn_forward.1} parent=1 // pred_region
      _
    $region33: #{dnn_forward.1} parent=1 // pred_fallthru
      _
    // Predicated region
    $region34: #{dnn_forward.1} parent=1 // pred_check
      _
    $region35: #{dnn_forward.1} parent=1 // pred_check_branch
      %62 = sbr.rel (0) target = $region37
    $region36: #{dnn_forward.1} parent=1 // pred_region
      %s64 = ssub.s32 16, 16
      %65 = vsyncadd [#allocation8], %s64
      %s67 = sshll.u32 [#allocation7], 4
      %s68 = int_to_ptr.vmem [resolvable:$true] %s67
      %70 = dma.hbm_to_vmem [thread:$0]  %s8, 16, %s68, [#allocation8]
    $region37: #{dnn_forward.1} parent=1 // pred_fallthru
      _
    // Predicated region
    $region38: #{dnn_forward.1} parent=1 // pred_check
      _
    $region39: #{dnn_forward.1} parent=1 // pred_check_branch
      %72 = sbr.rel (0) target = $region41
    $region40: #{dnn_forward.1} parent=1 // pred_region
      %s74 = ssub.s32 1024, 1024
      %75 = vsyncadd [#allocation8], %s74
      %s76 = sshll.u32 [#allocation9], 4
      %s77 = int_to_ptr.vmem [resolvable:$true] %s76
      %82 = dma.hbm_to_vmem [thread:$0]  %s9, 1024, %s77, [#allocation8], 64, 64, 4
    $region41: #{dnn_forward.1} parent=1 // pred_fallthru
      _
    // Predicated region
    $region42: #{dnn_forward.1} parent=1 // pred_check
      _
    $region43: #{dnn_forward.1} parent=1 // pred_check_branch
      %84 = sbr.rel (0) target = $region45
    $region44: #{dnn_forward.1} parent=1 // pred_region
      _
    $region45: #{dnn_forward.1} parent=1 // pred_fallthru
      _
    // Predicated region
    $region46: #{dnn_forward.1} parent=1 // pred_check
      _
    $region47: #{dnn_forward.1} parent=1 // pred_check_branch
      %86 = sbr.rel (0) target = $region49
    $region48: #{dnn_forward.1} parent=1 // pred_region
      %87 = dma.done [#allocation3], 8192
    $region49: #{dnn_forward.1} parent=1 // pred_fallthru
      _
    // Predicated region
    $region50: #{dnn_forward.1} parent=1 // pred_check
      _
    $region51: #{dnn_forward.1} parent=1 // pred_check_branch
      %89 = sbr.rel (0) target = $region53
    $region52: #{dnn_forward.1} parent=1 // pred_region
      %90 = dma.done [#allocation5], 32
    $region53: #{dnn_forward.1} parent=1 // pred_fallthru
      _
    // Predicated region
    $region54: #{dnn_forward.1} parent=1 // pred_check
      _
    $region55: #{dnn_forward.1} parent=1 // pred_check_branch
      %92 = sbr.rel (0) target = $region57
    $region56: #{dnn_forward.1} parent=1 // pred_region
      %93 = dma.done [#allocation5], 16
    $region57: #{dnn_forward.1} parent=1 // pred_fallthru
      _
    // Predicated region
    $region58: #{dnn_forward.1} parent=1 // pred_check
      _
    $region59: #{dnn_forward.1} parent=1 // pred_check_branch
      %95 = sbr.rel (0) target = $region61
    $region60: #{dnn_forward.1} parent=1 // pred_region
      %96 = dma.done [#allocation8], 16
    $region61: #{dnn_forward.1} parent=1 // pred_fallthru
      _
    // Predicated region
    $region62: #{dnn_forward.1} parent=1 // pred_check
      _
    $region63: #{dnn_forward.1} parent=1 // pred_check_branch
      %98 = sbr.rel (0) target = $region65
    $region64: #{dnn_forward.1} parent=1 // pred_region
      %99 = dma.done [#allocation8], 1024
    $region65: #{dnn_forward.1} parent=1 // pred_fallthru
      _
    %v101 = vld [vmem:[%s0] sm:$0xff]
    %v102 = vld [vmem:[%s0 + $0x8] sm:$0xff]
    %v103 = vld [vmem:[%s0 + $0x10] sm:$0xff]
    %v104 = vld [vmem:[%s0 + $0x18] sm:$0xff]
    %v105 = vld [vmem:[%s0 + $0x20] sm:$0xff]
    %v106 = vld [vmem:[%s0 + $0x28] sm:$0xff]
    %v107 = vld [vmem:[%s0 + $0x30] sm:$0xff]
    %v108 = vld [vmem:[%s0 + $0x38] sm:$0xff]
    %v109 = vld [vmem:[%s0 + $0x40] sm:$0xff]
    %v110 = vld [vmem:[%s0 + $0x48] sm:$0xff]
    %v111 = vld [vmem:[%s0 + $0x50] sm:$0xff]
    %v112 = vld [vmem:[%s0 + $0x58] sm:$0xff]
    %v113 = vld [vmem:[%s0 + $0x60] sm:$0xff]
    %v114 = vld [vmem:[%s0 + $0x68] sm:$0xff]
    %v115 = vld [vmem:[%s0 + $0x70] sm:$0xff]
    %v116 = vld [vmem:[%s0 + $0x78] sm:$0xff]
    %v117 = vld [vmem:[%s0 + $0x80] sm:$0xff]
    %v118 = vld [vmem:[%s0 + $0x88] sm:$0xff]
    %v119 = vld [vmem:[%s0 + $0x90] sm:$0xff]
    %v120 = vld [vmem:[%s0 + $0x98] sm:$0xff]
    %v121 = vld [vmem:[%s0 + $0xa0] sm:$0xff]
    %v122 = vld [vmem:[%s0 + $0xa8] sm:$0xff]
    %v123 = vld [vmem:[%s0 + $0xb0] sm:$0xff]
    %v124 = vld [vmem:[%s0 + $0xb8] sm:$0xff]
    %v125 = vld [vmem:[%s0 + $0xc0] sm:$0xff]
    %v126 = vld [vmem:[%s0 + $0xc8] sm:$0xff]
    %v127 = vld [vmem:[%s0 + $0xd0] sm:$0xff]
    %v128 = vld [vmem:[%s0 + $0xd8] sm:$0xff]
    %v129 = vld [vmem:[%s0 + $0xe0] sm:$0xff]
    %v130 = vld [vmem:[%s0 + $0xe8] sm:$0xff]
    %v131 = vld [vmem:[%s0 + $0xf0] sm:$0xff]
    %v132 = vld [vmem:[%s0 + $0xf8] sm:$0xff]
    %v133 = vld [vmem:[%s0 + $0x100] sm:$0xff]
    %v134 = vld [vmem:[%s0 + $0x108] sm:$0xff]
    %v135 = vld [vmem:[%s0 + $0x110] sm:$0xff]
    %v136 = vld [vmem:[%s0 + $0x118] sm:$0xff]
    %v137 = vld [vmem:[%s0 + $0x120] sm:$0xff]
    %v138 = vld [vmem:[%s0 + $0x128] sm:$0xff]
    %v139 = vld [vmem:[%s0 + $0x130] sm:$0xff]
    %v140 = vld [vmem:[%s0 + $0x138] sm:$0xff]
    %v141 = vld [vmem:[%s0 + $0x140] sm:$0xff]
    %v142 = vld [vmem:[%s0 + $0x148] sm:$0xff]
    %v143 = vld [vmem:[%s0 + $0x150] sm:$0xff]
    %v144 = vld [vmem:[%s0 + $0x158] sm:$0xff]
    %v145 = vld [vmem:[%s0 + $0x160] sm:$0xff]
    %v146 = vld [vmem:[%s0 + $0x168] sm:$0xff]
    %v147 = vld [vmem:[%s0 + $0x170] sm:$0xff]
    %v148 = vld [vmem:[%s0 + $0x178] sm:$0xff]
    %v149 = vld [vmem:[%s0 + $0x180] sm:$0xff]
    %v150 = vld [vmem:[%s0 + $0x188] sm:$0xff]
    %v151 = vld [vmem:[%s0 + $0x190] sm:$0xff]
    %v152 = vld [vmem:[%s0 + $0x198] sm:$0xff]
    %v153 = vld [vmem:[%s0 + $0x1a0] sm:$0xff]
    %v154 = vld [vmem:[%s0 + $0x1a8] sm:$0xff]
    %v155 = vld [vmem:[%s0 + $0x1b0] sm:$0xff]
    %v156 = vld [vmem:[%s0 + $0x1b8] sm:$0xff]
    %v157 = vld [vmem:[%s0 + $0x1c0] sm:$0xff]
    %v158 = vld [vmem:[%s0 + $0x1c8] sm:$0xff]
    %v159 = vld [vmem:[%s0 + $0x1d0] sm:$0xff]
    %v160 = vld [vmem:[%s0 + $0x1d8] sm:$0xff]
    %v161 = vld [vmem:[%s0 + $0x1e0] sm:$0xff]
    %v162 = vld [vmem:[%s0 + $0x1e8] sm:$0xff]
    %v163 = vld [vmem:[%s0 + $0x1f0] sm:$0xff]
    %v164 = vld [vmem:[%s0 + $0x1f8] sm:$0xff]
    %v165 = vld [vmem:[%s0 + $0x200] sm:$0xff]
    %v166 = vld [vmem:[%s0 + $0x208] sm:$0xff]
    %v167 = vld [vmem:[%s0 + $0x210] sm:$0xff]
    %v168 = vld [vmem:[%s0 + $0x218] sm:$0xff]
    %v169 = vld [vmem:[%s0 + $0x220] sm:$0xff]
    %v170 = vld [vmem:[%s0 + $0x228] sm:$0xff]
    %v171 = vld [vmem:[%s0 + $0x230] sm:$0xff]
    %v172 = vld [vmem:[%s0 + $0x238] sm:$0xff]
    %v173 = vld [vmem:[%s0 + $0x240] sm:$0xff]
    %v174 = vld [vmem:[%s0 + $0x248] sm:$0xff]
    %v175 = vld [vmem:[%s0 + $0x250] sm:$0xff]
    %v176 = vld [vmem:[%s0 + $0x258] sm:$0xff]
    %v177 = vld [vmem:[%s0 + $0x260] sm:$0xff]
    %v178 = vld [vmem:[%s0 + $0x268] sm:$0xff]
    %v179 = vld [vmem:[%s0 + $0x270] sm:$0xff]
    %v180 = vld [vmem:[%s0 + $0x278] sm:$0xff]
    %v181 = vld [vmem:[%s0 + $0x280] sm:$0xff]
    %v182 = vld [vmem:[%s0 + $0x288] sm:$0xff]
    %v183 = vld [vmem:[%s0 + $0x290] sm:$0xff]
    %v184 = vld [vmem:[%s0 + $0x298] sm:$0xff]
    %v185 = vld [vmem:[%s0 + $0x2a0] sm:$0xff]
    %v186 = vld [vmem:[%s0 + $0x2a8] sm:$0xff]
    %v187 = vld [vmem:[%s0 + $0x2b0] sm:$0xff]
    %v188 = vld [vmem:[%s0 + $0x2b8] sm:$0xff]
    %v189 = vld [vmem:[%s0 + $0x2c0] sm:$0xff]
    %v190 = vld [vmem:[%s0 + $0x2c8] sm:$0xff]
    %v191 = vld [vmem:[%s0 + $0x2d0] sm:$0xff]
    %v192 = vld [vmem:[%s0 + $0x2d8] sm:$0xff]
    %v193 = vld [vmem:[%s0 + $0x2e0] sm:$0xff]
    %v194 = vld [vmem:[%s0 + $0x2e8] sm:$0xff]
    %v195 = vld [vmem:[%s0 + $0x2f0] sm:$0xff]
    %v196 = vld [vmem:[%s0 + $0x2f8] sm:$0xff]
    %v197 = vld [vmem:[%s0 + $0x300] sm:$0xff]
    %v198 = vld [vmem:[%s0 + $0x308] sm:$0xff]
    %v199 = vld [vmem:[%s0 + $0x310] sm:$0xff]
    %v200 = vld [vmem:[%s0 + $0x318] sm:$0xff]
    %v201 = vld [vmem:[%s0 + $0x320] sm:$0xff]
    %v202 = vld [vmem:[%s0 + $0x328] sm:$0xff]
    %v203 = vld [vmem:[%s0 + $0x330] sm:$0xff]
    %v204 = vld [vmem:[%s0 + $0x338] sm:$0xff]
    %v205 = vld [vmem:[%s0 + $0x340] sm:$0xff]
    %v206 = vld [vmem:[%s0 + $0x348] sm:$0xff]
    %v207 = vld [vmem:[%s0 + $0x350] sm:$0xff]
    %v208 = vld [vmem:[%s0 + $0x358] sm:$0xff]
    %v209 = vld [vmem:[%s0 + $0x360] sm:$0xff]
    %v210 = vld [vmem:[%s0 + $0x368] sm:$0xff]
    %v211 = vld [vmem:[%s0 + $0x370] sm:$0xff]
    %v212 = vld [vmem:[%s0 + $0x378] sm:$0xff]
    %v213 = vpack.c.bf16 %v108, %v101
    %v214 = vpack.c.bf16 %v109, %v102
    %v215 = vpack.c.bf16 %v110, %v103
    %v216 = vpack.c.bf16 %v111, %v104
    %v217 = vpack.c.bf16 %v112, %v105
    %v218 = vpack.c.bf16 %v113, %v106
    %v219 = vpack.c.bf16 %v114, %v107
    %v220 = vpack.c.bf16 %v122, %v115
    %v221 = vpack.c.bf16 %v123, %v116
    %v222 = vpack.c.bf16 %v124, %v117
    %v223 = vpack.c.bf16 %v125, %v118
    %v224 = vpack.c.bf16 %v126, %v119
    %v225 = vpack.c.bf16 %v127, %v120
    %v226 = vpack.c.bf16 %v128, %v121
    %v227 = vpack.c.bf16 %v136, %v129
    %v228 = vpack.c.bf16 %v137, %v130
    %v229 = vpack.c.bf16 %v138, %v131
    %v230 = vpack.c.bf16 %v139, %v132
    %v231 = vpack.c.bf16 %v140, %v133
    %v232 = vpack.c.bf16 %v141, %v134
    %v233 = vpack.c.bf16 %v142, %v135
    %v234 = vpack.c.bf16 %v150, %v143
    %v235 = vpack.c.bf16 %v151, %v144
    %v236 = vpack.c.bf16 %v152, %v145
    %v237 = vpack.c.bf16 %v153, %v146
    %v238 = vpack.c.bf16 %v154, %v147
    %v239 = vpack.c.bf16 %v155, %v148
    %v240 = vpack.c.bf16 %v156, %v149
    %v241 = vpack.c.bf16 %v164, %v157
    %v242 = vpack.c.bf16 %v165, %v158
    %v243 = vpack.c.bf16 %v166, %v159
    %v244 = vpack.c.bf16 %v167, %v160
    %v245 = vpack.c.bf16 %v168, %v161
    %v246 = vpack.c.bf16 %v169, %v162
    %v247 = vpack.c.bf16 %v170, %v163
    %v248 = vpack.c.bf16 %v178, %v171
    %v249 = vpack.c.bf16 %v179, %v172
    %v250 = vpack.c.bf16 %v180, %v173
    %v251 = vpack.c.bf16 %v181, %v174
    %v252 = vpack.c.bf16 %v182, %v175
    %v253 = vpack.c.bf16 %v183, %v176
    %v254 = vpack.c.bf16 %v184, %v177
    %v255 = vpack.c.bf16 %v192, %v185
    %v256 = vpack.c.bf16 %v193, %v186
    %v257 = vpack.c.bf16 %v194, %v187
    %v258 = vpack.c.bf16 %v195, %v188
    %v259 = vpack.c.bf16 %v196, %v189
    %v260 = vpack.c.bf16 %v197, %v190
    %v261 = vpack.c.bf16 %v198, %v191
    %v262 = vpack.c.bf16 %v206, %v199
    %v263 = vpack.c.bf16 %v207, %v200
    %v264 = vpack.c.bf16 %v208, %v201
    %v265 = vpack.c.bf16 %v209, %v202
    %v266 = vpack.c.bf16 %v210, %v203
    %v267 = vpack.c.bf16 %v211, %v204
    %v268 = vpack.c.bf16 %v212, %v205
    %v269 = vld [vmem:[%s1] sm:$0xff]
    %v270 = vld [vmem:[%s1 + $0x8] sm:$0xff]
    %v271 = vld [vmem:[%s1 + $0x10] sm:$0xff]
    %v272 = vld [vmem:[%s1 + $0x18] sm:$0xff]
    %v273 = vld [vmem:[%s1 + $0x20] sm:$0xff]
    %v274 = vld [vmem:[%s1 + $0x28] sm:$0xff]
    %v275 = vld [vmem:[%s1 + $0x30] sm:$0xff]
    %v276 = vld [vmem:[%s1 + $0x38] sm:$0xff]
    %v277 = vld [vmem:[%s1 + $0x40] sm:$0xff]
    %v278 = vld [vmem:[%s1 + $0x48] sm:$0xff]
    %v279 = vld [vmem:[%s1 + $0x50] sm:$0xff]
    %v280 = vld [vmem:[%s1 + $0x58] sm:$0xff]
    %v281 = vld [vmem:[%s1 + $0x60] sm:$0xff]
    %v282 = vld [vmem:[%s1 + $0x68] sm:$0xff]
    %v283 = vld [vmem:[%s1 + $0x70] sm:$0xff]
    %v284 = vld [vmem:[%s1 + $0x78] sm:$0xff]
    %v285 = vld [vmem:[%s1 + $0x80] sm:$0xff]
    %v286 = vld [vmem:[%s1 + $0x88] sm:$0xff]
    %v287 = vld [vmem:[%s1 + $0x90] sm:$0xff]
    %v288 = vld [vmem:[%s1 + $0x98] sm:$0xff]
    %v289 = vld [vmem:[%s1 + $0xa0] sm:$0xff]
    %v290 = vld [vmem:[%s1 + $0xa8] sm:$0xff]
    %v291 = vld [vmem:[%s1 + $0xb0] sm:$0xff]
    %v292 = vld [vmem:[%s1 + $0xb8] sm:$0xff]
    %v293 = vld [vmem:[%s1 + $0xc0] sm:$0xff]
    %v294 = vld [vmem:[%s1 + $0xc8] sm:$0xff]
    %v295 = vld [vmem:[%s1 + $0xd0] sm:$0xff]
    %v296 = vld [vmem:[%s1 + $0xd8] sm:$0xff]
    %v297 = vld [vmem:[%s1 + $0xe0] sm:$0xff]
    %v298 = vld [vmem:[%s1 + $0xe8] sm:$0xff]
    %v299 = vld [vmem:[%s1 + $0xf0] sm:$0xff]
    %v300 = vld [vmem:[%s1 + $0xf8] sm:$0xff]
    %v301 = vld [vmem:[%s1 + $0x100] sm:$0xff]
    %v302 = vld [vmem:[%s1 + $0x108] sm:$0xff]
    %v303 = vld [vmem:[%s1 + $0x110] sm:$0xff]
    %v304 = vld [vmem:[%s1 + $0x118] sm:$0xff]
    %v305 = vld [vmem:[%s1 + $0x120] sm:$0xff]
    %v306 = vld [vmem:[%s1 + $0x128] sm:$0xff]
    %v307 = vld [vmem:[%s1 + $0x130] sm:$0xff]
    %v308 = vld [vmem:[%s1 + $0x138] sm:$0xff]
    %v309 = vld [vmem:[%s1 + $0x140] sm:$0xff]
    %v310 = vld [vmem:[%s1 + $0x148] sm:$0xff]
    %v311 = vld [vmem:[%s1 + $0x150] sm:$0xff]
    %v312 = vld [vmem:[%s1 + $0x158] sm:$0xff]
    %v313 = vld [vmem:[%s1 + $0x160] sm:$0xff]
    %v314 = vld [vmem:[%s1 + $0x168] sm:$0xff]
    %v315 = vld [vmem:[%s1 + $0x170] sm:$0xff]
    %v316 = vld [vmem:[%s1 + $0x178] sm:$0xff]
    %v317 = vld [vmem:[%s1 + $0x180] sm:$0xff]
    %v318 = vld [vmem:[%s1 + $0x188] sm:$0xff]
    %v319 = vld [vmem:[%s1 + $0x190] sm:$0xff]
    %v320 = vld [vmem:[%s1 + $0x198] sm:$0xff]
    %v321 = vld [vmem:[%s1 + $0x1a0] sm:$0xff]
    %v322 = vld [vmem:[%s1 + $0x1a8] sm:$0xff]
    %v323 = vld [vmem:[%s1 + $0x1b0] sm:$0xff]
    %v324 = vld [vmem:[%s1 + $0x1b8] sm:$0xff]
    %v325 = vld [vmem:[%s1 + $0x1c0] sm:$0xff]
    %v326 = vld [vmem:[%s1 + $0x1c8] sm:$0xff]
    %v327 = vld [vmem:[%s1 + $0x1d0] sm:$0xff]
    %v328 = vld [vmem:[%s1 + $0x1d8] sm:$0xff]
    %v329 = vld [vmem:[%s1 + $0x1e0] sm:$0xff]
    %v330 = vld [vmem:[%s1 + $0x1e8] sm:$0xff]
    %v331 = vld [vmem:[%s1 + $0x1f0] sm:$0xff]
    %v332 = vld [vmem:[%s1 + $0x1f8] sm:$0xff]
    %v333 = vld [vmem:[%s1 + $0x200] sm:$0xff]
    %v334 = vld [vmem:[%s1 + $0x208] sm:$0xff]
    %v335 = vld [vmem:[%s1 + $0x210] sm:$0xff]
    %v336 = vld [vmem:[%s1 + $0x218] sm:$0xff]
    %v337 = vld [vmem:[%s1 + $0x220] sm:$0xff]
    %v338 = vld [vmem:[%s1 + $0x228] sm:$0xff]
    %v339 = vld [vmem:[%s1 + $0x230] sm:$0xff]
    %v340 = vld [vmem:[%s1 + $0x238] sm:$0xff]
    %v341 = vld [vmem:[%s1 + $0x240] sm:$0xff]
    %v342 = vld [vmem:[%s1 + $0x248] sm:$0xff]
    %v343 = vld [vmem:[%s1 + $0x250] sm:$0xff]
    %v344 = vld [vmem:[%s1 + $0x258] sm:$0xff]
    %v345 = vld [vmem:[%s1 + $0x260] sm:$0xff]
    %v346 = vld [vmem:[%s1 + $0x268] sm:$0xff]
    %v347 = vld [vmem:[%s1 + $0x270] sm:$0xff]
    %v348 = vld [vmem:[%s1 + $0x278] sm:$0xff]
    %v349 = vld [vmem:[%s1 + $0x280] sm:$0xff]
    %v350 = vld [vmem:[%s1 + $0x288] sm:$0xff]
    %v351 = vld [vmem:[%s1 + $0x290] sm:$0xff]
    %v352 = vld [vmem:[%s1 + $0x298] sm:$0xff]
    %v353 = vld [vmem:[%s1 + $0x2a0] sm:$0xff]
    %v354 = vld [vmem:[%s1 + $0x2a8] sm:$0xff]
    %v355 = vld [vmem:[%s1 + $0x2b0] sm:$0xff]
    %v356 = vld [vmem:[%s1 + $0x2b8] sm:$0xff]
    %v357 = vld [vmem:[%s1 + $0x2c0] sm:$0xff]
    %v358 = vld [vmem:[%s1 + $0x2c8] sm:$0xff]
    %v359 = vld [vmem:[%s1 + $0x2d0] sm:$0xff]
    %v360 = vld [vmem:[%s1 + $0x2d8] sm:$0xff]
    %v361 = vld [vmem:[%s1 + $0x2e0] sm:$0xff]
    %v362 = vld [vmem:[%s1 + $0x2e8] sm:$0xff]
    %v363 = vld [vmem:[%s1 + $0x2f0] sm:$0xff]
    %v364 = vld [vmem:[%s1 + $0x2f8] sm:$0xff]
    %v365 = vld [vmem:[%s1 + $0x300] sm:$0xff]
    %v366 = vld [vmem:[%s1 + $0x308] sm:$0xff]
    %v367 = vld [vmem:[%s1 + $0x310] sm:$0xff]
    %v368 = vld [vmem:[%s1 + $0x318] sm:$0xff]
    %v369 = vld [vmem:[%s1 + $0x320] sm:$0xff]
    %v370 = vld [vmem:[%s1 + $0x328] sm:$0xff]
    %v371 = vld [vmem:[%s1 + $0x330] sm:$0xff]
    %v372 = vld [vmem:[%s1 + $0x338] sm:$0xff]
    %v373 = vld [vmem:[%s1 + $0x340] sm:$0xff]
    %v374 = vld [vmem:[%s1 + $0x348] sm:$0xff]
    %v375 = vld [vmem:[%s1 + $0x350] sm:$0xff]
    %v376 = vld [vmem:[%s1 + $0x358] sm:$0xff]
    %v377 = vld [vmem:[%s1 + $0x360] sm:$0xff]
    %v378 = vld [vmem:[%s1 + $0x368] sm:$0xff]
    %v379 = vld [vmem:[%s1 + $0x370] sm:$0xff]
    %v380 = vld [vmem:[%s1 + $0x378] sm:$0xff]
    %v381 = vld [vmem:[%s1 + $0x380] sm:$0xff]
    %v382 = vld [vmem:[%s1 + $0x388] sm:$0xff]
    %v383 = vld [vmem:[%s1 + $0x390] sm:$0xff]
    %v384 = vld [vmem:[%s1 + $0x398] sm:$0xff]
    %v385 = vld [vmem:[%s1 + $0x3a0] sm:$0xff]
    %v386 = vld [vmem:[%s1 + $0x3a8] sm:$0xff]
    %v387 = vld [vmem:[%s1 + $0x3b0] sm:$0xff]
    %v388 = vld [vmem:[%s1 + $0x3b8] sm:$0xff]
    %v389 = vld [vmem:[%s1 + $0x3c0] sm:$0xff]
    %v390 = vld [vmem:[%s1 + $0x3c8] sm:$0xff]
    %v391 = vld [vmem:[%s1 + $0x3d0] sm:$0xff]
    %v392 = vld [vmem:[%s1 + $0x3d8] sm:$0xff]
    %v393 = vld [vmem:[%s1 + $0x3e0] sm:$0xff]
    %v394 = vld [vmem:[%s1 + $0x3e8] sm:$0xff]
    %v395 = vld [vmem:[%s1 + $0x3f0] sm:$0xff]
    %v396 = vld [vmem:[%s1 + $0x3f8] sm:$0xff]
    %v397 = vld [vmem:[%s1 + $0x400] sm:$0xff]
    %v398 = vld [vmem:[%s1 + $0x408] sm:$0xff]
    %v399 = vld [vmem:[%s1 + $0x410] sm:$0xff]
    %v400 = vld [vmem:[%s1 + $0x418] sm:$0xff]
    %v401 = vld [vmem:[%s1 + $0x420] sm:$0xff]
    %v402 = vld [vmem:[%s1 + $0x428] sm:$0xff]
    %v403 = vld [vmem:[%s1 + $0x430] sm:$0xff]
    %v404 = vld [vmem:[%s1 + $0x438] sm:$0xff]
    %v405 = vld [vmem:[%s1 + $0x440] sm:$0xff]
    %v406 = vld [vmem:[%s1 + $0x448] sm:$0xff]
    %v407 = vld [vmem:[%s1 + $0x450] sm:$0xff]
    %v408 = vld [vmem:[%s1 + $0x458] sm:$0xff]
    %v409 = vld [vmem:[%s1 + $0x460] sm:$0xff]
    %v410 = vld [vmem:[%s1 + $0x468] sm:$0xff]
    %v411 = vld [vmem:[%s1 + $0x470] sm:$0xff]
    %v412 = vld [vmem:[%s1 + $0x478] sm:$0xff]
    %v413 = vld [vmem:[%s1 + $0x480] sm:$0xff]
    %v414 = vld [vmem:[%s1 + $0x488] sm:$0xff]
    %v415 = vld [vmem:[%s1 + $0x490] sm:$0xff]
    %v416 = vld [vmem:[%s1 + $0x498] sm:$0xff]
    %v417 = vld [vmem:[%s1 + $0x4a0] sm:$0xff]
    %v418 = vld [vmem:[%s1 + $0x4a8] sm:$0xff]
    %v419 = vld [vmem:[%s1 + $0x4b0] sm:$0xff]
    %v420 = vld [vmem:[%s1 + $0x4b8] sm:$0xff]
    %v421 = vld [vmem:[%s1 + $0x4c0] sm:$0xff]
    %v422 = vld [vmem:[%s1 + $0x4c8] sm:$0xff]
    %v423 = vld [vmem:[%s1 + $0x4d0] sm:$0xff]
    %v424 = vld [vmem:[%s1 + $0x4d8] sm:$0xff]
    %v425 = vld [vmem:[%s1 + $0x4e0] sm:$0xff]
    %v426 = vld [vmem:[%s1 + $0x4e8] sm:$0xff]
    %v427 = vld [vmem:[%s1 + $0x4f0] sm:$0xff]
    %v428 = vld [vmem:[%s1 + $0x4f8] sm:$0xff]
    %v429 = vld [vmem:[%s1 + $0x500] sm:$0xff]
    %v430 = vld [vmem:[%s1 + $0x508] sm:$0xff]
    %v431 = vld [vmem:[%s1 + $0x510] sm:$0xff]
    %v432 = vld [vmem:[%s1 + $0x518] sm:$0xff]
    %v433 = vld [vmem:[%s1 + $0x520] sm:$0xff]
    %v434 = vld [vmem:[%s1 + $0x528] sm:$0xff]
    %v435 = vld [vmem:[%s1 + $0x530] sm:$0xff]
    %v436 = vld [vmem:[%s1 + $0x538] sm:$0xff]
    %v437 = vld [vmem:[%s1 + $0x540] sm:$0xff]
    %v438 = vld [vmem:[%s1 + $0x548] sm:$0xff]
    %v439 = vld [vmem:[%s1 + $0x550] sm:$0xff]
    %v440 = vld [vmem:[%s1 + $0x558] sm:$0xff]
    %v441 = vld [vmem:[%s1 + $0x560] sm:$0xff]
    %v442 = vld [vmem:[%s1 + $0x568] sm:$0xff]
    %v443 = vld [vmem:[%s1 + $0x570] sm:$0xff]
    %v444 = vld [vmem:[%s1 + $0x578] sm:$0xff]
    %v445 = vld [vmem:[%s1 + $0x580] sm:$0xff]
    %v446 = vld [vmem:[%s1 + $0x588] sm:$0xff]
    %v447 = vld [vmem:[%s1 + $0x590] sm:$0xff]
    %v448 = vld [vmem:[%s1 + $0x598] sm:$0xff]
    %v449 = vld [vmem:[%s1 + $0x5a0] sm:$0xff]
    %v450 = vld [vmem:[%s1 + $0x5a8] sm:$0xff]
    %v451 = vld [vmem:[%s1 + $0x5b0] sm:$0xff]
    %v452 = vld [vmem:[%s1 + $0x5b8] sm:$0xff]
    %v453 = vld [vmem:[%s1 + $0x5c0] sm:$0xff]
    %v454 = vld [vmem:[%s1 + $0x5c8] sm:$0xff]
    %v455 = vld [vmem:[%s1 + $0x5d0] sm:$0xff]
    %v456 = vld [vmem:[%s1 + $0x5d8] sm:$0xff]
    %v457 = vld [vmem:[%s1 + $0x5e0] sm:$0xff]
    %v458 = vld [vmem:[%s1 + $0x5e8] sm:$0xff]
    %v459 = vld [vmem:[%s1 + $0x5f0] sm:$0xff]
    %v460 = vld [vmem:[%s1 + $0x5f8] sm:$0xff]
    %v461 = vld [vmem:[%s1 + $0x600] sm:$0xff]
    %v462 = vld [vmem:[%s1 + $0x608] sm:$0xff]
    %v463 = vld [vmem:[%s1 + $0x610] sm:$0xff]
    %v464 = vld [vmem:[%s1 + $0x618] sm:$0xff]
    %v465 = vld [vmem:[%s2] sm:$0xf]
    %v467 = vlaneseq
    %v468 = vshrl.u32 %v467, 7
    %v469 = vsub.s32 0, %v468
    %v470 = vrot.slane %v465, %v469
    %v471 = vlaneseq
    %v472 = vshrl.u32 %v471, 7
    %v473 = vsub.s32 1, %v472
    %v474 = vrot.slane %v465, %v473
    %v475 = vlaneseq
    %v476 = vshrl.u32 %v475, 7
    %v477 = vsub.s32 2, %v476
    %v478 = vrot.slane %v465, %v477
    %v479 = vlaneseq
    %v480 = vshrl.u32 %v479, 7
    %v481 = vsub.s32 3, %v480
    %v482 = vrot.slane %v465, %v481
    %v683 = vunpack.c.l.b16 %v269
    %v684 = vunpack.c.h.b16 %v269
    %v685 = vunpack.c.l.b16 %v270
    %v686 = vunpack.c.h.b16 %v270
    %v687 = vunpack.c.l.b16 %v271
    %v688 = vunpack.c.h.b16 %v271
    %v689 = vunpack.c.l.b16 %v272
    %v690 = vunpack.c.h.b16 %v272
    %v691 = vunpack.c.l.b16 %v273
    %v692 = vunpack.c.h.b16 %v273
    %v693 = vunpack.c.l.b16 %v274
    %v694 = vunpack.c.h.b16 %v274
    %v695 = vunpack.c.l.b16 %v275
    %v696 = vunpack.c.h.b16 %v275
    %v697 = vunpack.c.l.b16 %v276
    %v698 = vunpack.c.h.b16 %v276
    %v699 = vunpack.c.l.b16 %v277
    %v700 = vunpack.c.h.b16 %v277
    %v701 = vunpack.c.l.b16 %v278
    %v702 = vunpack.c.h.b16 %v278
    %v703 = vunpack.c.l.b16 %v279
    %v704 = vunpack.c.h.b16 %v279
    %v705 = vunpack.c.l.b16 %v280
    %v706 = vunpack.c.h.b16 %v280
    %v707 = vunpack.c.l.b16 %v281
    %v708 = vunpack.c.h.b16 %v281
    %v709 = vunpack.c.l.b16 %v282
    %v710 = vunpack.c.h.b16 %v282
    %v711 = vunpack.c.l.b16 %v283
    %v712 = vunpack.c.h.b16 %v283
    %v713 = vunpack.c.l.b16 %v284
    %v714 = vunpack.c.h.b16 %v284
    %v715 = vunpack.c.l.b16 %v285
    %v716 = vunpack.c.h.b16 %v285
    %v717 = vunpack.c.l.b16 %v286
    %v718 = vunpack.c.h.b16 %v286
    %v719 = vunpack.c.l.b16 %v287
    %v720 = vunpack.c.h.b16 %v287
    %v721 = vunpack.c.l.b16 %v288
    %v722 = vunpack.c.h.b16 %v288
    %v723 = vunpack.c.l.b16 %v289
    %v724 = vunpack.c.h.b16 %v289
    %v725 = vunpack.c.l.b16 %v290
    %v726 = vunpack.c.h.b16 %v290
    %v727 = vunpack.c.l.b16 %v291
    %v728 = vunpack.c.h.b16 %v291
    %v729 = vunpack.c.l.b16 %v292
    %v730 = vunpack.c.h.b16 %v292
    %v731 = vunpack.c.l.b16 %v293
    %v732 = vunpack.c.h.b16 %v293
    %v733 = vunpack.c.l.b16 %v294
    %v734 = vunpack.c.h.b16 %v294
    %v735 = vunpack.c.l.b16 %v295
    %v736 = vunpack.c.h.b16 %v295
    %v737 = vunpack.c.l.b16 %v296
    %v738 = vunpack.c.h.b16 %v296
    %v739 = vunpack.c.l.b16 %v297
    %v740 = vunpack.c.h.b16 %v297
    %v741 = vunpack.c.l.b16 %v298
    %v742 = vunpack.c.h.b16 %v298
    %v743 = vunpack.c.l.b16 %v299
    %v744 = vunpack.c.h.b16 %v299
    %v745 = vunpack.c.l.b16 %v300
    %v746 = vunpack.c.h.b16 %v300
    %v747 = vunpack.c.l.b16 %v301
    %v748 = vunpack.c.h.b16 %v301
    %v749 = vunpack.c.l.b16 %v302
    %v750 = vunpack.c.h.b16 %v302
    %v751 = vunpack.c.l.b16 %v303
    %v752 = vunpack.c.h.b16 %v303
    %v753 = vunpack.c.l.b16 %v304
    %v754 = vunpack.c.h.b16 %v304
    %v755 = vunpack.c.l.b16 %v305
    %v756 = vunpack.c.h.b16 %v305
    %v757 = vunpack.c.l.b16 %v306
    %v758 = vunpack.c.h.b16 %v306
    %v759 = vunpack.c.l.b16 %v307
    %v760 = vunpack.c.h.b16 %v307
    %v761 = vunpack.c.l.b16 %v308
    %v762 = vunpack.c.h.b16 %v308
    %v763 = vunpack.c.l.b16 %v309
    %v764 = vunpack.c.h.b16 %v309
    %v765 = vunpack.c.l.b16 %v310
    %v766 = vunpack.c.h.b16 %v310
    %v767 = vunpack.c.l.b16 %v311
    %v768 = vunpack.c.h.b16 %v311
    %v769 = vunpack.c.l.b16 %v312
    %v770 = vunpack.c.h.b16 %v312
    %v771 = vunpack.c.l.b16 %v313
    %v772 = vunpack.c.h.b16 %v313
    %v773 = vunpack.c.l.b16 %v314
    %v774 = vunpack.c.h.b16 %v314
    %v775 = vunpack.c.l.b16 %v315
    %v776 = vunpack.c.h.b16 %v315
    %v777 = vunpack.c.l.b16 %v316
    %v778 = vunpack.c.h.b16 %v316
    %v779 = vunpack.c.l.b16 %v317
    %v780 = vunpack.c.h.b16 %v317
    %v781 = vunpack.c.l.b16 %v318
    %v782 = vunpack.c.h.b16 %v318
    %v783 = vunpack.c.l.b16 %v319
    %v784 = vunpack.c.h.b16 %v319
    %v785 = vunpack.c.l.b16 %v320
    %v786 = vunpack.c.h.b16 %v320
    %v787 = vunpack.c.l.b16 %v321
    %v788 = vunpack.c.h.b16 %v321
    %v789 = vunpack.c.l.b16 %v322
    %v790 = vunpack.c.h.b16 %v322
    %v791 = vunpack.c.l.b16 %v323
    %v792 = vunpack.c.h.b16 %v323
    %v793 = vunpack.c.l.b16 %v324
    %v794 = vunpack.c.h.b16 %v324
    %v795 = vunpack.c.l.b16 %v325
    %v796 = vunpack.c.h.b16 %v325
    %v797 = vunpack.c.l.b16 %v326
    %v798 = vunpack.c.h.b16 %v326
    %v799 = vunpack.c.l.b16 %v327
    %v800 = vunpack.c.h.b16 %v327
    %v801 = vunpack.c.l.b16 %v328
    %v802 = vunpack.c.h.b16 %v328
    %v803 = vunpack.c.l.b16 %v329
    %v804 = vunpack.c.h.b16 %v329
    %v805 = vunpack.c.l.b16 %v330
    %v806 = vunpack.c.h.b16 %v330
    %v807 = vunpack.c.l.b16 %v331
    %v808 = vunpack.c.h.b16 %v331
    %v809 = vunpack.c.l.b16 %v332
    %v810 = vunpack.c.h.b16 %v332
    %v811 = vunpack.c.l.b16 %v333
    %v812 = vunpack.c.h.b16 %v333
    %v813 = vunpack.c.l.b16 %v334
    %v814 = vunpack.c.h.b16 %v334
    %v815 = vunpack.c.l.b16 %v335
    %v816 = vunpack.c.h.b16 %v335
    %v817 = vunpack.c.l.b16 %v336
    %v818 = vunpack.c.h.b16 %v336
    %v819 = vunpack.c.l.b16 %v337
    %v820 = vunpack.c.h.b16 %v337
    %v821 = vunpack.c.l.b16 %v338
    %v822 = vunpack.c.h.b16 %v338
    %v823 = vunpack.c.l.b16 %v339
    %v824 = vunpack.c.h.b16 %v339
    %v825 = vunpack.c.l.b16 %v340
    %v826 = vunpack.c.h.b16 %v340
    %v827 = vunpack.c.l.b16 %v341
    %v828 = vunpack.c.h.b16 %v341
    %v829 = vunpack.c.l.b16 %v342
    %v830 = vunpack.c.h.b16 %v342
    %v831 = vunpack.c.l.b16 %v343
    %v832 = vunpack.c.h.b16 %v343
    %v833 = vunpack.c.l.b16 %v344
    %v834 = vunpack.c.h.b16 %v344
    %v835 = vunpack.c.l.b16 %v345
    %v836 = vunpack.c.h.b16 %v345
    %v837 = vunpack.c.l.b16 %v346
    %v838 = vunpack.c.h.b16 %v346
    %v839 = vunpack.c.l.b16 %v347
    %v840 = vunpack.c.h.b16 %v347
    %v841 = vunpack.c.l.b16 %v348
    %v842 = vunpack.c.h.b16 %v348
    %v843 = vunpack.c.l.b16 %v349
    %v844 = vunpack.c.h.b16 %v349
    %v845 = vunpack.c.l.b16 %v350
    %v846 = vunpack.c.h.b16 %v350
    %v847 = vunpack.c.l.b16 %v351
    %v848 = vunpack.c.h.b16 %v351
    %v849 = vunpack.c.l.b16 %v352
    %v850 = vunpack.c.h.b16 %v352
    %v851 = vunpack.c.l.b16 %v353
    %v852 = vunpack.c.h.b16 %v353
    %v853 = vunpack.c.l.b16 %v354
    %v854 = vunpack.c.h.b16 %v354
    %v855 = vunpack.c.l.b16 %v355
    %v856 = vunpack.c.h.b16 %v355
    %v857 = vunpack.c.l.b16 %v356
    %v858 = vunpack.c.h.b16 %v356
    %v859 = vunpack.c.l.b16 %v357
    %v860 = vunpack.c.h.b16 %v357
    %v861 = vunpack.c.l.b16 %v358
    %v862 = vunpack.c.h.b16 %v358
    %v863 = vunpack.c.l.b16 %v359
    %v864 = vunpack.c.h.b16 %v359
    %v865 = vunpack.c.l.b16 %v360
    %v866 = vunpack.c.h.b16 %v360
    %v867 = vunpack.c.l.b16 %v361
    %v868 = vunpack.c.h.b16 %v361
    %v869 = vunpack.c.l.b16 %v362
    %v870 = vunpack.c.h.b16 %v362
    %v871 = vunpack.c.l.b16 %v363
    %v872 = vunpack.c.h.b16 %v363
    %v873 = vunpack.c.l.b16 %v364
    %v874 = vunpack.c.h.b16 %v364
    %v875 = vunpack.c.l.b16 %v365
    %v876 = vunpack.c.h.b16 %v365
    %v877 = vunpack.c.l.b16 %v366
    %v878 = vunpack.c.h.b16 %v366
    %v879 = vunpack.c.l.b16 %v367
    %v880 = vunpack.c.h.b16 %v367
    %v881 = vunpack.c.l.b16 %v368
    %v882 = vunpack.c.h.b16 %v368
    %v883 = vunpack.c.l.b16 %v369
    %v884 = vunpack.c.h.b16 %v369
    %v885 = vunpack.c.l.b16 %v370
    %v886 = vunpack.c.h.b16 %v370
    %v887 = vunpack.c.l.b16 %v371
    %v888 = vunpack.c.h.b16 %v371
    %v889 = vunpack.c.l.b16 %v372
    %v890 = vunpack.c.h.b16 %v372
    %v891 = vunpack.c.l.b16 %v373
    %v892 = vunpack.c.h.b16 %v373
    %v893 = vunpack.c.l.b16 %v374
    %v894 = vunpack.c.h.b16 %v374
    %v895 = vunpack.c.l.b16 %v375
    %v896 = vunpack.c.h.b16 %v375
    %v897 = vunpack.c.l.b16 %v376
    %v898 = vunpack.c.h.b16 %v376
    %v899 = vunpack.c.l.b16 %v377
    %v900 = vunpack.c.h.b16 %v377
    %v901 = vunpack.c.l.b16 %v378
    %v902 = vunpack.c.h.b16 %v378
    %v903 = vunpack.c.l.b16 %v379
    %v904 = vunpack.c.h.b16 %v379
    %v905 = vunpack.c.l.b16 %v380
    %v906 = vunpack.c.h.b16 %v380
    %v907 = vunpack.c.l.b16 %v381
    %v908 = vunpack.c.h.b16 %v381
    %v909 = vunpack.c.l.b16 %v382
    %v910 = vunpack.c.h.b16 %v382
    %v911 = vunpack.c.l.b16 %v383
    %v912 = vunpack.c.h.b16 %v383
    %v913 = vunpack.c.l.b16 %v384
    %v914 = vunpack.c.h.b16 %v384
    %v915 = vunpack.c.l.b16 %v385
    %v916 = vunpack.c.h.b16 %v385
    %v917 = vunpack.c.l.b16 %v386
    %v918 = vunpack.c.h.b16 %v386
    %v919 = vunpack.c.l.b16 %v387
    %v920 = vunpack.c.h.b16 %v387
    %v921 = vunpack.c.l.b16 %v388
    %v922 = vunpack.c.h.b16 %v388
    %v923 = vunpack.c.l.b16 %v389
    %v924 = vunpack.c.h.b16 %v389
    %v925 = vunpack.c.l.b16 %v390
    %v926 = vunpack.c.h.b16 %v390
    %v927 = vunpack.c.l.b16 %v391
    %v928 = vunpack.c.h.b16 %v391
    %v929 = vunpack.c.l.b16 %v392
    %v930 = vunpack.c.h.b16 %v392
    %v931 = vunpack.c.l.b16 %v393
    %v932 = vunpack.c.h.b16 %v393
    %v933 = vunpack.c.l.b16 %v394
    %v934 = vunpack.c.h.b16 %v394
    %v935 = vunpack.c.l.b16 %v395
    %v936 = vunpack.c.h.b16 %v395
    %v937 = vunpack.c.l.b16 %v396
    %v938 = vunpack.c.h.b16 %v396
    %v939 = vunpack.c.l.b16 %v397
    %v940 = vunpack.c.h.b16 %v397
    %v941 = vunpack.c.l.b16 %v398
    %v942 = vunpack.c.h.b16 %v398
    %v943 = vunpack.c.l.b16 %v399
    %v944 = vunpack.c.h.b16 %v399
    %v945 = vunpack.c.l.b16 %v400
    %v946 = vunpack.c.h.b16 %v400
    %v947 = vunpack.c.l.b16 %v401
    %v948 = vunpack.c.h.b16 %v401
    %v949 = vunpack.c.l.b16 %v402
    %v950 = vunpack.c.h.b16 %v402
    %v951 = vunpack.c.l.b16 %v403
    %v952 = vunpack.c.h.b16 %v403
    %v953 = vunpack.c.l.b16 %v404
    %v954 = vunpack.c.h.b16 %v404
    %v955 = vunpack.c.l.b16 %v405
    %v956 = vunpack.c.h.b16 %v405
    %v957 = vunpack.c.l.b16 %v406
    %v958 = vunpack.c.h.b16 %v406
    %v959 = vunpack.c.l.b16 %v407
    %v960 = vunpack.c.h.b16 %v407
    %v961 = vunpack.c.l.b16 %v408
    %v962 = vunpack.c.h.b16 %v408
    %v963 = vunpack.c.l.b16 %v409
    %v964 = vunpack.c.h.b16 %v409
    %v965 = vunpack.c.l.b16 %v410
    %v966 = vunpack.c.h.b16 %v410
    %v967 = vunpack.c.l.b16 %v411
    %v968 = vunpack.c.h.b16 %v411
    %v969 = vunpack.c.l.b16 %v412
    %v970 = vunpack.c.h.b16 %v412
    %v971 = vunpack.c.l.b16 %v413
    %v972 = vunpack.c.h.b16 %v413
    %v973 = vunpack.c.l.b16 %v414
    %v974 = vunpack.c.h.b16 %v414
    %v975 = vunpack.c.l.b16 %v415
    %v976 = vunpack.c.h.b16 %v415
    %v977 = vunpack.c.l.b16 %v416
    %v978 = vunpack.c.h.b16 %v416
    %v979 = vunpack.c.l.b16 %v417
    %v980 = vunpack.c.h.b16 %v417
    %v981 = vunpack.c.l.b16 %v418
    %v982 = vunpack.c.h.b16 %v418
    %v983 = vunpack.c.l.b16 %v419
    %v984 = vunpack.c.h.b16 %v419
    %v985 = vunpack.c.l.b16 %v420
    %v986 = vunpack.c.h.b16 %v420
    %v987 = vunpack.c.l.b16 %v421
    %v988 = vunpack.c.h.b16 %v421
    %v989 = vunpack.c.l.b16 %v422
    %v990 = vunpack.c.h.b16 %v422
    %v991 = vunpack.c.l.b16 %v423
    %v992 = vunpack.c.h.b16 %v423
    %v993 = vunpack.c.l.b16 %v424
    %v994 = vunpack.c.h.b16 %v424
    %v995 = vunpack.c.l.b16 %v425
    %v996 = vunpack.c.h.b16 %v425
    %v997 = vunpack.c.l.b16 %v426
    %v998 = vunpack.c.h.b16 %v426
    %v999 = vunpack.c.l.b16 %v427
    %v1000 = vunpack.c.h.b16 %v427
    %v1001 = vunpack.c.l.b16 %v428
    %v1002 = vunpack.c.h.b16 %v428
    %v1003 = vunpack.c.l.b16 %v429
    %v1004 = vunpack.c.h.b16 %v429
    %v1005 = vunpack.c.l.b16 %v430
    %v1006 = vunpack.c.h.b16 %v430
    %v1007 = vunpack.c.l.b16 %v431
    %v1008 = vunpack.c.h.b16 %v431
    %v1009 = vunpack.c.l.b16 %v432
    %v1010 = vunpack.c.h.b16 %v432
    %v1011 = vunpack.c.l.b16 %v433
    %v1012 = vunpack.c.h.b16 %v433
    %v1013 = vunpack.c.l.b16 %v434
    %v1014 = vunpack.c.h.b16 %v434
    %v1015 = vunpack.c.l.b16 %v435
    %v1016 = vunpack.c.h.b16 %v435
    %v1017 = vunpack.c.l.b16 %v436
    %v1018 = vunpack.c.h.b16 %v436
    %v1019 = vunpack.c.l.b16 %v437
    %v1020 = vunpack.c.h.b16 %v437
    %v1021 = vunpack.c.l.b16 %v438
    %v1022 = vunpack.c.h.b16 %v438
    %v1023 = vunpack.c.l.b16 %v439
    %v1024 = vunpack.c.h.b16 %v439
    %v1025 = vunpack.c.l.b16 %v440
    %v1026 = vunpack.c.h.b16 %v440
    %v1027 = vunpack.c.l.b16 %v441
    %v1028 = vunpack.c.h.b16 %v441
    %v1029 = vunpack.c.l.b16 %v442
    %v1030 = vunpack.c.h.b16 %v442
    %v1031 = vunpack.c.l.b16 %v443
    %v1032 = vunpack.c.h.b16 %v443
    %v1033 = vunpack.c.l.b16 %v444
    %v1034 = vunpack.c.h.b16 %v444
    %v1035 = vunpack.c.l.b16 %v445
    %v1036 = vunpack.c.h.b16 %v445
    %v1037 = vunpack.c.l.b16 %v446
    %v1038 = vunpack.c.h.b16 %v446
    %v1039 = vunpack.c.l.b16 %v447
    %v1040 = vunpack.c.h.b16 %v447
    %v1041 = vunpack.c.l.b16 %v448
    %v1042 = vunpack.c.h.b16 %v448
    %v1043 = vunpack.c.l.b16 %v449
    %v1044 = vunpack.c.h.b16 %v449
    %v1045 = vunpack.c.l.b16 %v450
    %v1046 = vunpack.c.h.b16 %v450
    %v1047 = vunpack.c.l.b16 %v451
    %v1048 = vunpack.c.h.b16 %v451
    %v1049 = vunpack.c.l.b16 %v452
    %v1050 = vunpack.c.h.b16 %v452
    %v1051 = vunpack.c.l.b16 %v453
    %v1052 = vunpack.c.h.b16 %v453
    %v1053 = vunpack.c.l.b16 %v454
    %v1054 = vunpack.c.h.b16 %v454
    %v1055 = vunpack.c.l.b16 %v455
    %v1056 = vunpack.c.h.b16 %v455
    %v1057 = vunpack.c.l.b16 %v456
    %v1058 = vunpack.c.h.b16 %v456
    %v1059 = vunpack.c.l.b16 %v457
    %v1060 = vunpack.c.h.b16 %v457
    %v1061 = vunpack.c.l.b16 %v458
    %v1062 = vunpack.c.h.b16 %v458
    %v1063 = vunpack.c.l.b16 %v459
    %v1064 = vunpack.c.h.b16 %v459
    %v1065 = vunpack.c.l.b16 %v460
    %v1066 = vunpack.c.h.b16 %v460
    %v1067 = vunpack.c.l.b16 %v461
    %v1068 = vunpack.c.h.b16 %v461
    %v1069 = vunpack.c.l.b16 %v462
    %v1070 = vunpack.c.h.b16 %v462
    %v1071 = vunpack.c.l.b16 %v463
    %v1072 = vunpack.c.h.b16 %v463
    %v1073 = vunpack.c.l.b16 %v464
    %v1074 = vunpack.c.h.b16 %v464
    %v1075 = vpack.c.b16 %v687, %v683
    %v1076 = vpack.c.b16 %v688, %v684
    %v1077 = vpack.c.b16 %v689, %v685
    %v1078 = vpack.c.b16 %v690, %v686
    %v1079 = vpack.c.b16 %v695, %v691
    %v1080 = vpack.c.b16 %v696, %v692
    %v1081 = vpack.c.b16 %v697, %v693
    %v1082 = vpack.c.b16 %v698, %v694
    %v1083 = vpack.c.b16 %v703, %v699
    %v1084 = vpack.c.b16 %v704, %v700
    %v1085 = vpack.c.b16 %v705, %v701
    %v1086 = vpack.c.b16 %v706, %v702
    %v1087 = vpack.c.b16 %v711, %v707
    %v1088 = vpack.c.b16 %v712, %v708
    %v1089 = vpack.c.b16 %v713, %v709
    %v1090 = vpack.c.b16 %v714, %v710
    %v1091 = vpack.c.b16 %v719, %v715
    %v1092 = vpack.c.b16 %v720, %v716
    %v1093 = vpack.c.b16 %v721, %v717
    %v1094 = vpack.c.b16 %v722, %v718
    %v1095 = vpack.c.b16 %v727, %v723
    %v1096 = vpack.c.b16 %v728, %v724
    %v1097 = vpack.c.b16 %v729, %v725
    %v1098 = vpack.c.b16 %v730, %v726
    %v1099 = vpack.c.b16 %v735, %v731
    %v1100 = vpack.c.b16 %v736, %v732
    %v1101 = vpack.c.b16 %v737, %v733
    %v1102 = vpack.c.b16 %v738, %v734
    %v1103 = vpack.c.b16 %v743, %v739
    %v1104 = vpack.c.b16 %v744, %v740
    %v1105 = vpack.c.b16 %v745, %v741
    %v1106 = vpack.c.b16 %v746, %v742
    %v1107 = vpack.c.b16 %v751, %v747
    %v1108 = vpack.c.b16 %v752, %v748
    %v1109 = vpack.c.b16 %v753, %v749
    %v1110 = vpack.c.b16 %v754, %v750
    %v1111 = vpack.c.b16 %v759, %v755
    %v1112 = vpack.c.b16 %v760, %v756
    %v1113 = vpack.c.b16 %v761, %v757
    %v1114 = vpack.c.b16 %v762, %v758
    %v1115 = vpack.c.b16 %v767, %v763
    %v1116 = vpack.c.b16 %v768, %v764
    %v1117 = vpack.c.b16 %v769, %v765
    %v1118 = vpack.c.b16 %v770, %v766
    %v1119 = vpack.c.b16 %v775, %v771
    %v1120 = vpack.c.b16 %v776, %v772
    %v1121 = vpack.c.b16 %v777, %v773
    %v1122 = vpack.c.b16 %v778, %v774
    %v1123 = vpack.c.b16 %v783, %v779
    %v1124 = vpack.c.b16 %v784, %v780
    %v1125 = vpack.c.b16 %v785, %v781
    %v1126 = vpack.c.b16 %v786, %v782
    %v1127 = vpack.c.b16 %v791, %v787
    %v1128 = vpack.c.b16 %v792, %v788
    %v1129 = vpack.c.b16 %v793, %v789
    %v1130 = vpack.c.b16 %v794, %v790
    %v1131 = vpack.c.b16 %v799, %v795
    %v1132 = vpack.c.b16 %v800, %v796
    %v1133 = vpack.c.b16 %v801, %v797
    %v1134 = vpack.c.b16 %v802, %v798
    %v1135 = vpack.c.b16 %v807, %v803
    %v1136 = vpack.c.b16 %v808, %v804
    %v1137 = vpack.c.b16 %v809, %v805
    %v1138 = vpack.c.b16 %v810, %v806
    %v1139 = vpack.c.b16 %v815, %v811
    %v1140 = vpack.c.b16 %v816, %v812
    %v1141 = vpack.c.b16 %v817, %v813
    %v1142 = vpack.c.b16 %v818, %v814
    %v1143 = vpack.c.b16 %v823, %v819
    %v1144 = vpack.c.b16 %v824, %v820
    %v1145 = vpack.c.b16 %v825, %v821
    %v1146 = vpack.c.b16 %v826, %v822
    %v1147 = vpack.c.b16 %v831, %v827
    %v1148 = vpack.c.b16 %v832, %v828
    %v1149 = vpack.c.b16 %v833, %v829
    %v1150 = vpack.c.b16 %v834, %v830
    %v1151 = vpack.c.b16 %v839, %v835
    %v1152 = vpack.c.b16 %v840, %v836
    %v1153 = vpack.c.b16 %v841, %v837
    %v1154 = vpack.c.b16 %v842, %v838
    %v1155 = vpack.c.b16 %v847, %v843
    %v1156 = vpack.c.b16 %v848, %v844
    %v1157 = vpack.c.b16 %v849, %v845
    %v1158 = vpack.c.b16 %v850, %v846
    %v1159 = vpack.c.b16 %v855, %v851
    %v1160 = vpack.c.b16 %v856, %v852
    %v1161 = vpack.c.b16 %v857, %v853
    %v1162 = vpack.c.b16 %v858, %v854
    %v1163 = vpack.c.b16 %v863, %v859
    %v1164 = vpack.c.b16 %v864, %v860
    %v1165 = vpack.c.b16 %v865, %v861
    %v1166 = vpack.c.b16 %v866, %v862
    %v1167 = vpack.c.b16 %v871, %v867
    %v1168 = vpack.c.b16 %v872, %v868
    %v1169 = vpack.c.b16 %v873, %v869
    %v1170 = vpack.c.b16 %v874, %v870
    %v1171 = vpack.c.b16 %v879, %v875
    %v1172 = vpack.c.b16 %v880, %v876
    %v1173 = vpack.c.b16 %v881, %v877
    %v1174 = vpack.c.b16 %v882, %v878
    %v1175 = vpack.c.b16 %v887, %v883
    %v1176 = vpack.c.b16 %v888, %v884
    %v1177 = vpack.c.b16 %v889, %v885
    %v1178 = vpack.c.b16 %v890, %v886
    %v1179 = vpack.c.b16 %v895, %v891
    %v1180 = vpack.c.b16 %v896, %v892
    %v1181 = vpack.c.b16 %v897, %v893
    %v1182 = vpack.c.b16 %v898, %v894
    %v1183 = vpack.c.b16 %v903, %v899
    %v1184 = vpack.c.b16 %v904, %v900
    %v1185 = vpack.c.b16 %v905, %v901
    %v1186 = vpack.c.b16 %v906, %v902
    %v1187 = vpack.c.b16 %v911, %v907
    %v1188 = vpack.c.b16 %v912, %v908
    %v1189 = vpack.c.b16 %v913, %v909
    %v1190 = vpack.c.b16 %v914, %v910
    %v1191 = vpack.c.b16 %v919, %v915
    %v1192 = vpack.c.b16 %v920, %v916
    %v1193 = vpack.c.b16 %v921, %v917
    %v1194 = vpack.c.b16 %v922, %v918
    %v1195 = vpack.c.b16 %v927, %v923
    %v1196 = vpack.c.b16 %v928, %v924
    %v1197 = vpack.c.b16 %v929, %v925
    %v1198 = vpack.c.b16 %v930, %v926
    %v1199 = vpack.c.b16 %v935, %v931
    %v1200 = vpack.c.b16 %v936, %v932
    %v1201 = vpack.c.b16 %v937, %v933
    %v1202 = vpack.c.b16 %v938, %v934
    %v1203 = vpack.c.b16 %v943, %v939
    %v1204 = vpack.c.b16 %v944, %v940
    %v1205 = vpack.c.b16 %v945, %v941
    %v1206 = vpack.c.b16 %v946, %v942
    %v1207 = vpack.c.b16 %v951, %v947
    %v1208 = vpack.c.b16 %v952, %v948
    %v1209 = vpack.c.b16 %v953, %v949
    %v1210 = vpack.c.b16 %v954, %v950
    %v1211 = vpack.c.b16 %v959, %v955
    %v1212 = vpack.c.b16 %v960, %v956
    %v1213 = vpack.c.b16 %v961, %v957
    %v1214 = vpack.c.b16 %v962, %v958
    %v1215 = vpack.c.b16 %v967, %v963
    %v1216 = vpack.c.b16 %v968, %v964
    %v1217 = vpack.c.b16 %v969, %v965
    %v1218 = vpack.c.b16 %v970, %v966
    %v1219 = vpack.c.b16 %v975, %v971
    %v1220 = vpack.c.b16 %v976, %v972
    %v1221 = vpack.c.b16 %v977, %v973
    %v1222 = vpack.c.b16 %v978, %v974
    %v1223 = vpack.c.b16 %v983, %v979
    %v1224 = vpack.c.b16 %v984, %v980
    %v1225 = vpack.c.b16 %v985, %v981
    %v1226 = vpack.c.b16 %v986, %v982
    %v1227 = vpack.c.b16 %v991, %v987
    %v1228 = vpack.c.b16 %v992, %v988
    %v1229 = vpack.c.b16 %v993, %v989
    %v1230 = vpack.c.b16 %v994, %v990
    %v1231 = vpack.c.b16 %v999, %v995
    %v1232 = vpack.c.b16 %v1000, %v996
    %v1233 = vpack.c.b16 %v1001, %v997
    %v1234 = vpack.c.b16 %v1002, %v998
    %v1235 = vpack.c.b16 %v1007, %v1003
    %v1236 = vpack.c.b16 %v1008, %v1004
    %v1237 = vpack.c.b16 %v1009, %v1005
    %v1238 = vpack.c.b16 %v1010, %v1006
    %v1239 = vpack.c.b16 %v1015, %v1011
    %v1240 = vpack.c.b16 %v1016, %v1012
    %v1241 = vpack.c.b16 %v1017, %v1013
    %v1242 = vpack.c.b16 %v1018, %v1014
    %v1243 = vpack.c.b16 %v1023, %v1019
    %v1244 = vpack.c.b16 %v1024, %v1020
    %v1245 = vpack.c.b16 %v1025, %v1021
    %v1246 = vpack.c.b16 %v1026, %v1022
    %v1247 = vpack.c.b16 %v1031, %v1027
    %v1248 = vpack.c.b16 %v1032, %v1028
    %v1249 = vpack.c.b16 %v1033, %v1029
    %v1250 = vpack.c.b16 %v1034, %v1030
    %v1251 = vpack.c.b16 %v1039, %v1035
    %v1252 = vpack.c.b16 %v1040, %v1036
    %v1253 = vpack.c.b16 %v1041, %v1037
    %v1254 = vpack.c.b16 %v1042, %v1038
    %v1255 = vpack.c.b16 %v1047, %v1043
    %v1256 = vpack.c.b16 %v1048, %v1044
    %v1257 = vpack.c.b16 %v1049, %v1045
    %v1258 = vpack.c.b16 %v1050, %v1046
    %v1259 = vpack.c.b16 %v1055, %v1051
    %v1260 = vpack.c.b16 %v1056, %v1052
    %v1261 = vpack.c.b16 %v1057, %v1053
    %v1262 = vpack.c.b16 %v1058, %v1054
    %v1263 = vpack.c.b16 %v1063, %v1059
    %v1264 = vpack.c.b16 %v1064, %v1060
    %v1265 = vpack.c.b16 %v1065, %v1061
    %v1266 = vpack.c.b16 %v1066, %v1062
    %v1267 = vpack.c.b16 %v1071, %v1067
    %v1268 = vpack.c.b16 %v1072, %v1068
    %v1269 = vpack.c.b16 %v1073, %v1069
    %v1270 = vpack.c.b16 %v1074, %v1070
    %vm1467 = vcmask 130048
    %v1469 = vsel %vm1467, %v219, 0
    %v1472 = vsel %vm1467, %v226, 0
    %v1475 = vsel %vm1467, %v233, 0
    %v1478 = vsel %vm1467, %v240, 0
    %v1481 = vsel %vm1467, %v247, 0
    %v1484 = vsel %vm1467, %v254, 0
    %v1487 = vsel %vm1467, %v261, 0
    %v1490 = vsel %vm1467, %v268, 0
    %1492 = vmatprep.subr.bf16.mxu0 %v1076
    %1493 = vmatpush1.bf16.msra.mxu0 %v1075
    %1494 = vmatprep.subr.bf16.mxu0 %v1080
    %1495 = vmatpush1.bf16.msra.mxu0 %v1079
    %1496 = vmatprep.subr.bf16.mxu0 %v1084
    %1497 = vmatpush1.bf16.msra.mxu0 %v1083
    %1498 = vmatprep.subr.bf16.mxu0 %v1088
    %1499 = vmatpush1.bf16.msra.mxu0 %v1087
    %1500 = vmatprep.subr.bf16.mxu0 %v1092
    %1501 = vmatpush1.bf16.msra.mxu0 %v1091
    %1502 = vmatprep.subr.bf16.mxu0 %v1096
    %1503 = vmatpush1.bf16.msra.mxu0 %v1095
    %1504 = vmatprep.subr.bf16.mxu0 %v1100
    %1505 = vmatpush1.bf16.msra.mxu0 %v1099
    %1506 = vmatprep.subr.bf16.mxu0 %v1104
    %1507 = vmatpush1.bf16.msra.mxu0 %v1103
    %1508 = vmatprep.subr.bf16.mxu0 %v1108
    %1509 = vmatpush1.bf16.msra.mxu0 %v1107
    %1510 = vmatprep.subr.bf16.mxu0 %v1112
    %1511 = vmatpush1.bf16.msra.mxu0 %v1111
    %1512 = vmatprep.subr.bf16.mxu0 %v1116
    %1513 = vmatpush1.bf16.msra.mxu0 %v1115
    %1514 = vmatprep.subr.bf16.mxu0 %v1120
    %1515 = vmatpush1.bf16.msra.mxu0 %v1119
    %1516 = vmatprep.subr.bf16.mxu0 %v1124
    %1517 = vmatpush1.bf16.msra.mxu0 %v1123
    %1518 = vmatprep.subr.bf16.mxu0 %v1128
    %1519 = vmatpush1.bf16.msra.mxu0 %v1127
    %1520 = vmatprep.subr.bf16.mxu0 %v1132
    %1521 = vmatpush1.bf16.msra.mxu0 %v1131
    %1522 = vmatprep.subr.bf16.mxu0 %v1136
    %1523 = vmatpush1.bf16.msra.mxu0 %v1135
    %1524 = vmatprep.mubr.bf16.mxu0 %v214
    %1525 = vmatmul.mubr.bf16.gmra.mrb[0].mxu0 %v213
    %v1526 = vpop.f32.mrb[0].mxu0
    %v1527 = vadd.f32 %v470, %v1526
    %v1528 = vpop.f32.mrb[0].mxu0
    %v1529 = vadd.f32 %v474, %v1528
    %v1530 = vpop.f32.mrb[0].mxu0
    %v1531 = vadd.f32 %v470, %v1530
    %v1532 = vpop.f32.mrb[0].mxu0
    %v1533 = vadd.f32 %v474, %v1532
    %1534 = vmatprep.mubr.bf16.mxu0 %v221
    %1535 = vmatmul.mubr.bf16.gmra.mrb[0].mxu0 %v220
    %v1536 = vpop.f32.mrb[0].mxu0
    %v1537 = vadd.f32 %v470, %v1536
    %v1538 = vpop.f32.mrb[0].mxu0
    %v1539 = vadd.f32 %v474, %v1538
    %v1540 = vpop.f32.mrb[0].mxu0
    %v1541 = vadd.f32 %v470, %v1540
    %v1542 = vpop.f32.mrb[0].mxu0
    %v1543 = vadd.f32 %v474, %v1542
    %1544 = vmatprep.mubr.bf16.mxu0 %v228
    %1545 = vmatmul.mubr.bf16.gmra.mrb[0].mxu0 %v227
    %v1546 = vpop.f32.mrb[0].mxu0
    %v1547 = vadd.f32 %v470, %v1546
    %v1548 = vpop.f32.mrb[0].mxu0
    %v1549 = vadd.f32 %v474, %v1548
    %v1550 = vpop.f32.mrb[0].mxu0
    %v1551 = vadd.f32 %v470, %v1550
    %v1552 = vpop.f32.mrb[0].mxu0
    %v1553 = vadd.f32 %v474, %v1552
    %1554 = vmatprep.mubr.bf16.mxu0 %v235
    %1555 = vmatmul.mubr.bf16.gmra.mrb[0].mxu0 %v234
    %v1556 = vpop.f32.mrb[0].mxu0
    %v1557 = vadd.f32 %v470, %v1556
    %v1558 = vpop.f32.mrb[0].mxu0
    %v1559 = vadd.f32 %v474, %v1558
    %v1560 = vpop.f32.mrb[0].mxu0
    %v1561 = vadd.f32 %v470, %v1560
    %v1562 = vpop.f32.mrb[0].mxu0
    %v1563 = vadd.f32 %v474, %v1562
    %1564 = vmatprep.mubr.bf16.mxu0 %v242
    %1565 = vmatmul.mubr.bf16.gmra.mrb[0].mxu0 %v241
    %v1566 = vpop.f32.mrb[0].mxu0
    %v1567 = vadd.f32 %v470, %v1566
    %v1568 = vpop.f32.mrb[0].mxu0
    %v1569 = vadd.f32 %v474, %v1568
    %v1570 = vpop.f32.mrb[0].mxu0
    %v1571 = vadd.f32 %v470, %v1570
    %v1572 = vpop.f32.mrb[0].mxu0
    %v1573 = vadd.f32 %v474, %v1572
    %1574 = vmatprep.mubr.bf16.mxu0 %v249
    %1575 = vmatmul.mubr.bf16.gmra.mrb[0].mxu0 %v248
    %v1576 = vpop.f32.mrb[0].mxu0
    %v1577 = vadd.f32 %v470, %v1576
    %v1578 = vpop.f32.mrb[0].mxu0
    %v1579 = vadd.f32 %v474, %v1578
    %v1580 = vpop.f32.mrb[0].mxu0
    %v1581 = vadd.f32 %v470, %v1580
    %v1582 = vpop.f32.mrb[0].mxu0
    %v1583 = vadd.f32 %v474, %v1582
    %1584 = vmatprep.mubr.bf16.mxu0 %v256
    %1585 = vmatmul.mubr.bf16.gmra.mrb[0].mxu0 %v255
    %v1586 = vpop.f32.mrb[0].mxu0
    %v1587 = vadd.f32 %v470, %v1586
    %v1588 = vpop.f32.mrb[0].mxu0
    %v1589 = vadd.f32 %v474, %v1588
    %v1590 = vpop.f32.mrb[0].mxu0
    %v1591 = vadd.f32 %v470, %v1590
    %v1592 = vpop.f32.mrb[0].mxu0
    %v1593 = vadd.f32 %v474, %v1592
    %1594 = vmatprep.mubr.bf16.mxu0 %v263
    %1595 = vmatmul.mubr.bf16.gmra.mrb[0].mxu0 %v262
    %v1596 = vpop.f32.mrb[0].mxu0
    %v1597 = vadd.f32 %v470, %v1596
    %v1598 = vpop.f32.mrb[0].mxu0
    %v1599 = vadd.f32 %v474, %v1598
    %v1600 = vpop.f32.mrb[0].mxu0
    %v1601 = vadd.f32 %v470, %v1600
    %v1602 = vpop.f32.mrb[0].mxu0
    %v1603 = vadd.f32 %v474, %v1602
    %1604 = vdwg.mxu0
    %1605 = vmatprep.subr.bf16.mxu0 %v1140
    %1606 = vmatpush1.bf16.msra.mxu0 %v1139
    %1607 = vmatprep.subr.bf16.mxu0 %v1144
    %1608 = vmatpush1.bf16.msra.mxu0 %v1143
    %1609 = vmatprep.subr.bf16.mxu0 %v1148
    %1610 = vmatpush1.bf16.msra.mxu0 %v1147
    %1611 = vmatprep.subr.bf16.mxu0 %v1152
    %1612 = vmatpush1.bf16.msra.mxu0 %v1151
    %1613 = vmatprep.subr.bf16.mxu0 %v1156
    %1614 = vmatpush1.bf16.msra.mxu0 %v1155
    %1615 = vmatprep.subr.bf16.mxu0 %v1160
    %1616 = vmatpush1.bf16.msra.mxu0 %v1159
    %1617 = vmatprep.subr.bf16.mxu0 %v1164
    %1618 = vmatpush1.bf16.msra.mxu0 %v1163
    %1619 = vmatprep.subr.bf16.mxu0 %v1168
    %1620 = vmatpush1.bf16.msra.mxu0 %v1167
    %1621 = vmatprep.subr.bf16.mxu0 %v1172
    %1622 = vmatpush1.bf16.msra.mxu0 %v1171
    %1623 = vmatprep.subr.bf16.mxu0 %v1176
    %1624 = vmatpush1.bf16.msra.mxu0 %v1175
    %1625 = vmatprep.subr.bf16.mxu0 %v1180
    %1626 = vmatpush1.bf16.msra.mxu0 %v1179
    %1627 = vmatprep.subr.bf16.mxu0 %v1184
    %1628 = vmatpush1.bf16.msra.mxu0 %v1183
    %1629 = vmatprep.subr.bf16.mxu0 %v1188
    %1630 = vmatpush1.bf16.msra.mxu0 %v1187
    %1631 = vmatprep.subr.bf16.mxu0 %v1192
    %1632 = vmatpush1.bf16.msra.mxu0 %v1191
    %1633 = vmatprep.subr.bf16.mxu0 %v1196
    %1634 = vmatpush1.bf16.msra.mxu0 %v1195
    %1635 = vmatprep.subr.bf16.mxu0 %v1200
    %1636 = vmatpush1.bf16.msra.mxu0 %v1199
    %1637 = vmatprep.mubr.bf16.mxu0 %v216
    %1638 = vmatmul.mubr.bf16.gmra.mrb[0].mxu0 %v215
    %v1639 = vpop.f32.mrb[0].mxu0
    %v1640 = vadd.f32 %v1527, %v1639
    %v1641 = vpop.f32.mrb[0].mxu0
    %v1642 = vadd.f32 %v1529, %v1641
    %v1643 = vpop.f32.mrb[0].mxu0
    %v1644 = vadd.f32 %v1531, %v1643
    %v1645 = vpop.f32.mrb[0].mxu0
    %v1646 = vadd.f32 %v1533, %v1645
    %1647 = vmatprep.mubr.bf16.mxu0 %v223
    %1648 = vmatmul.mubr.bf16.gmra.mrb[0].mxu0 %v222
    %v1649 = vpop.f32.mrb[0].mxu0
    %v1650 = vadd.f32 %v1537, %v1649
    %v1651 = vpop.f32.mrb[0].mxu0
    %v1652 = vadd.f32 %v1539, %v1651
    %v1653 = vpop.f32.mrb[0].mxu0
    %v1654 = vadd.f32 %v1541, %v1653
    %v1655 = vpop.f32.mrb[0].mxu0
    %v1656 = vadd.f32 %v1543, %v1655
    %1657 = vmatprep.mubr.bf16.mxu0 %v230
    %1658 = vmatmul.mubr.bf16.gmra.mrb[0].mxu0 %v229
    %v1659 = vpop.f32.mrb[0].mxu0
    %v1660 = vadd.f32 %v1547, %v1659
    %v1661 = vpop.f32.mrb[0].mxu0
    %v1662 = vadd.f32 %v1549, %v1661
    %v1663 = vpop.f32.mrb[0].mxu0
    %v1664 = vadd.f32 %v1551, %v1663
    %v1665 = vpop.f32.mrb[0].mxu0
    %v1666 = vadd.f32 %v1553, %v1665
    %1667 = vmatprep.mubr.bf16.mxu0 %v237
    %1668 = vmatmul.mubr.bf16.gmra.mrb[0].mxu0 %v236
    %v1669 = vpop.f32.mrb[0].mxu0
    %v1670 = vadd.f32 %v1557, %v1669
    %v1671 = vpop.f32.mrb[0].mxu0
    %v1672 = vadd.f32 %v1559, %v1671
    %v1673 = vpop.f32.mrb[0].mxu0
    %v1674 = vadd.f32 %v1561, %v1673
    %v1675 = vpop.f32.mrb[0].mxu0
    %v1676 = vadd.f32 %v1563, %v1675
    %1677 = vmatprep.mubr.bf16.mxu0 %v244
    %1678 = vmatmul.mubr.bf16.gmra.mrb[0].mxu0 %v243
    %v1679 = vpop.f32.mrb[0].mxu0
    %v1680 = vadd.f32 %v1567, %v1679
    %v1681 = vpop.f32.mrb[0].mxu0
    %v1682 = vadd.f32 %v1569, %v1681
    %v1683 = vpop.f32.mrb[0].mxu0
    %v1684 = vadd.f32 %v1571, %v1683
    %v1685 = vpop.f32.mrb[0].mxu0
    %v1686 = vadd.f32 %v1573, %v1685
    %1687 = vmatprep.mubr.bf16.mxu0 %v251
    %1688 = vmatmul.mubr.bf16.gmra.mrb[0].mxu0 %v250
    %v1689 = vpop.f32.mrb[0].mxu0
    %v1690 = vadd.f32 %v1577, %v1689
    %v1691 = vpop.f32.mrb[0].mxu0
    %v1692 = vadd.f32 %v1579, %v1691
    %v1693 = vpop.f32.mrb[0].mxu0
    %v1694 = vadd.f32 %v1581, %v1693
    %v1695 = vpop.f32.mrb[0].mxu0
    %v1696 = vadd.f32 %v1583, %v1695
    %1697 = vmatprep.mubr.bf16.mxu0 %v258
    %1698 = vmatmul.mubr.bf16.gmra.mrb[0].mxu0 %v257
    %v1699 = vpop.f32.mrb[0].mxu0
    %v1700 = vadd.f32 %v1587, %v1699
    %v1701 = vpop.f32.mrb[0].mxu0
    %v1702 = vadd.f32 %v1589, %v1701
    %v1703 = vpop.f32.mrb[0].mxu0
    %v1704 = vadd.f32 %v1591, %v1703
    %v1705 = vpop.f32.mrb[0].mxu0
    %v1706 = vadd.f32 %v1593, %v1705
    %1707 = vmatprep.mubr.bf16.mxu0 %v265
    %1708 = vmatmul.mubr.bf16.gmra.mrb[0].mxu0 %v264
    %v1709 = vpop.f32.mrb[0].mxu0
    %v1710 = vadd.f32 %v1597, %v1709
    %v1711 = vpop.f32.mrb[0].mxu0
    %v1712 = vadd.f32 %v1599, %v1711
    %v1713 = vpop.f32.mrb[0].mxu0
    %v1714 = vadd.f32 %v1601, %v1713
    %v1715 = vpop.f32.mrb[0].mxu0
    %v1716 = vadd.f32 %v1603, %v1715
    %1717 = vdwg.mxu0
    %1718 = vmatprep.subr.bf16.mxu0 %v1204
    %1719 = vmatpush1.bf16.msra.mxu0 %v1203
    %1720 = vmatprep.subr.bf16.mxu0 %v1208
    %1721 = vmatpush1.bf16.msra.mxu0 %v1207
    %1722 = vmatprep.subr.bf16.mxu0 %v1212
    %1723 = vmatpush1.bf16.msra.mxu0 %v1211
    %1724 = vmatprep.subr.bf16.mxu0 %v1216
    %1725 = vmatpush1.bf16.msra.mxu0 %v1215
    %1726 = vmatprep.subr.bf16.mxu0 %v1220
    %1727 = vmatpush1.bf16.msra.mxu0 %v1219
    %1728 = vmatprep.subr.bf16.mxu0 %v1224
    %1729 = vmatpush1.bf16.msra.mxu0 %v1223
    %1730 = vmatprep.subr.bf16.mxu0 %v1228
    %1731 = vmatpush1.bf16.msra.mxu0 %v1227
    %1732 = vmatprep.subr.bf16.mxu0 %v1232
    %1733 = vmatpush1.bf16.msra.mxu0 %v1231
    %1734 = vmatprep.subr.bf16.mxu0 %v1236
    %1735 = vmatpush1.bf16.msra.mxu0 %v1235
    %1736 = vmatprep.subr.bf16.mxu0 %v1240
    %1737 = vmatpush1.bf16.msra.mxu0 %v1239
    %1738 = vmatprep.subr.bf16.mxu0 %v1244
    %1739 = vmatpush1.bf16.msra.mxu0 %v1243
    %1740 = vmatprep.subr.bf16.mxu0 %v1248
    %1741 = vmatpush1.bf16.msra.mxu0 %v1247
    %1742 = vmatprep.subr.bf16.mxu0 %v1252
    %1743 = vmatpush1.bf16.msra.mxu0 %v1251
    %1744 = vmatprep.subr.bf16.mxu0 %v1256
    %1745 = vmatpush1.bf16.msra.mxu0 %v1255
    %1746 = vmatprep.subr.bf16.mxu0 %v1260
    %1747 = vmatpush1.bf16.msra.mxu0 %v1259
    %1748 = vmatprep.subr.bf16.mxu0 %v1264
    %1749 = vmatpush1.bf16.msra.mxu0 %v1263
    %1750 = vmatprep.mubr.bf16.mxu0 %v218
    %1751 = vmatmul.mubr.bf16.gmra.mrb[0].mxu0 %v217
    %v1752 = vpop.f32.mrb[0].mxu0
    %v1753 = vadd.f32 %v1640, %v1752
    %v1754 = vpop.f32.mrb[0].mxu0
    %v1755 = vadd.f32 %v1642, %v1754
    %v1756 = vpop.f32.mrb[0].mxu0
    %v1757 = vadd.f32 %v1644, %v1756
    %v1758 = vpop.f32.mrb[0].mxu0
    %v1759 = vadd.f32 %v1646, %v1758
    %1760 = vmatprep.mubr.bf16.mxu0 %v225
    %1761 = vmatmul.mubr.bf16.gmra.mrb[0].mxu0 %v224
    %v1762 = vpop.f32.mrb[0].mxu0
    %v1763 = vadd.f32 %v1650, %v1762
    %v1764 = vpop.f32.mrb[0].mxu0
    %v1765 = vadd.f32 %v1652, %v1764
    %v1766 = vpop.f32.mrb[0].mxu0
    %v1767 = vadd.f32 %v1654, %v1766
    %v1768 = vpop.f32.mrb[0].mxu0
    %v1769 = vadd.f32 %v1656, %v1768
    %1770 = vmatprep.mubr.bf16.mxu0 %v232
    %1771 = vmatmul.mubr.bf16.gmra.mrb[0].mxu0 %v231
    %v1772 = vpop.f32.mrb[0].mxu0
    %v1773 = vadd.f32 %v1660, %v1772
    %v1774 = vpop.f32.mrb[0].mxu0
    %v1775 = vadd.f32 %v1662, %v1774
    %v1776 = vpop.f32.mrb[0].mxu0
    %v1777 = vadd.f32 %v1664, %v1776
    %v1778 = vpop.f32.mrb[0].mxu0
    %v1779 = vadd.f32 %v1666, %v1778
    %1780 = vmatprep.mubr.bf16.mxu0 %v239
    %1781 = vmatmul.mubr.bf16.gmra.mrb[0].mxu0 %v238
    %v1782 = vpop.f32.mrb[0].mxu0
    %v1783 = vadd.f32 %v1670, %v1782
    %v1784 = vpop.f32.mrb[0].mxu0
    %v1785 = vadd.f32 %v1672, %v1784
    %v1786 = vpop.f32.mrb[0].mxu0
    %v1787 = vadd.f32 %v1674, %v1786
    %v1788 = vpop.f32.mrb[0].mxu0
    %v1789 = vadd.f32 %v1676, %v1788
    %1790 = vmatprep.mubr.bf16.mxu0 %v246
    %1791 = vmatmul.mubr.bf16.gmra.mrb[0].mxu0 %v245
    %v1792 = vpop.f32.mrb[0].mxu0
    %v1793 = vadd.f32 %v1680, %v1792
    %v1794 = vpop.f32.mrb[0].mxu0
    %v1795 = vadd.f32 %v1682, %v1794
    %v1796 = vpop.f32.mrb[0].mxu0
    %v1797 = vadd.f32 %v1684, %v1796
    %v1798 = vpop.f32.mrb[0].mxu0
    %v1799 = vadd.f32 %v1686, %v1798
    %1800 = vmatprep.mubr.bf16.mxu0 %v253
    %1801 = vmatmul.mubr.bf16.gmra.mrb[0].mxu0 %v252
    %v1802 = vpop.f32.mrb[0].mxu0
    %v1803 = vadd.f32 %v1690, %v1802
    %v1804 = vpop.f32.mrb[0].mxu0
    %v1805 = vadd.f32 %v1692, %v1804
    %v1806 = vpop.f32.mrb[0].mxu0
    %v1807 = vadd.f32 %v1694, %v1806
    %v1808 = vpop.f32.mrb[0].mxu0
    %v1809 = vadd.f32 %v1696, %v1808
    %1810 = vmatprep.mubr.bf16.mxu0 %v260
    %1811 = vmatmul.mubr.bf16.gmra.mrb[0].mxu0 %v259
    %v1812 = vpop.f32.mrb[0].mxu0
    %v1813 = vadd.f32 %v1700, %v1812
    %v1814 = vpop.f32.mrb[0].mxu0
    %v1815 = vadd.f32 %v1702, %v1814
    %v1816 = vpop.f32.mrb[0].mxu0
    %v1817 = vadd.f32 %v1704, %v1816
    %v1818 = vpop.f32.mrb[0].mxu0
    %v1819 = vadd.f32 %v1706, %v1818
    %1820 = vmatprep.mubr.bf16.mxu0 %v267
    %1821 = vmatmul.mubr.bf16.gmra.mrb[0].mxu0 %v266
    %v1822 = vpop.f32.mrb[0].mxu0
    %v1823 = vadd.f32 %v1710, %v1822
    %v1824 = vpop.f32.mrb[0].mxu0
    %v1825 = vadd.f32 %v1712, %v1824
    %v1826 = vpop.f32.mrb[0].mxu0
    %v1827 = vadd.f32 %v1714, %v1826
    %v1828 = vpop.f32.mrb[0].mxu0
    %v1829 = vadd.f32 %v1716, %v1828
    %1830 = vdwg.mxu0
    %1831 = vmatprep.subr.bf16.mxu0 %v1268
    %1832 = vmatpush1.bf16.msra.mxu0 %v1267
    %1833 = vmatprep.subr.bf16.mxu0 0
    %1834 = vmatpush1.bf16.msra.mxu0 0
    %1835 = vmatprep.subr.bf16.mxu0 0
    %1836 = vmatpush1.bf16.msra.mxu0 0
    %1837 = vmatprep.subr.bf16.mxu0 0
    %1838 = vmatpush1.bf16.msra.mxu0 0
    %1839 = vmatprep.subr.bf16.mxu0 0
    %1840 = vmatpush1.bf16.msra.mxu0 0
    %1841 = vmatprep.subr.bf16.mxu0 0
    %1842 = vmatpush1.bf16.msra.mxu0 0
    %1843 = vmatprep.subr.bf16.mxu0 0
    %1844 = vmatpush1.bf16.msra.mxu0 0
    %1845 = vmatprep.subr.bf16.mxu0 0
    %1846 = vmatpush1.bf16.msra.mxu0 0
    %1847 = vmatprep.subr.bf16.mxu0 0
    %1848 = vmatpush1.bf16.msra.mxu0 0
    %1849 = vmatprep.subr.bf16.mxu0 0
    %1850 = vmatpush1.bf16.msra.mxu0 0
    %1851 = vmatprep.subr.bf16.mxu0 0
    %1852 = vmatpush1.bf16.msra.mxu0 0
    %1853 = vmatprep.subr.bf16.mxu0 0
    %1854 = vmatpush1.bf16.msra.mxu0 0
    %1855 = vmatprep.subr.bf16.mxu0 0
    %1856 = vmatpush1.bf16.msra.mxu0 0
    %1857 = vmatprep.subr.bf16.mxu0 0
    %1858 = vmatpush1.bf16.msra.mxu0 0
    %1859 = vmatprep.subr.bf16.mxu0 0
    %1860 = vmatpush1.bf16.msra.mxu0 0
    %1861 = vmatprep.subr.bf16.mxu0 0
    %1862 = vmatpush1.bf16.msra.mxu0 0
    %1863 = vmatprep.mubr.bf16.mxu0 0
    %1864 = vmatmul.mubr.bf16.gmra.mrb[0].mxu0 %v1469
    %v1865 = vpop.f32.mrb[0].mxu0
    %v1866 = vadd.f32 %v1753, %v1865
    %v1867 = vpop.f32.mrb[0].mxu0
    %v1868 = vadd.f32 %v1755, %v1867
    %v1869 = vpop.f32.mrb[0].mxu0
    %v1870 = vadd.f32 %v1757, %v1869
    %v1871 = vpop.f32.mrb[0].mxu0
    %v1872 = vadd.f32 %v1759, %v1871
    %1873 = vmatprep.mubr.bf16.mxu0 0
    %1874 = vmatmul.mubr.bf16.gmra.mrb[0].mxu0 %v1472
    %v1875 = vpop.f32.mrb[0].mxu0
    %v1876 = vadd.f32 %v1763, %v1875
    %v1877 = vpop.f32.mrb[0].mxu0
    %v1878 = vadd.f32 %v1765, %v1877
    %v1879 = vpop.f32.mrb[0].mxu0
    %v1880 = vadd.f32 %v1767, %v1879
    %v1881 = vpop.f32.mrb[0].mxu0
    %v1882 = vadd.f32 %v1769, %v1881
    %1883 = vmatprep.mubr.bf16.mxu0 0
    %1884 = vmatmul.mubr.bf16.gmra.mrb[0].mxu0 %v1475
    %v1885 = vpop.f32.mrb[0].mxu0
    %v1886 = vadd.f32 %v1773, %v1885
    %v1887 = vpop.f32.mrb[0].mxu0
    %v1888 = vadd.f32 %v1775, %v1887
    %v1889 = vpop.f32.mrb[0].mxu0
    %v1890 = vadd.f32 %v1777, %v1889
    %v1891 = vpop.f32.mrb[0].mxu0
    %v1892 = vadd.f32 %v1779, %v1891
    %1893 = vmatprep.mubr.bf16.mxu0 0
    %1894 = vmatmul.mubr.bf16.gmra.mrb[0].mxu0 %v1478
    %v1895 = vpop.f32.mrb[0].mxu0
    %v1896 = vadd.f32 %v1783, %v1895
    %v1897 = vpop.f32.mrb[0].mxu0
    %v1898 = vadd.f32 %v1785, %v1897
    %v1899 = vpop.f32.mrb[0].mxu0
    %v1900 = vadd.f32 %v1787, %v1899
    %v1901 = vpop.f32.mrb[0].mxu0
    %v1902 = vadd.f32 %v1789, %v1901
    %1903 = vmatprep.mubr.bf16.mxu0 0
    %1904 = vmatmul.mubr.bf16.gmra.mrb[0].mxu0 %v1481
    %v1905 = vpop.f32.mrb[0].mxu0
    %v1906 = vadd.f32 %v1793, %v1905
    %v1907 = vpop.f32.mrb[0].mxu0
    %v1908 = vadd.f32 %v1795, %v1907
    %v1909 = vpop.f32.mrb[0].mxu0
    %v1910 = vadd.f32 %v1797, %v1909
    %v1911 = vpop.f32.mrb[0].mxu0
    %v1912 = vadd.f32 %v1799, %v1911
    %1913 = vmatprep.mubr.bf16.mxu0 0
    %1914 = vmatmul.mubr.bf16.gmra.mrb[0].mxu0 %v1484
    %v1915 = vpop.f32.mrb[0].mxu0
    %v1916 = vadd.f32 %v1803, %v1915
    %v1917 = vpop.f32.mrb[0].mxu0
    %v1918 = vadd.f32 %v1805, %v1917
    %v1919 = vpop.f32.mrb[0].mxu0
    %v1920 = vadd.f32 %v1807, %v1919
    %v1921 = vpop.f32.mrb[0].mxu0
    %v1922 = vadd.f32 %v1809, %v1921
    %1923 = vmatprep.mubr.bf16.mxu0 0
    %1924 = vmatmul.mubr.bf16.gmra.mrb[0].mxu0 %v1487
    %v1925 = vpop.f32.mrb[0].mxu0
    %v1926 = vadd.f32 %v1813, %v1925
    %v1927 = vpop.f32.mrb[0].mxu0
    %v1928 = vadd.f32 %v1815, %v1927
    %v1929 = vpop.f32.mrb[0].mxu0
    %v1930 = vadd.f32 %v1817, %v1929
    %v1931 = vpop.f32.mrb[0].mxu0
    %v1932 = vadd.f32 %v1819, %v1931
    %1933 = vmatprep.mubr.bf16.mxu0 0
    %1934 = vmatmul.mubr.bf16.gmra.mrb[0].mxu0 %v1490
    %v1935 = vpop.f32.mrb[0].mxu0
    %v1936 = vadd.f32 %v1823, %v1935
    %v1937 = vpop.f32.mrb[0].mxu0
    %v1938 = vadd.f32 %v1825, %v1937
    %v1939 = vpop.f32.mrb[0].mxu0
    %v1940 = vadd.f32 %v1827, %v1939
    %v1941 = vpop.f32.mrb[0].mxu0
    %v1942 = vadd.f32 %v1829, %v1941
    %1943 = vdwg.mxu0
    %1944 = vmatprep.subr.bf16.mxu0 %v1078
    %1945 = vmatpush1.bf16.msra.mxu0 %v1077
    %1946 = vmatprep.subr.bf16.mxu0 %v1082
    %1947 = vmatpush1.bf16.msra.mxu0 %v1081
    %1948 = vmatprep.subr.bf16.mxu0 %v1086
    %1949 = vmatpush1.bf16.msra.mxu0 %v1085
    %1950 = vmatprep.subr.bf16.mxu0 %v1090
    %1951 = vmatpush1.bf16.msra.mxu0 %v1089
    %1952 = vmatprep.subr.bf16.mxu0 %v1094
    %1953 = vmatpush1.bf16.msra.mxu0 %v1093
    %1954 = vmatprep.subr.bf16.mxu0 %v1098
    %1955 = vmatpush1.bf16.msra.mxu0 %v1097
    %1956 = vmatprep.subr.bf16.mxu0 %v1102
    %1957 = vmatpush1.bf16.msra.mxu0 %v1101
    %1958 = vmatprep.subr.bf16.mxu0 %v1106
    %1959 = vmatpush1.bf16.msra.mxu0 %v1105
    %1960 = vmatprep.subr.bf16.mxu0 %v1110
    %1961 = vmatpush1.bf16.msra.mxu0 %v1109
    %1962 = vmatprep.subr.bf16.mxu0 %v1114
    %1963 = vmatpush1.bf16.msra.mxu0 %v1113
    %1964 = vmatprep.subr.bf16.mxu0 %v1118
    %1965 = vmatpush1.bf16.msra.mxu0 %v1117
    %1966 = vmatprep.subr.bf16.mxu0 %v1122
    %1967 = vmatpush1.bf16.msra.mxu0 %v1121
    %1968 = vmatprep.subr.bf16.mxu0 %v1126
    %1969 = vmatpush1.bf16.msra.mxu0 %v1125
    %1970 = vmatprep.subr.bf16.mxu0 %v1130
    %1971 = vmatpush1.bf16.msra.mxu0 %v1129
    %1972 = vmatprep.subr.bf16.mxu0 %v1134
    %1973 = vmatpush1.bf16.msra.mxu0 %v1133
    %1974 = vmatprep.subr.bf16.mxu0 %v1138
    %1975 = vmatpush1.bf16.msra.mxu0 %v1137
    %1976 = vmatprep.mubr.bf16.mxu0 %v214
    %1977 = vmatmul.mubr.bf16.gmra.mrb[0].mxu0 %v213
    %v1978 = vpop.f32.mrb[0].mxu0
    %v1979 = vadd.f32 %v478, %v1978
    %v1980 = vpop.f32.mrb[0].mxu0
    %v1981 = vadd.f32 %v482, %v1980
    %v1982 = vpop.f32.mrb[0].mxu0
    %v1983 = vadd.f32 %v478, %v1982
    %v1984 = vpop.f32.mrb[0].mxu0
    %v1985 = vadd.f32 %v482, %v1984
    %1986 = vmatprep.mubr.bf16.mxu0 %v221
    %1987 = vmatmul.mubr.bf16.gmra.mrb[0].mxu0 %v220
    %v1988 = vpop.f32.mrb[0].mxu0
    %v1989 = vadd.f32 %v478, %v1988
    %v1990 = vpop.f32.mrb[0].mxu0
    %v1991 = vadd.f32 %v482, %v1990
    %v1992 = vpop.f32.mrb[0].mxu0
    %v1993 = vadd.f32 %v478, %v1992
    %v1994 = vpop.f32.mrb[0].mxu0
    %v1995 = vadd.f32 %v482, %v1994
    %1996 = vmatprep.mubr.bf16.mxu0 %v228
    %1997 = vmatmul.mubr.bf16.gmra.mrb[0].mxu0 %v227
    %v1998 = vpop.f32.mrb[0].mxu0
    %v1999 = vadd.f32 %v478, %v1998
    %v2000 = vpop.f32.mrb[0].mxu0
    %v2001 = vadd.f32 %v482, %v2000
    %v2002 = vpop.f32.mrb[0].mxu0
    %v2003 = vadd.f32 %v478, %v2002
    %v2004 = vpop.f32.mrb[0].mxu0
    %v2005 = vadd.f32 %v482, %v2004
    %2006 = vmatprep.mubr.bf16.mxu0 %v235
    %2007 = vmatmul.mubr.bf16.gmra.mrb[0].mxu0 %v234
    %v2008 = vpop.f32.mrb[0].mxu0
    %v2009 = vadd.f32 %v478, %v2008
    %v2010 = vpop.f32.mrb[0].mxu0
    %v2011 = vadd.f32 %v482, %v2010
    %v2012 = vpop.f32.mrb[0].mxu0
    %v2013 = vadd.f32 %v478, %v2012
    %v2014 = vpop.f32.mrb[0].mxu0
    %v2015 = vadd.f32 %v482, %v2014
    %2016 = vmatprep.mubr.bf16.mxu0 %v242
    %2017 = vmatmul.mubr.bf16.gmra.mrb[0].mxu0 %v241
    %v2018 = vpop.f32.mrb[0].mxu0
    %v2019 = vadd.f32 %v478, %v2018
    %v2020 = vpop.f32.mrb[0].mxu0
    %v2021 = vadd.f32 %v482, %v2020
    %v2022 = vpop.f32.mrb[0].mxu0
    %v2023 = vadd.f32 %v478, %v2022
    %v2024 = vpop.f32.mrb[0].mxu0
    %v2025 = vadd.f32 %v482, %v2024
    %2026 = vmatprep.mubr.bf16.mxu0 %v249
    %2027 = vmatmul.mubr.bf16.gmra.mrb[0].mxu0 %v248
    %v2028 = vpop.f32.mrb[0].mxu0
    %v2029 = vadd.f32 %v478, %v2028
    %v2030 = vpop.f32.mrb[0].mxu0
    %v2031 = vadd.f32 %v482, %v2030
    %v2032 = vpop.f32.mrb[0].mxu0
    %v2033 = vadd.f32 %v478, %v2032
    %v2034 = vpop.f32.mrb[0].mxu0
    %v2035 = vadd.f32 %v482, %v2034
    %2036 = vmatprep.mubr.bf16.mxu0 %v256
    %2037 = vmatmul.mubr.bf16.gmra.mrb[0].mxu0 %v255
    %v2038 = vpop.f32.mrb[0].mxu0
    %v2039 = vadd.f32 %v478, %v2038
    %v2040 = vpop.f32.mrb[0].mxu0
    %v2041 = vadd.f32 %v482, %v2040
    %v2042 = vpop.f32.mrb[0].mxu0
    %v2043 = vadd.f32 %v478, %v2042
    %v2044 = vpop.f32.mrb[0].mxu0
    %v2045 = vadd.f32 %v482, %v2044
    %2046 = vmatprep.mubr.bf16.mxu0 %v263
    %2047 = vmatmul.mubr.bf16.gmra.mrb[0].mxu0 %v262
    %v2048 = vpop.f32.mrb[0].mxu0
    %v2049 = vadd.f32 %v478, %v2048
    %v2050 = vpop.f32.mrb[0].mxu0
    %v2051 = vadd.f32 %v482, %v2050
    %v2052 = vpop.f32.mrb[0].mxu0
    %v2053 = vadd.f32 %v478, %v2052
    %v2054 = vpop.f32.mrb[0].mxu0
    %v2055 = vadd.f32 %v482, %v2054
    %2056 = vdwg.mxu0
    %2057 = vmatprep.subr.bf16.mxu0 %v1142
    %2058 = vmatpush1.bf16.msra.mxu0 %v1141
    %2059 = vmatprep.subr.bf16.mxu0 %v1146
    %2060 = vmatpush1.bf16.msra.mxu0 %v1145
    %2061 = vmatprep.subr.bf16.mxu0 %v1150
    %2062 = vmatpush1.bf16.msra.mxu0 %v1149
    %2063 = vmatprep.subr.bf16.mxu0 %v1154
    %2064 = vmatpush1.bf16.msra.mxu0 %v1153
    %2065 = vmatprep.subr.bf16.mxu0 %v1158
    %2066 = vmatpush1.bf16.msra.mxu0 %v1157
    %2067 = vmatprep.subr.bf16.mxu0 %v1162
    %2068 = vmatpush1.bf16.msra.mxu0 %v1161
    %2069 = vmatprep.subr.bf16.mxu0 %v1166
    %2070 = vmatpush1.bf16.msra.mxu0 %v1165
    %2071 = vmatprep.subr.bf16.mxu0 %v1170
    %2072 = vmatpush1.bf16.msra.mxu0 %v1169
    %2073 = vmatprep.subr.bf16.mxu0 %v1174
    %2074 = vmatpush1.bf16.msra.mxu0 %v1173
    %2075 = vmatprep.subr.bf16.mxu0 %v1178
    %2076 = vmatpush1.bf16.msra.mxu0 %v1177
    %2077 = vmatprep.subr.bf16.mxu0 %v1182
    %2078 = vmatpush1.bf16.msra.mxu0 %v1181
    %2079 = vmatprep.subr.bf16.mxu0 %v1186
    %2080 = vmatpush1.bf16.msra.mxu0 %v1185
    %2081 = vmatprep.subr.bf16.mxu0 %v1190
    %2082 = vmatpush1.bf16.msra.mxu0 %v1189
    %2083 = vmatprep.subr.bf16.mxu0 %v1194
    %2084 = vmatpush1.bf16.msra.mxu0 %v1193
    %2085 = vmatprep.subr.bf16.mxu0 %v1198
    %2086 = vmatpush1.bf16.msra.mxu0 %v1197
    %2087 = vmatprep.subr.bf16.mxu0 %v1202
    %2088 = vmatpush1.bf16.msra.mxu0 %v1201
    %2089 = vmatprep.mubr.bf16.mxu0 %v216
    %2090 = vmatmul.mubr.bf16.gmra.mrb[0].mxu0 %v215
    %v2091 = vpop.f32.mrb[0].mxu0
    %v2092 = vadd.f32 %v1979, %v2091
    %v2093 = vpop.f32.mrb[0].mxu0
    %v2094 = vadd.f32 %v1981, %v2093
    %v2095 = vpop.f32.mrb[0].mxu0
    %v2096 = vadd.f32 %v1983, %v2095
    %v2097 = vpop.f32.mrb[0].mxu0
    %v2098 = vadd.f32 %v1985, %v2097
    %2099 = vmatprep.mubr.bf16.mxu0 %v223
    %2100 = vmatmul.mubr.bf16.gmra.mrb[0].mxu0 %v222
    %v2101 = vpop.f32.mrb[0].mxu0
    %v2102 = vadd.f32 %v1989, %v2101
    %v2103 = vpop.f32.mrb[0].mxu0
    %v2104 = vadd.f32 %v1991, %v2103
    %v2105 = vpop.f32.mrb[0].mxu0
    %v2106 = vadd.f32 %v1993, %v2105
    %v2107 = vpop.f32.mrb[0].mxu0
    %v2108 = vadd.f32 %v1995, %v2107
    %2109 = vmatprep.mubr.bf16.mxu0 %v230
    %2110 = vmatmul.mubr.bf16.gmra.mrb[0].mxu0 %v229
    %v2111 = vpop.f32.mrb[0].mxu0
    %v2112 = vadd.f32 %v1999, %v2111
    %v2113 = vpop.f32.mrb[0].mxu0
    %v2114 = vadd.f32 %v2001, %v2113
    %v2115 = vpop.f32.mrb[0].mxu0
    %v2116 = vadd.f32 %v2003, %v2115
    %v2117 = vpop.f32.mrb[0].mxu0
    %v2118 = vadd.f32 %v2005, %v2117
    %2119 = vmatprep.mubr.bf16.mxu0 %v237
    %2120 = vmatmul.mubr.bf16.gmra.mrb[0].mxu0 %v236
    %v2121 = vpop.f32.mrb[0].mxu0
    %v2122 = vadd.f32 %v2009, %v2121
    %v2123 = vpop.f32.mrb[0].mxu0
    %v2124 = vadd.f32 %v2011, %v2123
    %v2125 = vpop.f32.mrb[0].mxu0
    %v2126 = vadd.f32 %v2013, %v2125
    %v2127 = vpop.f32.mrb[0].mxu0
    %v2128 = vadd.f32 %v2015, %v2127
    %2129 = vmatprep.mubr.bf16.mxu0 %v244
    %2130 = vmatmul.mubr.bf16.gmra.mrb[0].mxu0 %v243
    %v2131 = vpop.f32.mrb[0].mxu0
    %v2132 = vadd.f32 %v2019, %v2131
    %v2133 = vpop.f32.mrb[0].mxu0
    %v2134 = vadd.f32 %v2021, %v2133
    %v2135 = vpop.f32.mrb[0].mxu0
    %v2136 = vadd.f32 %v2023, %v2135
    %v2137 = vpop.f32.mrb[0].mxu0
    %v2138 = vadd.f32 %v2025, %v2137
    %2139 = vmatprep.mubr.bf16.mxu0 %v251
    %2140 = vmatmul.mubr.bf16.gmra.mrb[0].mxu0 %v250
    %v2141 = vpop.f32.mrb[0].mxu0
    %v2142 = vadd.f32 %v2029, %v2141
    %v2143 = vpop.f32.mrb[0].mxu0
    %v2144 = vadd.f32 %v2031, %v2143
    %v2145 = vpop.f32.mrb[0].mxu0
    %v2146 = vadd.f32 %v2033, %v2145
    %v2147 = vpop.f32.mrb[0].mxu0
    %v2148 = vadd.f32 %v2035, %v2147
    %2149 = vmatprep.mubr.bf16.mxu0 %v258
    %2150 = vmatmul.mubr.bf16.gmra.mrb[0].mxu0 %v257
    %v2151 = vpop.f32.mrb[0].mxu0
    %v2152 = vadd.f32 %v2039, %v2151
    %v2153 = vpop.f32.mrb[0].mxu0
    %v2154 = vadd.f32 %v2041, %v2153
    %v2155 = vpop.f32.mrb[0].mxu0
    %v2156 = vadd.f32 %v2043, %v2155
    %v2157 = vpop.f32.mrb[0].mxu0
    %v2158 = vadd.f32 %v2045, %v2157
    %2159 = vmatprep.mubr.bf16.mxu0 %v265
    %2160 = vmatmul.mubr.bf16.gmra.mrb[0].mxu0 %v264
    %v2161 = vpop.f32.mrb[0].mxu0
    %v2162 = vadd.f32 %v2049, %v2161
    %v2163 = vpop.f32.mrb[0].mxu0
    %v2164 = vadd.f32 %v2051, %v2163
    %v2165 = vpop.f32.mrb[0].mxu0
    %v2166 = vadd.f32 %v2053, %v2165
    %v2167 = vpop.f32.mrb[0].mxu0
    %v2168 = vadd.f32 %v2055, %v2167
    %2169 = vdwg.mxu0
    %2170 = vmatprep.subr.bf16.mxu0 %v1206
    %2171 = vmatpush1.bf16.msra.mxu0 %v1205
    %2172 = vmatprep.subr.bf16.mxu0 %v1210
    %2173 = vmatpush1.bf16.msra.mxu0 %v1209
    %2174 = vmatprep.subr.bf16.mxu0 %v1214
    %2175 = vmatpush1.bf16.msra.mxu0 %v1213
    %2176 = vmatprep.subr.bf16.mxu0 %v1218
    %2177 = vmatpush1.bf16.msra.mxu0 %v1217
    %2178 = vmatprep.subr.bf16.mxu0 %v1222
    %2179 = vmatpush1.bf16.msra.mxu0 %v1221
    %2180 = vmatprep.subr.bf16.mxu0 %v1226
    %2181 = vmatpush1.bf16.msra.mxu0 %v1225
    %2182 = vmatprep.subr.bf16.mxu0 %v1230
    %2183 = vmatpush1.bf16.msra.mxu0 %v1229
    %2184 = vmatprep.subr.bf16.mxu0 %v1234
    %2185 = vmatpush1.bf16.msra.mxu0 %v1233
    %2186 = vmatprep.subr.bf16.mxu0 %v1238
    %2187 = vmatpush1.bf16.msra.mxu0 %v1237
    %2188 = vmatprep.subr.bf16.mxu0 %v1242
    %2189 = vmatpush1.bf16.msra.mxu0 %v1241
    %2190 = vmatprep.subr.bf16.mxu0 %v1246
    %2191 = vmatpush1.bf16.msra.mxu0 %v1245
    %2192 = vmatprep.subr.bf16.mxu0 %v1250
    %2193 = vmatpush1.bf16.msra.mxu0 %v1249
    %2194 = vmatprep.subr.bf16.mxu0 %v1254
    %2195 = vmatpush1.bf16.msra.mxu0 %v1253
    %2196 = vmatprep.subr.bf16.mxu0 %v1258
    %2197 = vmatpush1.bf16.msra.mxu0 %v1257
    %2198 = vmatprep.subr.bf16.mxu0 %v1262
    %2199 = vmatpush1.bf16.msra.mxu0 %v1261
    %2200 = vmatprep.subr.bf16.mxu0 %v1266
    %2201 = vmatpush1.bf16.msra.mxu0 %v1265
    %2202 = vmatprep.mubr.bf16.mxu0 %v218
    %2203 = vmatmul.mubr.bf16.gmra.mrb[0].mxu0 %v217
    %v2204 = vpop.f32.mrb[0].mxu0
    %v2205 = vadd.f32 %v2092, %v2204
    %v2206 = vpop.f32.mrb[0].mxu0
    %v2207 = vadd.f32 %v2094, %v2206
    %v2208 = vpop.f32.mrb[0].mxu0
    %v2209 = vadd.f32 %v2096, %v2208
    %v2210 = vpop.f32.mrb[0].mxu0
    %v2211 = vadd.f32 %v2098, %v2210
    %2212 = vmatprep.mubr.bf16.mxu0 %v225
    %2213 = vmatmul.mubr.bf16.gmra.mrb[0].mxu0 %v224
    %v2214 = vpop.f32.mrb[0].mxu0
    %v2215 = vadd.f32 %v2102, %v2214
    %v2216 = vpop.f32.mrb[0].mxu0
    %v2217 = vadd.f32 %v2104, %v2216
    %v2218 = vpop.f32.mrb[0].mxu0
    %v2219 = vadd.f32 %v2106, %v2218
    %v2220 = vpop.f32.mrb[0].mxu0
    %v2221 = vadd.f32 %v2108, %v2220
    %2222 = vmatprep.mubr.bf16.mxu0 %v232
    %2223 = vmatmul.mubr.bf16.gmra.mrb[0].mxu0 %v231
    %v2224 = vpop.f32.mrb[0].mxu0
    %v2225 = vadd.f32 %v2112, %v2224
    %v2226 = vpop.f32.mrb[0].mxu0
    %v2227 = vadd.f32 %v2114, %v2226
    %v2228 = vpop.f32.mrb[0].mxu0
    %v2229 = vadd.f32 %v2116, %v2228
    %v2230 = vpop.f32.mrb[0].mxu0
    %v2231 = vadd.f32 %v2118, %v2230
    %2232 = vmatprep.mubr.bf16.mxu0 %v239
    %2233 = vmatmul.mubr.bf16.gmra.mrb[0].mxu0 %v238
    %v2234 = vpop.f32.mrb[0].mxu0
    %v2235 = vadd.f32 %v2122, %v2234
    %v2236 = vpop.f32.mrb[0].mxu0
    %v2237 = vadd.f32 %v2124, %v2236
    %v2238 = vpop.f32.mrb[0].mxu0
    %v2239 = vadd.f32 %v2126, %v2238
    %v2240 = vpop.f32.mrb[0].mxu0
    %v2241 = vadd.f32 %v2128, %v2240
    %2242 = vmatprep.mubr.bf16.mxu0 %v246
    %2243 = vmatmul.mubr.bf16.gmra.mrb[0].mxu0 %v245
    %v2244 = vpop.f32.mrb[0].mxu0
    %v2245 = vadd.f32 %v2132, %v2244
    %v2246 = vpop.f32.mrb[0].mxu0
    %v2247 = vadd.f32 %v2134, %v2246
    %v2248 = vpop.f32.mrb[0].mxu0
    %v2249 = vadd.f32 %v2136, %v2248
    %v2250 = vpop.f32.mrb[0].mxu0
    %v2251 = vadd.f32 %v2138, %v2250
    %2252 = vmatprep.mubr.bf16.mxu0 %v253
    %2253 = vmatmul.mubr.bf16.gmra.mrb[0].mxu0 %v252
    %v2254 = vpop.f32.mrb[0].mxu0
    %v2255 = vadd.f32 %v2142, %v2254
    %v2256 = vpop.f32.mrb[0].mxu0
    %v2257 = vadd.f32 %v2144, %v2256
    %v2258 = vpop.f32.mrb[0].mxu0
    %v2259 = vadd.f32 %v2146, %v2258
    %v2260 = vpop.f32.mrb[0].mxu0
    %v2261 = vadd.f32 %v2148, %v2260
    %2262 = vmatprep.mubr.bf16.mxu0 %v260
    %2263 = vmatmul.mubr.bf16.gmra.mrb[0].mxu0 %v259
    %v2264 = vpop.f32.mrb[0].mxu0
    %v2265 = vadd.f32 %v2152, %v2264
    %v2266 = vpop.f32.mrb[0].mxu0
    %v2267 = vadd.f32 %v2154, %v2266
    %v2268 = vpop.f32.mrb[0].mxu0
    %v2269 = vadd.f32 %v2156, %v2268
    %v2270 = vpop.f32.mrb[0].mxu0
    %v2271 = vadd.f32 %v2158, %v2270
    %2272 = vmatprep.mubr.bf16.mxu0 %v267
    %2273 = vmatmul.mubr.bf16.gmra.mrb[0].mxu0 %v266
    %v2274 = vpop.f32.mrb[0].mxu0
    %v2275 = vadd.f32 %v2162, %v2274
    %v2276 = vpop.f32.mrb[0].mxu0
    %v2277 = vadd.f32 %v2164, %v2276
    %v2278 = vpop.f32.mrb[0].mxu0
    %v2279 = vadd.f32 %v2166, %v2278
    %v2280 = vpop.f32.mrb[0].mxu0
    %v2281 = vadd.f32 %v2168, %v2280
    %2282 = vdwg.mxu0
    %2283 = vmatprep.subr.bf16.mxu0 %v1270
    %2284 = vmatpush1.bf16.msra.mxu0 %v1269
    %2285 = vmatprep.subr.bf16.mxu0 0
    %2286 = vmatpush1.bf16.msra.mxu0 0
    %2287 = vmatprep.subr.bf16.mxu0 0
    %2288 = vmatpush1.bf16.msra.mxu0 0
    %2289 = vmatprep.subr.bf16.mxu0 0
    %2290 = vmatpush1.bf16.msra.mxu0 0
    %2291 = vmatprep.subr.bf16.mxu0 0
    %2292 = vmatpush1.bf16.msra.mxu0 0
    %2293 = vmatprep.subr.bf16.mxu0 0
    %2294 = vmatpush1.bf16.msra.mxu0 0
    %2295 = vmatprep.subr.bf16.mxu0 0
    %2296 = vmatpush1.bf16.msra.mxu0 0
    %2297 = vmatprep.subr.bf16.mxu0 0
    %2298 = vmatpush1.bf16.msra.mxu0 0
    %2299 = vmatprep.subr.bf16.mxu0 0
    %2300 = vmatpush1.bf16.msra.mxu0 0
    %2301 = vmatprep.subr.bf16.mxu0 0
    %2302 = vmatpush1.bf16.msra.mxu0 0
    %2303 = vmatprep.subr.bf16.mxu0 0
    %2304 = vmatpush1.bf16.msra.mxu0 0
    %2305 = vmatprep.subr.bf16.mxu0 0
    %2306 = vmatpush1.bf16.msra.mxu0 0
    %2307 = vmatprep.subr.bf16.mxu0 0
    %2308 = vmatpush1.bf16.msra.mxu0 0
    %2309 = vmatprep.subr.bf16.mxu0 0
    %2310 = vmatpush1.bf16.msra.mxu0 0
    %2311 = vmatprep.subr.bf16.mxu0 0
    %2312 = vmatpush1.bf16.msra.mxu0 0
    %2313 = vmatprep.subr.bf16.mxu0 0
    %2314 = vmatpush1.bf16.msra.mxu0 0
    %2315 = vmatprep.mubr.bf16.mxu0 0
    %2316 = vmatmul.mubr.bf16.gmra.mrb[0].mxu0 %v1469
    %v2317 = vpop.f32.mrb[0].mxu0
    %v2318 = vadd.f32 %v2205, %v2317
    %v2319 = vpop.f32.mrb[0].mxu0
    %v2320 = vadd.f32 %v2207, %v2319
    %v2321 = vpop.f32.mrb[0].mxu0
    %v2322 = vadd.f32 %v2209, %v2321
    %v2323 = vpop.f32.mrb[0].mxu0
    %v2324 = vadd.f32 %v2211, %v2323
    %2325 = vmatprep.mubr.bf16.mxu0 0
    %2326 = vmatmul.mubr.bf16.gmra.mrb[0].mxu0 %v1472
    %v2327 = vpop.f32.mrb[0].mxu0
    %v2328 = vadd.f32 %v2215, %v2327
    %v2329 = vpop.f32.mrb[0].mxu0
    %v2330 = vadd.f32 %v2217, %v2329
    %v2331 = vpop.f32.mrb[0].mxu0
    %v2332 = vadd.f32 %v2219, %v2331
    %v2333 = vpop.f32.mrb[0].mxu0
    %v2334 = vadd.f32 %v2221, %v2333
    %2335 = vmatprep.mubr.bf16.mxu0 0
    %2336 = vmatmul.mubr.bf16.gmra.mrb[0].mxu0 %v1475
    %v2337 = vpop.f32.mrb[0].mxu0
    %v2338 = vadd.f32 %v2225, %v2337
    %v2339 = vpop.f32.mrb[0].mxu0
    %v2340 = vadd.f32 %v2227, %v2339
    %v2341 = vpop.f32.mrb[0].mxu0
    %v2342 = vadd.f32 %v2229, %v2341
    %v2343 = vpop.f32.mrb[0].mxu0
    %v2344 = vadd.f32 %v2231, %v2343
    %2345 = vmatprep.mubr.bf16.mxu0 0
    %2346 = vmatmul.mubr.bf16.gmra.mrb[0].mxu0 %v1478
    %v2347 = vpop.f32.mrb[0].mxu0
    %v2348 = vadd.f32 %v2235, %v2347
    %v2349 = vpop.f32.mrb[0].mxu0
    %v2350 = vadd.f32 %v2237, %v2349
    %v2351 = vpop.f32.mrb[0].mxu0
    %v2352 = vadd.f32 %v2239, %v2351
    %v2353 = vpop.f32.mrb[0].mxu0
    %v2354 = vadd.f32 %v2241, %v2353
    %2355 = vmatprep.mubr.bf16.mxu0 0
    %2356 = vmatmul.mubr.bf16.gmra.mrb[0].mxu0 %v1481
    %v2357 = vpop.f32.mrb[0].mxu0
    %v2358 = vadd.f32 %v2245, %v2357
    %v2359 = vpop.f32.mrb[0].mxu0
    %v2360 = vadd.f32 %v2247, %v2359
    %v2361 = vpop.f32.mrb[0].mxu0
    %v2362 = vadd.f32 %v2249, %v2361
    %v2363 = vpop.f32.mrb[0].mxu0
    %v2364 = vadd.f32 %v2251, %v2363
    %2365 = vmatprep.mubr.bf16.mxu0 0
    %2366 = vmatmul.mubr.bf16.gmra.mrb[0].mxu0 %v1484
    %v2367 = vpop.f32.mrb[0].mxu0
    %v2368 = vadd.f32 %v2255, %v2367
    %v2369 = vpop.f32.mrb[0].mxu0
    %v2370 = vadd.f32 %v2257, %v2369
    %v2371 = vpop.f32.mrb[0].mxu0
    %v2372 = vadd.f32 %v2259, %v2371
    %v2373 = vpop.f32.mrb[0].mxu0
    %v2374 = vadd.f32 %v2261, %v2373
    %2375 = vmatprep.mubr.bf16.mxu0 0
    %2376 = vmatmul.mubr.bf16.gmra.mrb[0].mxu0 %v1487
    %v2377 = vpop.f32.mrb[0].mxu0
    %v2378 = vadd.f32 %v2265, %v2377
    %v2379 = vpop.f32.mrb[0].mxu0
    %v2380 = vadd.f32 %v2267, %v2379
    %v2381 = vpop.f32.mrb[0].mxu0
    %v2382 = vadd.f32 %v2269, %v2381
    %v2383 = vpop.f32.mrb[0].mxu0
    %v2384 = vadd.f32 %v2271, %v2383
    %2385 = vmatprep.mubr.bf16.mxu0 0
    %2386 = vmatmul.mubr.bf16.gmra.mrb[0].mxu0 %v1490
    %v2387 = vpop.f32.mrb[0].mxu0
    %v2388 = vadd.f32 %v2275, %v2387
    %v2389 = vpop.f32.mrb[0].mxu0
    %v2390 = vadd.f32 %v2277, %v2389
    %v2391 = vpop.f32.mrb[0].mxu0
    %v2392 = vadd.f32 %v2279, %v2391
    %v2393 = vpop.f32.mrb[0].mxu0
    %v2394 = vadd.f32 %v2281, %v2393
    %2395 = vdwg.mxu0
    %v2396 = vmax.f32 %v1866, 0.0
    %v2397 = vmax.f32 %v1868, 0.0
    %v2398 = vmax.f32 %v2318, 0.0
    %v2399 = vmax.f32 %v2320, 0.0
    %v2400 = vmax.f32 %v1870, 0.0
    %v2401 = vmax.f32 %v1872, 0.0
    %v2402 = vmax.f32 %v2322, 0.0
    %v2403 = vmax.f32 %v2324, 0.0
    %v2404 = vmax.f32 %v1876, 0.0
    %v2405 = vmax.f32 %v1878, 0.0
    %v2406 = vmax.f32 %v2328, 0.0
    %v2407 = vmax.f32 %v2330, 0.0
    %v2408 = vmax.f32 %v1880, 0.0
    %v2409 = vmax.f32 %v1882, 0.0
    %v2410 = vmax.f32 %v2332, 0.0
    %v2411 = vmax.f32 %v2334, 0.0
    %v2412 = vmax.f32 %v1886, 0.0
    %v2413 = vmax.f32 %v1888, 0.0
    %v2414 = vmax.f32 %v2338, 0.0
    %v2415 = vmax.f32 %v2340, 0.0
    %v2416 = vmax.f32 %v1890, 0.0
    %v2417 = vmax.f32 %v1892, 0.0
    %v2418 = vmax.f32 %v2342, 0.0
    %v2419 = vmax.f32 %v2344, 0.0
    %v2420 = vmax.f32 %v1896, 0.0
    %v2421 = vmax.f32 %v1898, 0.0
    %v2422 = vmax.f32 %v2348, 0.0
    %v2423 = vmax.f32 %v2350, 0.0
    %v2424 = vmax.f32 %v1900, 0.0
    %v2425 = vmax.f32 %v1902, 0.0
    %v2426 = vmax.f32 %v2352, 0.0
    %v2427 = vmax.f32 %v2354, 0.0
    %v2428 = vmax.f32 %v1906, 0.0
    %v2429 = vmax.f32 %v1908, 0.0
    %v2430 = vmax.f32 %v2358, 0.0
    %v2431 = vmax.f32 %v2360, 0.0
    %v2432 = vmax.f32 %v1910, 0.0
    %v2433 = vmax.f32 %v1912, 0.0
    %v2434 = vmax.f32 %v2362, 0.0
    %v2435 = vmax.f32 %v2364, 0.0
    %v2436 = vmax.f32 %v1916, 0.0
    %v2437 = vmax.f32 %v1918, 0.0
    %v2438 = vmax.f32 %v2368, 0.0
    %v2439 = vmax.f32 %v2370, 0.0
    %v2440 = vmax.f32 %v1920, 0.0
    %v2441 = vmax.f32 %v1922, 0.0
    %v2442 = vmax.f32 %v2372, 0.0
    %v2443 = vmax.f32 %v2374, 0.0
    %v2444 = vmax.f32 %v1926, 0.0
    %v2445 = vmax.f32 %v1928, 0.0
    %v2446 = vmax.f32 %v2378, 0.0
    %v2447 = vmax.f32 %v2380, 0.0
    %v2448 = vmax.f32 %v1930, 0.0
    %v2449 = vmax.f32 %v1932, 0.0
    %v2450 = vmax.f32 %v2382, 0.0
    %v2451 = vmax.f32 %v2384, 0.0
    %v2452 = vmax.f32 %v1936, 0.0
    %v2453 = vmax.f32 %v1938, 0.0
    %v2454 = vmax.f32 %v2388, 0.0
    %v2455 = vmax.f32 %v2390, 0.0
    %v2456 = vmax.f32 %v1940, 0.0
    %v2457 = vmax.f32 %v1942, 0.0
    %v2458 = vmax.f32 %v2392, 0.0
    %v2459 = vmax.f32 %v2394, 0.0
    %v2460 = vpack.c.bf16 %v2400, %v2396
    %v2461 = vpack.c.bf16 %v2401, %v2397
    %v2462 = vpack.c.bf16 %v2402, %v2398
    %v2463 = vpack.c.bf16 %v2403, %v2399
    %v2464 = vpack.c.bf16 %v2408, %v2404
    %v2465 = vpack.c.bf16 %v2409, %v2405
    %v2466 = vpack.c.bf16 %v2410, %v2406
    %v2467 = vpack.c.bf16 %v2411, %v2407
    %v2468 = vpack.c.bf16 %v2416, %v2412
    %v2469 = vpack.c.bf16 %v2417, %v2413
    %v2470 = vpack.c.bf16 %v2418, %v2414
    %v2471 = vpack.c.bf16 %v2419, %v2415
    %v2472 = vpack.c.bf16 %v2424, %v2420
    %v2473 = vpack.c.bf16 %v2425, %v2421
    %v2474 = vpack.c.bf16 %v2426, %v2422
    %v2475 = vpack.c.bf16 %v2427, %v2423
    %v2476 = vpack.c.bf16 %v2432, %v2428
    %v2477 = vpack.c.bf16 %v2433, %v2429
    %v2478 = vpack.c.bf16 %v2434, %v2430
    %v2479 = vpack.c.bf16 %v2435, %v2431
    %v2480 = vpack.c.bf16 %v2440, %v2436
    %v2481 = vpack.c.bf16 %v2441, %v2437
    %v2482 = vpack.c.bf16 %v2442, %v2438
    %v2483 = vpack.c.bf16 %v2443, %v2439
    %v2484 = vpack.c.bf16 %v2448, %v2444
    %v2485 = vpack.c.bf16 %v2449, %v2445
    %v2486 = vpack.c.bf16 %v2450, %v2446
    %v2487 = vpack.c.bf16 %v2451, %v2447
    %v2488 = vpack.c.bf16 %v2456, %v2452
    %v2489 = vpack.c.bf16 %v2457, %v2453
    %v2490 = vpack.c.bf16 %v2458, %v2454
    %v2491 = vpack.c.bf16 %v2459, %v2455
    %v2492 = vld [vmem:[#allocation2] sm:$0xff]
    %v2493 = vld [vmem:[#allocation2 + $0x8] sm:$0xff]
    %v2494 = vld [vmem:[#allocation2 + $0x10] sm:$0xff]
    %v2495 = vld [vmem:[#allocation2 + $0x18] sm:$0xff]
    %v2496 = vld [vmem:[#allocation2 + $0x20] sm:$0xff]
    %v2497 = vld [vmem:[#allocation2 + $0x28] sm:$0xff]
    %v2498 = vld [vmem:[#allocation2 + $0x30] sm:$0xff]
    %v2499 = vld [vmem:[#allocation2 + $0x38] sm:$0xff]
    %v2500 = vld [vmem:[#allocation2 + $0x40] sm:$0xff]
    %v2501 = vld [vmem:[#allocation2 + $0x48] sm:$0xff]
    %v2502 = vld [vmem:[#allocation2 + $0x50] sm:$0xff]
    %v2503 = vld [vmem:[#allocation2 + $0x58] sm:$0xff]
    %v2504 = vld [vmem:[#allocation2 + $0x60] sm:$0xff]
    %v2505 = vld [vmem:[#allocation2 + $0x68] sm:$0xff]
    %v2506 = vld [vmem:[#allocation2 + $0x70] sm:$0xff]
    %v2507 = vld [vmem:[#allocation2 + $0x78] sm:$0xff]
    %v2508 = vld [vmem:[#allocation2 + $0x80] sm:$0xff]
    %v2509 = vld [vmem:[#allocation2 + $0x88] sm:$0xff]
    %v2510 = vld [vmem:[#allocation2 + $0x90] sm:$0xff]
    %v2511 = vld [vmem:[#allocation2 + $0x98] sm:$0xff]
    %v2512 = vld [vmem:[#allocation2 + $0xa0] sm:$0xff]
    %v2513 = vld [vmem:[#allocation2 + $0xa8] sm:$0xff]
    %v2514 = vld [vmem:[#allocation2 + $0xb0] sm:$0xff]
    %v2515 = vld [vmem:[#allocation2 + $0xb8] sm:$0xff]
    %v2516 = vld [vmem:[#allocation2 + $0xc0] sm:$0xff]
    %v2517 = vld [vmem:[#allocation2 + $0xc8] sm:$0xff]
    %v2518 = vld [vmem:[#allocation2 + $0xd0] sm:$0xff]
    %v2519 = vld [vmem:[#allocation2 + $0xd8] sm:$0xff]
    %v2520 = vld [vmem:[#allocation2 + $0xe0] sm:$0xff]
    %v2521 = vld [vmem:[#allocation2 + $0xe8] sm:$0xff]
    %v2522 = vld [vmem:[#allocation2 + $0xf0] sm:$0xff]
    %v2523 = vld [vmem:[#allocation2 + $0xf8] sm:$0xff]
    %v2524 = vld [vmem:[#allocation2 + $0x100] sm:$0xff]
    %v2525 = vld [vmem:[#allocation2 + $0x108] sm:$0xff]
    %v2526 = vld [vmem:[#allocation2 + $0x110] sm:$0xff]
    %v2527 = vld [vmem:[#allocation2 + $0x118] sm:$0xff]
    %v2528 = vld [vmem:[#allocation2 + $0x120] sm:$0xff]
    %v2529 = vld [vmem:[#allocation2 + $0x128] sm:$0xff]
    %v2530 = vld [vmem:[#allocation2 + $0x130] sm:$0xff]
    %v2531 = vld [vmem:[#allocation2 + $0x138] sm:$0xff]
    %v2532 = vld [vmem:[#allocation2 + $0x140] sm:$0xff]
    %v2533 = vld [vmem:[#allocation2 + $0x148] sm:$0xff]
    %v2534 = vld [vmem:[#allocation2 + $0x150] sm:$0xff]
    %v2535 = vld [vmem:[#allocation2 + $0x158] sm:$0xff]
    %v2536 = vld [vmem:[#allocation2 + $0x160] sm:$0xff]
    %v2537 = vld [vmem:[#allocation2 + $0x168] sm:$0xff]
    %v2538 = vld [vmem:[#allocation2 + $0x170] sm:$0xff]
    %v2539 = vld [vmem:[#allocation2 + $0x178] sm:$0xff]
    %v2540 = vld [vmem:[#allocation2 + $0x180] sm:$0xff]
    %v2541 = vld [vmem:[#allocation2 + $0x188] sm:$0xff]
    %v2542 = vld [vmem:[#allocation2 + $0x190] sm:$0xff]
    %v2543 = vld [vmem:[#allocation2 + $0x198] sm:$0xff]
    %v2544 = vld [vmem:[#allocation2 + $0x1a0] sm:$0xff]
    %v2545 = vld [vmem:[#allocation2 + $0x1a8] sm:$0xff]
    %v2546 = vld [vmem:[#allocation2 + $0x1b0] sm:$0xff]
    %v2547 = vld [vmem:[#allocation2 + $0x1b8] sm:$0xff]
    %v2548 = vld [vmem:[#allocation2 + $0x1c0] sm:$0xff]
    %v2549 = vld [vmem:[#allocation2 + $0x1c8] sm:$0xff]
    %v2550 = vld [vmem:[#allocation2 + $0x1d0] sm:$0xff]
    %v2551 = vld [vmem:[#allocation2 + $0x1d8] sm:$0xff]
    %v2552 = vld [vmem:[#allocation2 + $0x1e0] sm:$0xff]
    %v2553 = vld [vmem:[#allocation2 + $0x1e8] sm:$0xff]
    %v2554 = vld [vmem:[#allocation2 + $0x1f0] sm:$0xff]
    %v2555 = vld [vmem:[#allocation2 + $0x1f8] sm:$0xff]
    %v2556 = vld [vmem:[#allocation4] sm:$0x3]
    %v2558 = vlaneseq
    %v2559 = vshrl.u32 %v2558, 7
    %v2560 = vsub.s32 0, %v2559
    %v2561 = vrot.slane %v2556, %v2560
    %v2562 = vlaneseq
    %v2563 = vshrl.u32 %v2562, 7
    %v2564 = vsub.s32 1, %v2563
    %v2565 = vrot.slane %v2556, %v2564
    %v2632 = vunpack.c.l.b16 %v2492
    %v2633 = vunpack.c.h.b16 %v2492
    %v2634 = vunpack.c.l.b16 %v2493
    %v2635 = vunpack.c.h.b16 %v2493
    %v2636 = vunpack.c.l.b16 %v2494
    %v2637 = vunpack.c.h.b16 %v2494
    %v2638 = vunpack.c.l.b16 %v2495
    %v2639 = vunpack.c.h.b16 %v2495
    %v2640 = vunpack.c.l.b16 %v2496
    %v2641 = vunpack.c.h.b16 %v2496
    %v2642 = vunpack.c.l.b16 %v2497
    %v2643 = vunpack.c.h.b16 %v2497
    %v2644 = vunpack.c.l.b16 %v2498
    %v2645 = vunpack.c.h.b16 %v2498
    %v2646 = vunpack.c.l.b16 %v2499
    %v2647 = vunpack.c.h.b16 %v2499
    %v2648 = vunpack.c.l.b16 %v2500
    %v2649 = vunpack.c.h.b16 %v2500
    %v2650 = vunpack.c.l.b16 %v2501
    %v2651 = vunpack.c.h.b16 %v2501
    %v2652 = vunpack.c.l.b16 %v2502
    %v2653 = vunpack.c.h.b16 %v2502
    %v2654 = vunpack.c.l.b16 %v2503
    %v2655 = vunpack.c.h.b16 %v2503
    %v2656 = vunpack.c.l.b16 %v2504
    %v2657 = vunpack.c.h.b16 %v2504
    %v2658 = vunpack.c.l.b16 %v2505
    %v2659 = vunpack.c.h.b16 %v2505
    %v2660 = vunpack.c.l.b16 %v2506
    %v2661 = vunpack.c.h.b16 %v2506
    %v2662 = vunpack.c.l.b16 %v2507
    %v2663 = vunpack.c.h.b16 %v2507
    %v2664 = vunpack.c.l.b16 %v2508
    %v2665 = vunpack.c.h.b16 %v2508
    %v2666 = vunpack.c.l.b16 %v2509
    %v2667 = vunpack.c.h.b16 %v2509
    %v2668 = vunpack.c.l.b16 %v2510
    %v2669 = vunpack.c.h.b16 %v2510
    %v2670 = vunpack.c.l.b16 %v2511
    %v2671 = vunpack.c.h.b16 %v2511
    %v2672 = vunpack.c.l.b16 %v2512
    %v2673 = vunpack.c.h.b16 %v2512
    %v2674 = vunpack.c.l.b16 %v2513
    %v2675 = vunpack.c.h.b16 %v2513
    %v2676 = vunpack.c.l.b16 %v2514
    %v2677 = vunpack.c.h.b16 %v2514
    %v2678 = vunpack.c.l.b16 %v2515
    %v2679 = vunpack.c.h.b16 %v2515
    %v2680 = vunpack.c.l.b16 %v2516
    %v2681 = vunpack.c.h.b16 %v2516
    %v2682 = vunpack.c.l.b16 %v2517
    %v2683 = vunpack.c.h.b16 %v2517
    %v2684 = vunpack.c.l.b16 %v2518
    %v2685 = vunpack.c.h.b16 %v2518
    %v2686 = vunpack.c.l.b16 %v2519
    %v2687 = vunpack.c.h.b16 %v2519
    %v2688 = vunpack.c.l.b16 %v2520
    %v2689 = vunpack.c.h.b16 %v2520
    %v2690 = vunpack.c.l.b16 %v2521
    %v2691 = vunpack.c.h.b16 %v2521
    %v2692 = vunpack.c.l.b16 %v2522
    %v2693 = vunpack.c.h.b16 %v2522
    %v2694 = vunpack.c.l.b16 %v2523
    %v2695 = vunpack.c.h.b16 %v2523
    %v2696 = vunpack.c.l.b16 %v2524
    %v2697 = vunpack.c.h.b16 %v2524
    %v2698 = vunpack.c.l.b16 %v2525
    %v2699 = vunpack.c.h.b16 %v2525
    %v2700 = vunpack.c.l.b16 %v2526
    %v2701 = vunpack.c.h.b16 %v2526
    %v2702 = vunpack.c.l.b16 %v2527
    %v2703 = vunpack.c.h.b16 %v2527
    %v2704 = vunpack.c.l.b16 %v2528
    %v2705 = vunpack.c.h.b16 %v2528
    %v2706 = vunpack.c.l.b16 %v2529
    %v2707 = vunpack.c.h.b16 %v2529
    %v2708 = vunpack.c.l.b16 %v2530
    %v2709 = vunpack.c.h.b16 %v2530
    %v2710 = vunpack.c.l.b16 %v2531
    %v2711 = vunpack.c.h.b16 %v2531
    %v2712 = vunpack.c.l.b16 %v2532
    %v2713 = vunpack.c.h.b16 %v2532
    %v2714 = vunpack.c.l.b16 %v2533
    %v2715 = vunpack.c.h.b16 %v2533
    %v2716 = vunpack.c.l.b16 %v2534
    %v2717 = vunpack.c.h.b16 %v2534
    %v2718 = vunpack.c.l.b16 %v2535
    %v2719 = vunpack.c.h.b16 %v2535
    %v2720 = vunpack.c.l.b16 %v2536
    %v2721 = vunpack.c.h.b16 %v2536
    %v2722 = vunpack.c.l.b16 %v2537
    %v2723 = vunpack.c.h.b16 %v2537
    %v2724 = vunpack.c.l.b16 %v2538
    %v2725 = vunpack.c.h.b16 %v2538
    %v2726 = vunpack.c.l.b16 %v2539
    %v2727 = vunpack.c.h.b16 %v2539
    %v2728 = vunpack.c.l.b16 %v2540
    %v2729 = vunpack.c.h.b16 %v2540
    %v2730 = vunpack.c.l.b16 %v2541
    %v2731 = vunpack.c.h.b16 %v2541
    %v2732 = vunpack.c.l.b16 %v2542
    %v2733 = vunpack.c.h.b16 %v2542
    %v2734 = vunpack.c.l.b16 %v2543
    %v2735 = vunpack.c.h.b16 %v2543
    %v2736 = vunpack.c.l.b16 %v2544
    %v2737 = vunpack.c.h.b16 %v2544
    %v2738 = vunpack.c.l.b16 %v2545
    %v2739 = vunpack.c.h.b16 %v2545
    %v2740 = vunpack.c.l.b16 %v2546
    %v2741 = vunpack.c.h.b16 %v2546
    %v2742 = vunpack.c.l.b16 %v2547
    %v2743 = vunpack.c.h.b16 %v2547
    %v2744 = vunpack.c.l.b16 %v2548
    %v2745 = vunpack.c.h.b16 %v2548
    %v2746 = vunpack.c.l.b16 %v2549
    %v2747 = vunpack.c.h.b16 %v2549
    %v2748 = vunpack.c.l.b16 %v2550
    %v2749 = vunpack.c.h.b16 %v2550
    %v2750 = vunpack.c.l.b16 %v2551
    %v2751 = vunpack.c.h.b16 %v2551
    %v2752 = vunpack.c.l.b16 %v2552
    %v2753 = vunpack.c.h.b16 %v2552
    %v2754 = vunpack.c.l.b16 %v2553
    %v2755 = vunpack.c.h.b16 %v2553
    %v2756 = vunpack.c.l.b16 %v2554
    %v2757 = vunpack.c.h.b16 %v2554
    %v2758 = vunpack.c.l.b16 %v2555
    %v2759 = vunpack.c.h.b16 %v2555
    %v2760 = vpack.c.b16 %v2634, %v2632
    %v2761 = vpack.c.b16 %v2635, %v2633
    %v2762 = vpack.c.b16 %v2638, %v2636
    %v2763 = vpack.c.b16 %v2639, %v2637
    %v2764 = vpack.c.b16 %v2642, %v2640
    %v2765 = vpack.c.b16 %v2643, %v2641
    %v2766 = vpack.c.b16 %v2646, %v2644
    %v2767 = vpack.c.b16 %v2647, %v2645
    %v2768 = vpack.c.b16 %v2650, %v2648
    %v2769 = vpack.c.b16 %v2651, %v2649
    %v2770 = vpack.c.b16 %v2654, %v2652
    %v2771 = vpack.c.b16 %v2655, %v2653
    %v2772 = vpack.c.b16 %v2658, %v2656
    %v2773 = vpack.c.b16 %v2659, %v2657
    %v2774 = vpack.c.b16 %v2662, %v2660
    %v2775 = vpack.c.b16 %v2663, %v2661
    %v2776 = vpack.c.b16 %v2666, %v2664
    %v2777 = vpack.c.b16 %v2667, %v2665
    %v2778 = vpack.c.b16 %v2670, %v2668
    %v2779 = vpack.c.b16 %v2671, %v2669
    %v2780 = vpack.c.b16 %v2674, %v2672
    %v2781 = vpack.c.b16 %v2675, %v2673
    %v2782 = vpack.c.b16 %v2678, %v2676
    %v2783 = vpack.c.b16 %v2679, %v2677
    %v2784 = vpack.c.b16 %v2682, %v2680
    %v2785 = vpack.c.b16 %v2683, %v2681
    %v2786 = vpack.c.b16 %v2686, %v2684
    %v2787 = vpack.c.b16 %v2687, %v2685
    %v2788 = vpack.c.b16 %v2690, %v2688
    %v2789 = vpack.c.b16 %v2691, %v2689
    %v2790 = vpack.c.b16 %v2694, %v2692
    %v2791 = vpack.c.b16 %v2695, %v2693
    %v2792 = vpack.c.b16 %v2698, %v2696
    %v2793 = vpack.c.b16 %v2699, %v2697
    %v2794 = vpack.c.b16 %v2702, %v2700
    %v2795 = vpack.c.b16 %v2703, %v2701
    %v2796 = vpack.c.b16 %v2706, %v2704
    %v2797 = vpack.c.b16 %v2707, %v2705
    %v2798 = vpack.c.b16 %v2710, %v2708
    %v2799 = vpack.c.b16 %v2711, %v2709
    %v2800 = vpack.c.b16 %v2714, %v2712
    %v2801 = vpack.c.b16 %v2715, %v2713
    %v2802 = vpack.c.b16 %v2718, %v2716
    %v2803 = vpack.c.b16 %v2719, %v2717
    %v2804 = vpack.c.b16 %v2722, %v2720
    %v2805 = vpack.c.b16 %v2723, %v2721
    %v2806 = vpack.c.b16 %v2726, %v2724
    %v2807 = vpack.c.b16 %v2727, %v2725
    %v2808 = vpack.c.b16 %v2730, %v2728
    %v2809 = vpack.c.b16 %v2731, %v2729
    %v2810 = vpack.c.b16 %v2734, %v2732
    %v2811 = vpack.c.b16 %v2735, %v2733
    %v2812 = vpack.c.b16 %v2738, %v2736
    %v2813 = vpack.c.b16 %v2739, %v2737
    %v2814 = vpack.c.b16 %v2742, %v2740
    %v2815 = vpack.c.b16 %v2743, %v2741
    %v2816 = vpack.c.b16 %v2746, %v2744
    %v2817 = vpack.c.b16 %v2747, %v2745
    %v2818 = vpack.c.b16 %v2750, %v2748
    %v2819 = vpack.c.b16 %v2751, %v2749
    %v2820 = vpack.c.b16 %v2754, %v2752
    %v2821 = vpack.c.b16 %v2755, %v2753
    %v2822 = vpack.c.b16 %v2758, %v2756
    %v2823 = vpack.c.b16 %v2759, %v2757
    %2888 = vmatprep.subr.bf16.mxu0 %v2761
    %2889 = vmatpush1.bf16.msra.mxu0 %v2760
    %2890 = vmatprep.subr.bf16.mxu0 %v2763
    %2891 = vmatpush1.bf16.msra.mxu0 %v2762
    %2892 = vmatprep.subr.bf16.mxu0 %v2765
    %2893 = vmatpush1.bf16.msra.mxu0 %v2764
    %2894 = vmatprep.subr.bf16.mxu0 %v2767
    %2895 = vmatpush1.bf16.msra.mxu0 %v2766
    %2896 = vmatprep.subr.bf16.mxu0 %v2769
    %2897 = vmatpush1.bf16.msra.mxu0 %v2768
    %2898 = vmatprep.subr.bf16.mxu0 %v2771
    %2899 = vmatpush1.bf16.msra.mxu0 %v2770
    %2900 = vmatprep.subr.bf16.mxu0 %v2773
    %2901 = vmatpush1.bf16.msra.mxu0 %v2772
    %2902 = vmatprep.subr.bf16.mxu0 %v2775
    %2903 = vmatpush1.bf16.msra.mxu0 %v2774
    %2904 = vmatprep.subr.bf16.mxu0 %v2777
    %2905 = vmatpush1.bf16.msra.mxu0 %v2776
    %2906 = vmatprep.subr.bf16.mxu0 %v2779
    %2907 = vmatpush1.bf16.msra.mxu0 %v2778
    %2908 = vmatprep.subr.bf16.mxu0 %v2781
    %2909 = vmatpush1.bf16.msra.mxu0 %v2780
    %2910 = vmatprep.subr.bf16.mxu0 %v2783
    %2911 = vmatpush1.bf16.msra.mxu0 %v2782
    %2912 = vmatprep.subr.bf16.mxu0 %v2785
    %2913 = vmatpush1.bf16.msra.mxu0 %v2784
    %2914 = vmatprep.subr.bf16.mxu0 %v2787
    %2915 = vmatpush1.bf16.msra.mxu0 %v2786
    %2916 = vmatprep.subr.bf16.mxu0 %v2789
    %2917 = vmatpush1.bf16.msra.mxu0 %v2788
    %2918 = vmatprep.subr.bf16.mxu0 %v2791
    %2919 = vmatpush1.bf16.msra.mxu0 %v2790
    %2920 = vmatprep.mubr.bf16.mxu0 %v2461
    %2921 = vmatmul.mubr.bf16.gmra.mrb[0].mxu0 %v2460
    %v2922 = vpop.f32.mrb[0].mxu0
    %v2923 = vadd.f32 %v2561, %v2922
    %v2924 = vpop.f32.mrb[0].mxu0
    %v2925 = vadd.f32 %v2565, %v2924
    %v2926 = vpop.f32.mrb[0].mxu0
    %v2927 = vadd.f32 %v2561, %v2926
    %v2928 = vpop.f32.mrb[0].mxu0
    %v2929 = vadd.f32 %v2565, %v2928
    %2930 = vmatprep.mubr.bf16.mxu0 %v2465
    %2931 = vmatmul.mubr.bf16.gmra.mrb[0].mxu0 %v2464
    %v2932 = vpop.f32.mrb[0].mxu0
    %v2933 = vadd.f32 %v2561, %v2932
    %v2934 = vpop.f32.mrb[0].mxu0
    %v2935 = vadd.f32 %v2565, %v2934
    %v2936 = vpop.f32.mrb[0].mxu0
    %v2937 = vadd.f32 %v2561, %v2936
    %v2938 = vpop.f32.mrb[0].mxu0
    %v2939 = vadd.f32 %v2565, %v2938
    %2940 = vmatprep.mubr.bf16.mxu0 %v2469
    %2941 = vmatmul.mubr.bf16.gmra.mrb[0].mxu0 %v2468
    %v2942 = vpop.f32.mrb[0].mxu0
    %v2943 = vadd.f32 %v2561, %v2942
    %v2944 = vpop.f32.mrb[0].mxu0
    %v2945 = vadd.f32 %v2565, %v2944
    %v2946 = vpop.f32.mrb[0].mxu0
    %v2947 = vadd.f32 %v2561, %v2946
    %v2948 = vpop.f32.mrb[0].mxu0
    %v2949 = vadd.f32 %v2565, %v2948
    %2950 = vmatprep.mubr.bf16.mxu0 %v2473
    %2951 = vmatmul.mubr.bf16.gmra.mrb[0].mxu0 %v2472
    %v2952 = vpop.f32.mrb[0].mxu0
    %v2953 = vadd.f32 %v2561, %v2952
    %v2954 = vpop.f32.mrb[0].mxu0
    %v2955 = vadd.f32 %v2565, %v2954
    %v2956 = vpop.f32.mrb[0].mxu0
    %v2957 = vadd.f32 %v2561, %v2956
    %v2958 = vpop.f32.mrb[0].mxu0
    %v2959 = vadd.f32 %v2565, %v2958
    %2960 = vmatprep.mubr.bf16.mxu0 %v2477
    %2961 = vmatmul.mubr.bf16.gmra.mrb[0].mxu0 %v2476
    %v2962 = vpop.f32.mrb[0].mxu0
    %v2963 = vadd.f32 %v2561, %v2962
    %v2964 = vpop.f32.mrb[0].mxu0
    %v2965 = vadd.f32 %v2565, %v2964
    %v2966 = vpop.f32.mrb[0].mxu0
    %v2967 = vadd.f32 %v2561, %v2966
    %v2968 = vpop.f32.mrb[0].mxu0
    %v2969 = vadd.f32 %v2565, %v2968
    %2970 = vmatprep.mubr.bf16.mxu0 %v2481
    %2971 = vmatmul.mubr.bf16.gmra.mrb[0].mxu0 %v2480
    %v2972 = vpop.f32.mrb[0].mxu0
    %v2973 = vadd.f32 %v2561, %v2972
    %v2974 = vpop.f32.mrb[0].mxu0
    %v2975 = vadd.f32 %v2565, %v2974
    %v2976 = vpop.f32.mrb[0].mxu0
    %v2977 = vadd.f32 %v2561, %v2976
    %v2978 = vpop.f32.mrb[0].mxu0
    %v2979 = vadd.f32 %v2565, %v2978
    %2980 = vmatprep.mubr.bf16.mxu0 %v2485
    %2981 = vmatmul.mubr.bf16.gmra.mrb[0].mxu0 %v2484
    %v2982 = vpop.f32.mrb[0].mxu0
    %v2983 = vadd.f32 %v2561, %v2982
    %v2984 = vpop.f32.mrb[0].mxu0
    %v2985 = vadd.f32 %v2565, %v2984
    %v2986 = vpop.f32.mrb[0].mxu0
    %v2987 = vadd.f32 %v2561, %v2986
    %v2988 = vpop.f32.mrb[0].mxu0
    %v2989 = vadd.f32 %v2565, %v2988
    %2990 = vmatprep.mubr.bf16.mxu0 %v2489
    %2991 = vmatmul.mubr.bf16.gmra.mrb[0].mxu0 %v2488
    %v2992 = vpop.f32.mrb[0].mxu0
    %v2993 = vadd.f32 %v2561, %v2992
    %v2994 = vpop.f32.mrb[0].mxu0
    %v2995 = vadd.f32 %v2565, %v2994
    %v2996 = vpop.f32.mrb[0].mxu0
    %v2997 = vadd.f32 %v2561, %v2996
    %v2998 = vpop.f32.mrb[0].mxu0
    %v2999 = vadd.f32 %v2565, %v2998
    %3000 = vdwg.mxu0
    %3001 = vmatprep.subr.bf16.mxu0 %v2793
    %3002 = vmatpush1.bf16.msra.mxu0 %v2792
    %3003 = vmatprep.subr.bf16.mxu0 %v2795
    %3004 = vmatpush1.bf16.msra.mxu0 %v2794
    %3005 = vmatprep.subr.bf16.mxu0 %v2797
    %3006 = vmatpush1.bf16.msra.mxu0 %v2796
    %3007 = vmatprep.subr.bf16.mxu0 %v2799
    %3008 = vmatpush1.bf16.msra.mxu0 %v2798
    %3009 = vmatprep.subr.bf16.mxu0 %v2801
    %3010 = vmatpush1.bf16.msra.mxu0 %v2800
    %3011 = vmatprep.subr.bf16.mxu0 %v2803
    %3012 = vmatpush1.bf16.msra.mxu0 %v2802
    %3013 = vmatprep.subr.bf16.mxu0 %v2805
    %3014 = vmatpush1.bf16.msra.mxu0 %v2804
    %3015 = vmatprep.subr.bf16.mxu0 %v2807
    %3016 = vmatpush1.bf16.msra.mxu0 %v2806
    %3017 = vmatprep.subr.bf16.mxu0 %v2809
    %3018 = vmatpush1.bf16.msra.mxu0 %v2808
    %3019 = vmatprep.subr.bf16.mxu0 %v2811
    %3020 = vmatpush1.bf16.msra.mxu0 %v2810
    %3021 = vmatprep.subr.bf16.mxu0 %v2813
    %3022 = vmatpush1.bf16.msra.mxu0 %v2812
    %3023 = vmatprep.subr.bf16.mxu0 %v2815
    %3024 = vmatpush1.bf16.msra.mxu0 %v2814
    %3025 = vmatprep.subr.bf16.mxu0 %v2817
    %3026 = vmatpush1.bf16.msra.mxu0 %v2816
    %3027 = vmatprep.subr.bf16.mxu0 %v2819
    %3028 = vmatpush1.bf16.msra.mxu0 %v2818
    %3029 = vmatprep.subr.bf16.mxu0 %v2821
    %3030 = vmatpush1.bf16.msra.mxu0 %v2820
    %3031 = vmatprep.subr.bf16.mxu0 %v2823
    %3032 = vmatpush1.bf16.msra.mxu0 %v2822
    %3033 = vmatprep.mubr.bf16.mxu0 %v2463
    %3034 = vmatmul.mubr.bf16.gmra.mrb[0].mxu0 %v2462
    %v3035 = vpop.f32.mrb[0].mxu0
    %v3036 = vadd.f32 %v2923, %v3035
    %v3037 = vpop.f32.mrb[0].mxu0
    %v3038 = vadd.f32 %v2925, %v3037
    %v3039 = vpop.f32.mrb[0].mxu0
    %v3040 = vadd.f32 %v2927, %v3039
    %v3041 = vpop.f32.mrb[0].mxu0
    %v3042 = vadd.f32 %v2929, %v3041
    %3043 = vmatprep.mubr.bf16.mxu0 %v2467
    %3044 = vmatmul.mubr.bf16.gmra.mrb[0].mxu0 %v2466
    %v3045 = vpop.f32.mrb[0].mxu0
    %v3046 = vadd.f32 %v2933, %v3045
    %v3047 = vpop.f32.mrb[0].mxu0
    %v3048 = vadd.f32 %v2935, %v3047
    %v3049 = vpop.f32.mrb[0].mxu0
    %v3050 = vadd.f32 %v2937, %v3049
    %v3051 = vpop.f32.mrb[0].mxu0
    %v3052 = vadd.f32 %v2939, %v3051
    %3053 = vmatprep.mubr.bf16.mxu0 %v2471
    %3054 = vmatmul.mubr.bf16.gmra.mrb[0].mxu0 %v2470
    %v3055 = vpop.f32.mrb[0].mxu0
    %v3056 = vadd.f32 %v2943, %v3055
    %v3057 = vpop.f32.mrb[0].mxu0
    %v3058 = vadd.f32 %v2945, %v3057
    %v3059 = vpop.f32.mrb[0].mxu0
    %v3060 = vadd.f32 %v2947, %v3059
    %v3061 = vpop.f32.mrb[0].mxu0
    %v3062 = vadd.f32 %v2949, %v3061
    %3063 = vmatprep.mubr.bf16.mxu0 %v2475
    %3064 = vmatmul.mubr.bf16.gmra.mrb[0].mxu0 %v2474
    %v3065 = vpop.f32.mrb[0].mxu0
    %v3066 = vadd.f32 %v2953, %v3065
    %v3067 = vpop.f32.mrb[0].mxu0
    %v3068 = vadd.f32 %v2955, %v3067
    %v3069 = vpop.f32.mrb[0].mxu0
    %v3070 = vadd.f32 %v2957, %v3069
    %v3071 = vpop.f32.mrb[0].mxu0
    %v3072 = vadd.f32 %v2959, %v3071
    %3073 = vmatprep.mubr.bf16.mxu0 %v2479
    %3074 = vmatmul.mubr.bf16.gmra.mrb[0].mxu0 %v2478
    %v3075 = vpop.f32.mrb[0].mxu0
    %v3076 = vadd.f32 %v2963, %v3075
    %v3077 = vpop.f32.mrb[0].mxu0
    %v3078 = vadd.f32 %v2965, %v3077
    %v3079 = vpop.f32.mrb[0].mxu0
    %v3080 = vadd.f32 %v2967, %v3079
    %v3081 = vpop.f32.mrb[0].mxu0
    %v3082 = vadd.f32 %v2969, %v3081
    %3083 = vmatprep.mubr.bf16.mxu0 %v2483
    %3084 = vmatmul.mubr.bf16.gmra.mrb[0].mxu0 %v2482
    %v3085 = vpop.f32.mrb[0].mxu0
    %v3086 = vadd.f32 %v2973, %v3085
    %v3087 = vpop.f32.mrb[0].mxu0
    %v3088 = vadd.f32 %v2975, %v3087
    %v3089 = vpop.f32.mrb[0].mxu0
    %v3090 = vadd.f32 %v2977, %v3089
    %v3091 = vpop.f32.mrb[0].mxu0
    %v3092 = vadd.f32 %v2979, %v3091
    %3093 = vmatprep.mubr.bf16.mxu0 %v2487
    %3094 = vmatmul.mubr.bf16.gmra.mrb[0].mxu0 %v2486
    %v3095 = vpop.f32.mrb[0].mxu0
    %v3096 = vadd.f32 %v2983, %v3095
    %v3097 = vpop.f32.mrb[0].mxu0
    %v3098 = vadd.f32 %v2985, %v3097
    %v3099 = vpop.f32.mrb[0].mxu0
    %v3100 = vadd.f32 %v2987, %v3099
    %v3101 = vpop.f32.mrb[0].mxu0
    %v3102 = vadd.f32 %v2989, %v3101
    %3103 = vmatprep.mubr.bf16.mxu0 %v2491
    %3104 = vmatmul.mubr.bf16.gmra.mrb[0].mxu0 %v2490
    %v3105 = vpop.f32.mrb[0].mxu0
    %v3106 = vadd.f32 %v2993, %v3105
    %v3107 = vpop.f32.mrb[0].mxu0
    %v3108 = vadd.f32 %v2995, %v3107
    %v3109 = vpop.f32.mrb[0].mxu0
    %v3110 = vadd.f32 %v2997, %v3109
    %v3111 = vpop.f32.mrb[0].mxu0
    %v3112 = vadd.f32 %v2999, %v3111
    %3113 = vdwg.mxu0
    %v3114 = vmax.f32 %v3036, 0.0
    %v3115 = vmax.f32 %v3038, 0.0
    %v3116 = vmax.f32 %v3040, 0.0
    %v3117 = vmax.f32 %v3042, 0.0
    %v3118 = vmax.f32 %v3046, 0.0
    %v3119 = vmax.f32 %v3048, 0.0
    %v3120 = vmax.f32 %v3050, 0.0
    %v3121 = vmax.f32 %v3052, 0.0
    %v3122 = vmax.f32 %v3056, 0.0
    %v3123 = vmax.f32 %v3058, 0.0
    %v3124 = vmax.f32 %v3060, 0.0
    %v3125 = vmax.f32 %v3062, 0.0
    %v3126 = vmax.f32 %v3066, 0.0
    %v3127 = vmax.f32 %v3068, 0.0
    %v3128 = vmax.f32 %v3070, 0.0
    %v3129 = vmax.f32 %v3072, 0.0
    %v3130 = vmax.f32 %v3076, 0.0
    %v3131 = vmax.f32 %v3078, 0.0
    %v3132 = vmax.f32 %v3080, 0.0
    %v3133 = vmax.f32 %v3082, 0.0
    %v3134 = vmax.f32 %v3086, 0.0
    %v3135 = vmax.f32 %v3088, 0.0
    %v3136 = vmax.f32 %v3090, 0.0
    %v3137 = vmax.f32 %v3092, 0.0
    %v3138 = vmax.f32 %v3096, 0.0
    %v3139 = vmax.f32 %v3098, 0.0
    %v3140 = vmax.f32 %v3100, 0.0
    %v3141 = vmax.f32 %v3102, 0.0
    %v3142 = vmax.f32 %v3106, 0.0
    %v3143 = vmax.f32 %v3108, 0.0
    %v3144 = vmax.f32 %v3110, 0.0
    %v3145 = vmax.f32 %v3112, 0.0
    %v3146 = vpack.c.bf16 %v3116, %v3114
    %v3147 = vpack.c.bf16 %v3117, %v3115
    %v3148 = vpack.c.bf16 %v3120, %v3118
    %v3149 = vpack.c.bf16 %v3121, %v3119
    %v3150 = vpack.c.bf16 %v3124, %v3122
    %v3151 = vpack.c.bf16 %v3125, %v3123
    %v3152 = vpack.c.bf16 %v3128, %v3126
    %v3153 = vpack.c.bf16 %v3129, %v3127
    %v3154 = vpack.c.bf16 %v3132, %v3130
    %v3155 = vpack.c.bf16 %v3133, %v3131
    %v3156 = vpack.c.bf16 %v3136, %v3134
    %v3157 = vpack.c.bf16 %v3137, %v3135
    %v3158 = vpack.c.bf16 %v3140, %v3138
    %v3159 = vpack.c.bf16 %v3141, %v3139
    %v3160 = vpack.c.bf16 %v3144, %v3142
    %v3161 = vpack.c.bf16 %v3145, %v3143
    %v3162 = vld [vmem:[%s5] sm:$0xf]
    %v3163 = vld [vmem:[%s5 + $0x4] sm:$0xf]
    %v3164 = vld [vmem:[%s5 + $0x8] sm:$0xf]
    %v3165 = vld [vmem:[%s5 + $0xc] sm:$0xf]
    %v3166 = vld [vmem:[%s5 + $0x10] sm:$0xf]
    %v3167 = vld [vmem:[%s5 + $0x14] sm:$0xf]
    %v3168 = vld [vmem:[%s5 + $0x18] sm:$0xf]
    %v3169 = vld [vmem:[%s5 + $0x1c] sm:$0xf]
    %v3170 = vld [vmem:[%s5 + $0x20] sm:$0xf]
    %v3171 = vld [vmem:[%s5 + $0x24] sm:$0xf]
    %v3172 = vld [vmem:[%s5 + $0x28] sm:$0xf]
    %v3173 = vld [vmem:[%s5 + $0x2c] sm:$0xf]
    %v3174 = vld [vmem:[%s5 + $0x30] sm:$0xf]
    %v3175 = vld [vmem:[%s5 + $0x34] sm:$0xf]
    %v3176 = vld [vmem:[%s5 + $0x38] sm:$0xf]
    %v3177 = vld [vmem:[%s5 + $0x3c] sm:$0xf]
    %v3178 = vld [vmem:[%s5 + $0x40] sm:$0xf]
    %v3179 = vld [vmem:[%s5 + $0x44] sm:$0xf]
    %v3180 = vld [vmem:[%s5 + $0x48] sm:$0xf]
    %v3181 = vld [vmem:[%s5 + $0x4c] sm:$0xf]
    %v3182 = vld [vmem:[%s5 + $0x50] sm:$0xf]
    %v3183 = vld [vmem:[%s5 + $0x54] sm:$0xf]
    %v3184 = vld [vmem:[%s5 + $0x58] sm:$0xf]
    %v3185 = vld [vmem:[%s5 + $0x5c] sm:$0xf]
    %v3186 = vld [vmem:[%s5 + $0x60] sm:$0xf]
    %v3187 = vld [vmem:[%s5 + $0x64] sm:$0xf]
    %v3188 = vld [vmem:[%s5 + $0x68] sm:$0xf]
    %v3189 = vld [vmem:[%s5 + $0x6c] sm:$0xf]
    %v3190 = vld [vmem:[%s5 + $0x70] sm:$0xf]
    %v3191 = vld [vmem:[%s5 + $0x74] sm:$0xf]
    %v3192 = vld [vmem:[%s5 + $0x78] sm:$0xf]
    %v3193 = vld [vmem:[%s5 + $0x7c] sm:$0xf]
    %v3194 = vld [vmem:[#allocation6] sm:$0x1]
    %v3196 = vlaneseq
    %v3197 = vshrl.u32 %v3196, 7
    %v3198 = vsub.s32 0, %v3197
    %v3199 = vrot.slane %v3194, %v3198
    %v3233 = vunpack.c.l.b16 %v3162
    %v3234 = vunpack.c.l.b16 %v3163
    %v3235 = vunpack.c.l.b16 %v3164
    %v3236 = vunpack.c.l.b16 %v3165
    %v3237 = vunpack.c.l.b16 %v3166
    %v3238 = vunpack.c.l.b16 %v3167
    %v3239 = vunpack.c.l.b16 %v3168
    %v3240 = vunpack.c.l.b16 %v3169
    %v3241 = vunpack.c.l.b16 %v3170
    %v3242 = vunpack.c.l.b16 %v3171
    %v3243 = vunpack.c.l.b16 %v3172
    %v3244 = vunpack.c.l.b16 %v3173
    %v3245 = vunpack.c.l.b16 %v3174
    %v3246 = vunpack.c.l.b16 %v3175
    %v3247 = vunpack.c.l.b16 %v3176
    %v3248 = vunpack.c.l.b16 %v3177
    %v3249 = vunpack.c.l.b16 %v3178
    %v3250 = vunpack.c.l.b16 %v3179
    %v3251 = vunpack.c.l.b16 %v3180
    %v3252 = vunpack.c.l.b16 %v3181
    %v3253 = vunpack.c.l.b16 %v3182
    %v3254 = vunpack.c.l.b16 %v3183
    %v3255 = vunpack.c.l.b16 %v3184
    %v3256 = vunpack.c.l.b16 %v3185
    %v3257 = vunpack.c.l.b16 %v3186
    %v3258 = vunpack.c.l.b16 %v3187
    %v3259 = vunpack.c.l.b16 %v3188
    %v3260 = vunpack.c.l.b16 %v3189
    %v3261 = vunpack.c.l.b16 %v3190
    %v3262 = vunpack.c.l.b16 %v3191
    %v3263 = vunpack.c.l.b16 %v3192
    %v3264 = vunpack.c.l.b16 %v3193
    %v3265 = vpack.c.b16 %v3234, %v3233
    %v3266 = vpack.c.b16 %v3236, %v3235
    %v3267 = vpack.c.b16 %v3238, %v3237
    %v3268 = vpack.c.b16 %v3240, %v3239
    %v3269 = vpack.c.b16 %v3242, %v3241
    %v3270 = vpack.c.b16 %v3244, %v3243
    %v3271 = vpack.c.b16 %v3246, %v3245
    %v3272 = vpack.c.b16 %v3248, %v3247
    %v3273 = vpack.c.b16 %v3250, %v3249
    %v3274 = vpack.c.b16 %v3252, %v3251
    %v3275 = vpack.c.b16 %v3254, %v3253
    %v3276 = vpack.c.b16 %v3256, %v3255
    %v3277 = vpack.c.b16 %v3258, %v3257
    %v3278 = vpack.c.b16 %v3260, %v3259
    %v3279 = vpack.c.b16 %v3262, %v3261
    %v3280 = vpack.c.b16 %v3264, %v3263
    %3297 = vmatprep.subr.bf16.mxu0 0
    %3298 = vmatpush1.bf16.msra.mxu0 %v3265
    %3299 = vmatprep.subr.bf16.mxu0 0
    %3300 = vmatpush1.bf16.msra.mxu0 %v3266
    %3301 = vmatprep.subr.bf16.mxu0 0
    %3302 = vmatpush1.bf16.msra.mxu0 %v3267
    %3303 = vmatprep.subr.bf16.mxu0 0
    %3304 = vmatpush1.bf16.msra.mxu0 %v3268
    %3305 = vmatprep.subr.bf16.mxu0 0
    %3306 = vmatpush1.bf16.msra.mxu0 %v3269
    %3307 = vmatprep.subr.bf16.mxu0 0
    %3308 = vmatpush1.bf16.msra.mxu0 %v3270
    %3309 = vmatprep.subr.bf16.mxu0 0
    %3310 = vmatpush1.bf16.msra.mxu0 %v3271
    %3311 = vmatprep.subr.bf16.mxu0 0
    %3312 = vmatpush1.bf16.msra.mxu0 %v3272
    %3313 = vmatprep.subr.bf16.mxu0 0
    %3314 = vmatpush1.bf16.msra.mxu0 %v3273
    %3315 = vmatprep.subr.bf16.mxu0 0
    %3316 = vmatpush1.bf16.msra.mxu0 %v3274
    %3317 = vmatprep.subr.bf16.mxu0 0
    %3318 = vmatpush1.bf16.msra.mxu0 %v3275
    %3319 = vmatprep.subr.bf16.mxu0 0
    %3320 = vmatpush1.bf16.msra.mxu0 %v3276
    %3321 = vmatprep.subr.bf16.mxu0 0
    %3322 = vmatpush1.bf16.msra.mxu0 %v3277
    %3323 = vmatprep.subr.bf16.mxu0 0
    %3324 = vmatpush1.bf16.msra.mxu0 %v3278
    %3325 = vmatprep.subr.bf16.mxu0 0
    %3326 = vmatpush1.bf16.msra.mxu0 %v3279
    %3327 = vmatprep.subr.bf16.mxu0 0
    %3328 = vmatpush1.bf16.msra.mxu0 %v3280
    %3329 = vmatprep.mubr.bf16.mxu0 %v3147
    %3330 = vmatmul.mubr.bf16.gmra.mrb[0].mxu0 %v3146
    %v3331 = vpop.f32.mrb[0].mxu0
    %v3332 = vadd.f32 %v3199, %v3331
    %v3333 = vpop.f32.mrb[0].mxu0
    %v3334 = vpop.f32.mrb[0].mxu0
    %v3335 = vadd.f32 %v3199, %v3334
    %v3336 = vpop.f32.mrb[0].mxu0
    %3337 = vmatprep.mubr.bf16.mxu0 %v3149
    %3338 = vmatmul.mubr.bf16.gmra.mrb[0].mxu0 %v3148
    %v3339 = vpop.f32.mrb[0].mxu0
    %v3340 = vadd.f32 %v3199, %v3339
    %v3341 = vpop.f32.mrb[0].mxu0
    %v3342 = vpop.f32.mrb[0].mxu0
    %v3343 = vadd.f32 %v3199, %v3342
    %v3344 = vpop.f32.mrb[0].mxu0
    %3345 = vmatprep.mubr.bf16.mxu0 %v3151
    %3346 = vmatmul.mubr.bf16.gmra.mrb[0].mxu0 %v3150
    %v3347 = vpop.f32.mrb[0].mxu0
    %v3348 = vadd.f32 %v3199, %v3347
    %v3349 = vpop.f32.mrb[0].mxu0
    %v3350 = vpop.f32.mrb[0].mxu0
    %v3351 = vadd.f32 %v3199, %v3350
    %v3352 = vpop.f32.mrb[0].mxu0
    %3353 = vmatprep.mubr.bf16.mxu0 %v3153
    %3354 = vmatmul.mubr.bf16.gmra.mrb[0].mxu0 %v3152
    %v3355 = vpop.f32.mrb[0].mxu0
    %v3356 = vadd.f32 %v3199, %v3355
    %v3357 = vpop.f32.mrb[0].mxu0
    %v3358 = vpop.f32.mrb[0].mxu0
    %v3359 = vadd.f32 %v3199, %v3358
    %v3360 = vpop.f32.mrb[0].mxu0
    %3361 = vmatprep.mubr.bf16.mxu0 %v3155
    %3362 = vmatmul.mubr.bf16.gmra.mrb[0].mxu0 %v3154
    %v3363 = vpop.f32.mrb[0].mxu0
    %v3364 = vadd.f32 %v3199, %v3363
    %v3365 = vpop.f32.mrb[0].mxu0
    %v3366 = vpop.f32.mrb[0].mxu0
    %v3367 = vadd.f32 %v3199, %v3366
    %v3368 = vpop.f32.mrb[0].mxu0
    %3369 = vmatprep.mubr.bf16.mxu0 %v3157
    %3370 = vmatmul.mubr.bf16.gmra.mrb[0].mxu0 %v3156
    %v3371 = vpop.f32.mrb[0].mxu0
    %v3372 = vadd.f32 %v3199, %v3371
    %v3373 = vpop.f32.mrb[0].mxu0
    %v3374 = vpop.f32.mrb[0].mxu0
    %v3375 = vadd.f32 %v3199, %v3374
    %v3376 = vpop.f32.mrb[0].mxu0
    %3377 = vmatprep.mubr.bf16.mxu0 %v3159
    %3378 = vmatmul.mubr.bf16.gmra.mrb[0].mxu0 %v3158
    %v3379 = vpop.f32.mrb[0].mxu0
    %v3380 = vadd.f32 %v3199, %v3379
    %v3381 = vpop.f32.mrb[0].mxu0
    %v3382 = vpop.f32.mrb[0].mxu0
    %v3383 = vadd.f32 %v3199, %v3382
    %v3384 = vpop.f32.mrb[0].mxu0
    %3385 = vmatprep.mubr.bf16.mxu0 %v3161
    %3386 = vmatmul.mubr.bf16.gmra.mrb[0].mxu0 %v3160
    %v3387 = vpop.f32.mrb[0].mxu0
    %v3388 = vadd.f32 %v3199, %v3387
    %v3389 = vpop.f32.mrb[0].mxu0
    %v3390 = vpop.f32.mrb[0].mxu0
    %v3391 = vadd.f32 %v3199, %v3390
    %v3392 = vpop.f32.mrb[0].mxu0
    %3393 = vdwg.mxu0
    %v3394 = vmax.f32 %v3332, 0.0
    %v3395 = vmax.f32 %v3335, 0.0
    %v3396 = vmax.f32 %v3340, 0.0
    %v3397 = vmax.f32 %v3343, 0.0
    %v3398 = vmax.f32 %v3348, 0.0
    %v3399 = vmax.f32 %v3351, 0.0
    %v3400 = vmax.f32 %v3356, 0.0
    %v3401 = vmax.f32 %v3359, 0.0
    %v3402 = vmax.f32 %v3364, 0.0
    %v3403 = vmax.f32 %v3367, 0.0
    %v3404 = vmax.f32 %v3372, 0.0
    %v3405 = vmax.f32 %v3375, 0.0
    %v3406 = vmax.f32 %v3380, 0.0
    %v3407 = vmax.f32 %v3383, 0.0
    %v3408 = vmax.f32 %v3388, 0.0
    %v3409 = vmax.f32 %v3391, 0.0
    %v3410 = vpack.c.bf16 %v3395, %v3394
    %v3411 = vpack.c.bf16 %v3397, %v3396
    %v3412 = vpack.c.bf16 %v3399, %v3398
    %v3413 = vpack.c.bf16 %v3401, %v3400
    %v3414 = vpack.c.bf16 %v3403, %v3402
    %v3415 = vpack.c.bf16 %v3405, %v3404
    %v3416 = vpack.c.bf16 %v3407, %v3406
    %v3417 = vpack.c.bf16 %v3409, %v3408
    %v3418 = vld [vmem:[%s7] sm:$0xf]
    %v3419 = vld [vmem:[%s7 + $0x4] sm:$0xf]
    %v3420 = vld [vmem:[%s7 + $0x8] sm:$0xf]
    %v3421 = vld [vmem:[%s7 + $0xc] sm:$0xf]
    %v3422 = vld [vmem:[%s7 + $0x10] sm:$0xf]
    %v3423 = vld [vmem:[%s7 + $0x14] sm:$0xf]
    %v3424 = vld [vmem:[%s7 + $0x18] sm:$0xf]
    %v3425 = vld [vmem:[%s7 + $0x1c] sm:$0xf]
    %v3426 = vld [vmem:[%s7 + $0x20] sm:$0xf]
    %v3427 = vld [vmem:[%s7 + $0x24] sm:$0xf]
    %v3428 = vld [vmem:[%s7 + $0x28] sm:$0xf]
    %v3429 = vld [vmem:[%s7 + $0x2c] sm:$0xf]
    %v3430 = vld [vmem:[%s7 + $0x30] sm:$0xf]
    %v3431 = vld [vmem:[%s7 + $0x34] sm:$0xf]
    %v3432 = vld [vmem:[%s7 + $0x38] sm:$0xf]
    %v3433 = vld [vmem:[%s7 + $0x3c] sm:$0xf]
    %v3434 = vld [vmem:[#allocation7] sm:$0x1]
    %v3436 = vlaneseq
    %v3437 = vshrl.u32 %v3436, 7
    %v3438 = vsub.s32 0, %v3437
    %v3439 = vrot.slane %v3434, %v3438
    %v3457 = vunpack.c.l.b16 %v3418
    %v3458 = vunpack.c.l.b16 %v3419
    %v3459 = vunpack.c.l.b16 %v3420
    %v3460 = vunpack.c.l.b16 %v3421
    %v3461 = vunpack.c.l.b16 %v3422
    %v3462 = vunpack.c.l.b16 %v3423
    %v3463 = vunpack.c.l.b16 %v3424
    %v3464 = vunpack.c.l.b16 %v3425
    %v3465 = vunpack.c.l.b16 %v3426
    %v3466 = vunpack.c.l.b16 %v3427
    %v3467 = vunpack.c.l.b16 %v3428
    %v3468 = vunpack.c.l.b16 %v3429
    %v3469 = vunpack.c.l.b16 %v3430
    %v3470 = vunpack.c.l.b16 %v3431
    %v3471 = vunpack.c.l.b16 %v3432
    %v3472 = vunpack.c.l.b16 %v3433
    %v3473 = vpack.c.b16 %v3458, %v3457
    %v3474 = vpack.c.b16 %v3460, %v3459
    %v3475 = vpack.c.b16 %v3462, %v3461
    %v3476 = vpack.c.b16 %v3464, %v3463
    %v3477 = vpack.c.b16 %v3466, %v3465
    %v3478 = vpack.c.b16 %v3468, %v3467
    %v3479 = vpack.c.b16 %v3470, %v3469
    %v3480 = vpack.c.b16 %v3472, %v3471
    %3489 = vmatprep.subr.bf16.mxu0 0
    %3490 = vmatpush1.bf16.msra.mxu0 %v3473
    %3491 = vmatprep.subr.bf16.mxu0 0
    %3492 = vmatpush1.bf16.msra.mxu0 %v3474
    %3493 = vmatprep.subr.bf16.mxu0 0
    %3494 = vmatpush1.bf16.msra.mxu0 %v3475
    %3495 = vmatprep.subr.bf16.mxu0 0
    %3496 = vmatpush1.bf16.msra.mxu0 %v3476
    %3497 = vmatprep.subr.bf16.mxu0 0
    %3498 = vmatpush1.bf16.msra.mxu0 %v3477
    %3499 = vmatprep.subr.bf16.mxu0 0
    %3500 = vmatpush1.bf16.msra.mxu0 %v3478
    %3501 = vmatprep.subr.bf16.mxu0 0
    %3502 = vmatpush1.bf16.msra.mxu0 %v3479
    %3503 = vmatprep.subr.bf16.mxu0 0
    %3504 = vmatpush1.bf16.msra.mxu0 %v3480
    %3505 = vmatprep.subr.bf16.mxu0 0
    %3506 = vmatpush1.bf16.msra.mxu0 0
    %3507 = vmatprep.subr.bf16.mxu0 0
    %3508 = vmatpush1.bf16.msra.mxu0 0
    %3509 = vmatprep.subr.bf16.mxu0 0
    %3510 = vmatpush1.bf16.msra.mxu0 0
    %3511 = vmatprep.subr.bf16.mxu0 0
    %3512 = vmatpush1.bf16.msra.mxu0 0
    %3513 = vmatprep.subr.bf16.mxu0 0
    %3514 = vmatpush1.bf16.msra.mxu0 0
    %3515 = vmatprep.subr.bf16.mxu0 0
    %3516 = vmatpush1.bf16.msra.mxu0 0
    %3517 = vmatprep.subr.bf16.mxu0 0
    %3518 = vmatpush1.bf16.msra.mxu0 0
    %3519 = vmatprep.subr.bf16.mxu0 0
    %3520 = vmatpush1.bf16.msra.mxu0 0
    %3521 = vmatprep.mubr.bf16.mxu0 0
    %3522 = vmatmul.mubr.bf16.gmra.mrb[0].mxu0 %v3410
    %v3523 = vpop.f32.mrb[0].mxu0
    %v3524 = vadd.f32 %v3439, %v3523
    %v3525 = vpop.f32.mrb[0].mxu0
    %v3526 = vpop.f32.mrb[0].mxu0
    %v3527 = vadd.f32 %v3439, %v3526
    %v3528 = vpop.f32.mrb[0].mxu0
    %3529 = vmatprep.mubr.bf16.mxu0 0
    %3530 = vmatmul.mubr.bf16.gmra.mrb[0].mxu0 %v3411
    %v3531 = vpop.f32.mrb[0].mxu0
    %v3532 = vadd.f32 %v3439, %v3531
    %v3533 = vpop.f32.mrb[0].mxu0
    %v3534 = vpop.f32.mrb[0].mxu0
    %v3535 = vadd.f32 %v3439, %v3534
    %v3536 = vpop.f32.mrb[0].mxu0
    %3537 = vmatprep.mubr.bf16.mxu0 0
    %3538 = vmatmul.mubr.bf16.gmra.mrb[0].mxu0 %v3412
    %v3539 = vpop.f32.mrb[0].mxu0
    %v3540 = vadd.f32 %v3439, %v3539
    %v3541 = vpop.f32.mrb[0].mxu0
    %v3542 = vpop.f32.mrb[0].mxu0
    %v3543 = vadd.f32 %v3439, %v3542
    %v3544 = vpop.f32.mrb[0].mxu0
    %3545 = vmatprep.mubr.bf16.mxu0 0
    %3546 = vmatmul.mubr.bf16.gmra.mrb[0].mxu0 %v3413
    %v3547 = vpop.f32.mrb[0].mxu0
    %v3548 = vadd.f32 %v3439, %v3547
    %v3549 = vpop.f32.mrb[0].mxu0
    %v3550 = vpop.f32.mrb[0].mxu0
    %v3551 = vadd.f32 %v3439, %v3550
    %v3552 = vpop.f32.mrb[0].mxu0
    %3553 = vmatprep.mubr.bf16.mxu0 0
    %3554 = vmatmul.mubr.bf16.gmra.mrb[0].mxu0 %v3414
    %v3555 = vpop.f32.mrb[0].mxu0
    %v3556 = vadd.f32 %v3439, %v3555
    %v3557 = vpop.f32.mrb[0].mxu0
    %v3558 = vpop.f32.mrb[0].mxu0
    %v3559 = vadd.f32 %v3439, %v3558
    %v3560 = vpop.f32.mrb[0].mxu0
    %3561 = vmatprep.mubr.bf16.mxu0 0
    %3562 = vmatmul.mubr.bf16.gmra.mrb[0].mxu0 %v3415
    %v3563 = vpop.f32.mrb[0].mxu0
    %v3564 = vadd.f32 %v3439, %v3563
    %v3565 = vpop.f32.mrb[0].mxu0
    %v3566 = vpop.f32.mrb[0].mxu0
    %v3567 = vadd.f32 %v3439, %v3566
    %v3568 = vpop.f32.mrb[0].mxu0
    %3569 = vmatprep.mubr.bf16.mxu0 0
    %3570 = vmatmul.mubr.bf16.gmra.mrb[0].mxu0 %v3416
    %v3571 = vpop.f32.mrb[0].mxu0
    %v3572 = vadd.f32 %v3439, %v3571
    %v3573 = vpop.f32.mrb[0].mxu0
    %v3574 = vpop.f32.mrb[0].mxu0
    %v3575 = vadd.f32 %v3439, %v3574
    %v3576 = vpop.f32.mrb[0].mxu0
    %3577 = vmatprep.mubr.bf16.mxu0 0
    %3578 = vmatmul.mubr.bf16.gmra.mrb[0].mxu0 %v3417
    %v3579 = vpop.f32.mrb[0].mxu0
    %v3580 = vadd.f32 %v3439, %v3579
    %v3581 = vpop.f32.mrb[0].mxu0
    %v3582 = vpop.f32.mrb[0].mxu0
    %v3583 = vadd.f32 %v3439, %v3582
    %v3584 = vpop.f32.mrb[0].mxu0
    %3585 = vdwg.mxu0
    %v3586 = vmax.f32 %v3524, 0.0
    %v3587 = vmax.f32 %v3527, 0.0
    %v3588 = vmax.f32 %v3532, 0.0
    %v3589 = vmax.f32 %v3535, 0.0
    %v3590 = vmax.f32 %v3540, 0.0
    %v3591 = vmax.f32 %v3543, 0.0
    %v3592 = vmax.f32 %v3548, 0.0
    %v3593 = vmax.f32 %v3551, 0.0
    %v3594 = vmax.f32 %v3556, 0.0
    %v3595 = vmax.f32 %v3559, 0.0
    %v3596 = vmax.f32 %v3564, 0.0
    %v3597 = vmax.f32 %v3567, 0.0
    %v3598 = vmax.f32 %v3572, 0.0
    %v3599 = vmax.f32 %v3575, 0.0
    %v3600 = vmax.f32 %v3580, 0.0
    %v3601 = vmax.f32 %v3583, 0.0
    %v3602 = vpack.c.bf16 %v3587, %v3586
    %v3603 = vpack.c.bf16 %v3589, %v3588
    %v3604 = vpack.c.bf16 %v3591, %v3590
    %v3605 = vpack.c.bf16 %v3593, %v3592
    %v3606 = vpack.c.bf16 %v3595, %v3594
    %v3607 = vpack.c.bf16 %v3597, %v3596
    %v3608 = vpack.c.bf16 %v3599, %v3598
    %v3609 = vpack.c.bf16 %v3601, %v3600
    %v3610 = vld [vmem:[#allocation9] sm:$0xf]
    %v3611 = vld [vmem:[#allocation9 + $0x4] sm:$0xf]
    %v3612 = vld [vmem:[#allocation9 + $0x8] sm:$0xf]
    %v3613 = vld [vmem:[#allocation9 + $0xc] sm:$0xf]
    %v3614 = vld [vmem:[#allocation9 + $0x10] sm:$0xf]
    %v3615 = vld [vmem:[#allocation9 + $0x14] sm:$0xf]
    %v3616 = vld [vmem:[#allocation9 + $0x18] sm:$0xf]
    %v3617 = vld [vmem:[#allocation9 + $0x1c] sm:$0xf]
    %v3618 = vld [vmem:[#allocation9 + $0x20] sm:$0xf]
    %v3619 = vld [vmem:[#allocation9 + $0x24] sm:$0xf]
    %v3620 = vld [vmem:[#allocation9 + $0x28] sm:$0xf]
    %v3621 = vld [vmem:[#allocation9 + $0x2c] sm:$0xf]
    %v3622 = vld [vmem:[#allocation9 + $0x30] sm:$0xf]
    %v3623 = vld [vmem:[#allocation9 + $0x34] sm:$0xf]
    %v3624 = vld [vmem:[#allocation9 + $0x38] sm:$0xf]
    %v3625 = vld [vmem:[#allocation9 + $0x3c] sm:$0xf]
    %v3626 = vld [vmem:[%s10] sm:$0x1]
    %v3628 = vlaneseq
    %v3629 = vshrl.u32 %v3628, 7
    %v3630 = vsub.s32 0, %v3629
    %v3631 = vrot.slane %v3626, %v3630
    %v3649 = vunpack.c.l.b16 %v3610
    %v3650 = vunpack.c.l.b16 %v3611
    %v3651 = vunpack.c.l.b16 %v3612
    %v3652 = vunpack.c.l.b16 %v3613
    %v3653 = vunpack.c.l.b16 %v3614
    %v3654 = vunpack.c.l.b16 %v3615
    %v3655 = vunpack.c.l.b16 %v3616
    %v3656 = vunpack.c.l.b16 %v3617
    %v3657 = vunpack.c.l.b16 %v3618
    %v3658 = vunpack.c.l.b16 %v3619
    %v3659 = vunpack.c.l.b16 %v3620
    %v3660 = vunpack.c.l.b16 %v3621
    %v3661 = vunpack.c.l.b16 %v3622
    %v3662 = vunpack.c.l.b16 %v3623
    %v3663 = vunpack.c.l.b16 %v3624
    %v3664 = vunpack.c.l.b16 %v3625
    %v3665 = vpack.c.b16 %v3650, %v3649
    %v3666 = vpack.c.b16 %v3652, %v3651
    %v3667 = vpack.c.b16 %v3654, %v3653
    %v3668 = vpack.c.b16 %v3656, %v3655
    %v3669 = vpack.c.b16 %v3658, %v3657
    %v3670 = vpack.c.b16 %v3660, %v3659
    %v3671 = vpack.c.b16 %v3662, %v3661
    %v3672 = vpack.c.b16 %v3664, %v3663
    %3681 = vmatprep.subr.bf16.mxu0 0
    %3682 = vmatpush1.bf16.msra.mxu0 %v3665
    %3683 = vmatprep.subr.bf16.mxu0 0
    %3684 = vmatpush1.bf16.msra.mxu0 %v3666
    %3685 = vmatprep.subr.bf16.mxu0 0
    %3686 = vmatpush1.bf16.msra.mxu0 %v3667
    %3687 = vmatprep.subr.bf16.mxu0 0
    %3688 = vmatpush1.bf16.msra.mxu0 %v3668
    %3689 = vmatprep.subr.bf16.mxu0 0
    %3690 = vmatpush1.bf16.msra.mxu0 %v3669
    %3691 = vmatprep.subr.bf16.mxu0 0
    %3692 = vmatpush1.bf16.msra.mxu0 %v3670
    %3693 = vmatprep.subr.bf16.mxu0 0
    %3694 = vmatpush1.bf16.msra.mxu0 %v3671
    %3695 = vmatprep.subr.bf16.mxu0 0
    %3696 = vmatpush1.bf16.msra.mxu0 %v3672
    %3697 = vmatprep.subr.bf16.mxu0 0
    %3698 = vmatpush1.bf16.msra.mxu0 0
    %3699 = vmatprep.subr.bf16.mxu0 0
    %3700 = vmatpush1.bf16.msra.mxu0 0
    %3701 = vmatprep.subr.bf16.mxu0 0
    %3702 = vmatpush1.bf16.msra.mxu0 0
    %3703 = vmatprep.subr.bf16.mxu0 0
    %3704 = vmatpush1.bf16.msra.mxu0 0
    %3705 = vmatprep.subr.bf16.mxu0 0
    %3706 = vmatpush1.bf16.msra.mxu0 0
    %3707 = vmatprep.subr.bf16.mxu0 0
    %3708 = vmatpush1.bf16.msra.mxu0 0
    %3709 = vmatprep.subr.bf16.mxu0 0
    %3710 = vmatpush1.bf16.msra.mxu0 0
    %3711 = vmatprep.subr.bf16.mxu0 0
    %3712 = vmatpush1.bf16.msra.mxu0 0
    %3713 = vmatprep.mubr.bf16.mxu0 0
    %3714 = vmatmul.mubr.bf16.gmra.mrb[0].mxu0 %v3602
    %v3715 = vpop.f32.mrb[0].mxu0
    %v3716 = vadd.f32 %v3631, %v3715
    %v3717 = vpop.f32.mrb[0].mxu0
    %v3718 = vpop.f32.mrb[0].mxu0
    %v3719 = vadd.f32 %v3631, %v3718
    %v3720 = vpop.f32.mrb[0].mxu0
    %3721 = vmatprep.mubr.bf16.mxu0 0
    %3722 = vmatmul.mubr.bf16.gmra.mrb[0].mxu0 %v3603
    %v3723 = vpop.f32.mrb[0].mxu0
    %v3724 = vadd.f32 %v3631, %v3723
    %v3725 = vpop.f32.mrb[0].mxu0
    %v3726 = vpop.f32.mrb[0].mxu0
    %v3727 = vadd.f32 %v3631, %v3726
    %v3728 = vpop.f32.mrb[0].mxu0
    %3729 = vmatprep.mubr.bf16.mxu0 0
    %3730 = vmatmul.mubr.bf16.gmra.mrb[0].mxu0 %v3604
    %v3731 = vpop.f32.mrb[0].mxu0
    %v3732 = vadd.f32 %v3631, %v3731
    %v3733 = vpop.f32.mrb[0].mxu0
    %v3734 = vpop.f32.mrb[0].mxu0
    %v3735 = vadd.f32 %v3631, %v3734
    %v3736 = vpop.f32.mrb[0].mxu0
    %3737 = vmatprep.mubr.bf16.mxu0 0
    %3738 = vmatmul.mubr.bf16.gmra.mrb[0].mxu0 %v3605
    %v3739 = vpop.f32.mrb[0].mxu0
    %v3740 = vadd.f32 %v3631, %v3739
    %v3741 = vpop.f32.mrb[0].mxu0
    %v3742 = vpop.f32.mrb[0].mxu0
    %v3743 = vadd.f32 %v3631, %v3742
    %v3744 = vpop.f32.mrb[0].mxu0
    %3745 = vmatprep.mubr.bf16.mxu0 0
    %3746 = vmatmul.mubr.bf16.gmra.mrb[0].mxu0 %v3606
    %v3747 = vpop.f32.mrb[0].mxu0
    %v3748 = vadd.f32 %v3631, %v3747
    %v3749 = vpop.f32.mrb[0].mxu0
    %v3750 = vpop.f32.mrb[0].mxu0
    %v3751 = vadd.f32 %v3631, %v3750
    %v3752 = vpop.f32.mrb[0].mxu0
    %3753 = vmatprep.mubr.bf16.mxu0 0
    %3754 = vmatmul.mubr.bf16.gmra.mrb[0].mxu0 %v3607
    %v3755 = vpop.f32.mrb[0].mxu0
    %v3756 = vadd.f32 %v3631, %v3755
    %v3757 = vpop.f32.mrb[0].mxu0
    %v3758 = vpop.f32.mrb[0].mxu0
    %v3759 = vadd.f32 %v3631, %v3758
    %v3760 = vpop.f32.mrb[0].mxu0
    %3761 = vmatprep.mubr.bf16.mxu0 0
    %3762 = vmatmul.mubr.bf16.gmra.mrb[0].mxu0 %v3608
    %v3763 = vpop.f32.mrb[0].mxu0
    %v3764 = vadd.f32 %v3631, %v3763
    %v3765 = vpop.f32.mrb[0].mxu0
    %v3766 = vpop.f32.mrb[0].mxu0
    %v3767 = vadd.f32 %v3631, %v3766
    %v3768 = vpop.f32.mrb[0].mxu0
    %3769 = vmatprep.mubr.bf16.mxu0 0
    %3770 = vmatmul.mubr.bf16.gmra.mrb[0].mxu0 %v3609
    %v3771 = vpop.f32.mrb[0].mxu0
    %v3772 = vadd.f32 %v3631, %v3771
    %v3773 = vpop.f32.mrb[0].mxu0
    %v3774 = vpop.f32.mrb[0].mxu0
    %v3775 = vadd.f32 %v3631, %v3774
    %v3776 = vpop.f32.mrb[0].mxu0
    %3777 = vdwg.mxu0
    %v3778 = vpack.c.bf16 %v3719, %v3716
    %v3779 = vpack.c.bf16 %v3727, %v3724
    %v3780 = vpack.c.bf16 %v3735, %v3732
    %v3781 = vpack.c.bf16 %v3743, %v3740
    %v3782 = vpack.c.bf16 %v3751, %v3748
    %v3783 = vpack.c.bf16 %v3759, %v3756
    %v3784 = vpack.c.bf16 %v3767, %v3764
    %v3785 = vpack.c.bf16 %v3775, %v3772
    %v3794 = vunpack.c.l.b16 %v3778
    %v3795 = vunpack.c.h.b16 %v3778
    %v3796 = vunpack.c.l.b16 %v3779
    %v3797 = vunpack.c.h.b16 %v3779
    %v3798 = vunpack.c.l.b16 %v3780
    %v3799 = vunpack.c.h.b16 %v3780
    %v3800 = vunpack.c.l.b16 %v3781
    %v3801 = vunpack.c.h.b16 %v3781
    %v3802 = vunpack.c.l.b16 %v3782
    %v3803 = vunpack.c.h.b16 %v3782
    %v3804 = vunpack.c.l.b16 %v3783
    %v3805 = vunpack.c.h.b16 %v3783
    %v3806 = vunpack.c.l.b16 %v3784
    %v3807 = vunpack.c.h.b16 %v3784
    %v3808 = vunpack.c.l.b16 %v3785
    %v3809 = vunpack.c.h.b16 %v3785
    %v3810 = vpack.c.b16 %v3794, %v3794
    %v3811 = vpack.c.b16 %v3795, %v3795
    %v3812 = vpack.c.b16 %v3796, %v3796
    %v3813 = vpack.c.b16 %v3797, %v3797
    %v3814 = vpack.c.b16 %v3798, %v3798
    %v3815 = vpack.c.b16 %v3799, %v3799
    %v3816 = vpack.c.b16 %v3800, %v3800
    %v3817 = vpack.c.b16 %v3801, %v3801
    %v3818 = vpack.c.b16 %v3802, %v3802
    %v3819 = vpack.c.b16 %v3803, %v3803
    %v3820 = vpack.c.b16 %v3804, %v3804
    %v3821 = vpack.c.b16 %v3805, %v3805
    %v3822 = vpack.c.b16 %v3806, %v3806
    %v3823 = vpack.c.b16 %v3807, %v3807
    %v3824 = vpack.c.b16 %v3808, %v3808
    %v3825 = vpack.c.b16 %v3809, %v3809
    %3842 = vst [vmem:[%s11] sm:$0xf] %v3810
    %3843 = vst [vmem:[%s11 + $0x4] sm:$0xf] %v3811
    %3844 = vst [vmem:[%s11 + $0x8] sm:$0xf] %v3812
    %3845 = vst [vmem:[%s11 + $0xc] sm:$0xf] %v3813
    %3846 = vst [vmem:[%s11 + $0x10] sm:$0xf] %v3814
    %3847 = vst [vmem:[%s11 + $0x14] sm:$0xf] %v3815
    %3848 = vst [vmem:[%s11 + $0x18] sm:$0xf] %v3816
    %3849 = vst [vmem:[%s11 + $0x1c] sm:$0xf] %v3817
    %3850 = vst [vmem:[%s11 + $0x20] sm:$0xf] %v3818
    %3851 = vst [vmem:[%s11 + $0x24] sm:$0xf] %v3819
    %3852 = vst [vmem:[%s11 + $0x28] sm:$0xf] %v3820
    %3853 = vst [vmem:[%s11 + $0x2c] sm:$0xf] %v3821
    %3854 = vst [vmem:[%s11 + $0x30] sm:$0xf] %v3822
    %3855 = vst [vmem:[%s11 + $0x34] sm:$0xf] %v3823
    %3856 = vst [vmem:[%s11 + $0x38] sm:$0xf] %v3824
    %3857 = vst [vmem:[%s11 + $0x3c] sm:$0xf] %v3825
    // Predicated region
    $region66: #{dnn_forward.1} parent=1 // pred_check
      _
    $region67: #{dnn_forward.1} parent=1 // pred_check_branch
      %3859 = sbr.rel (0) target = $region69
    $region68: #{dnn_forward.1} parent=1 // pred_region
      _
    $region69: #{dnn_forward.1} parent=1 // pred_fallthru
      _
    // Predicated region
    $region70: #{dnn_forward.1} parent=1 // pred_check
      _
    $region71: #{dnn_forward.1} parent=1 // pred_check_branch
      %3861 = sbr.rel (0) target = $region73
    $region72: #{dnn_forward.1} parent=1 // pred_region
      _
    $region73: #{dnn_forward.1} parent=1 // pred_fallthru
      _
    %3862 = vsyncpa [#allocation3], 1
    %3863 = vsyncpa [#allocation5], 1
    %3864 = vsyncpa [#allocation8], 1

</llo_original>
